<compile_context>
chip_gen: v7x
topology: tpu7x:2x2x1
jax: 0.10.0
libtpu: 0.0.40
codegen_flags: <defaults>
</compile_context>

<pallas_src>
from functools import partial

import jax
import jax.numpy as jnp
from jax import lax
from jax.experimental import pallas as pl
from jax.experimental.pallas import tpu as pltpu

EPS = 1e-5  # MambaRMSNorm layer_norm_epsilon


# ----------------------------------------------------------------------------
# small helpers
# ----------------------------------------------------------------------------
def _time_chunk(L):
    """Scan unroll factor; 8 rows == one unmasked f32 sublane group for y_s."""
    for cand in (8, 4, 2):
        if L % cand == 0:
            return cand
    return 1


def _batch_fold(Bsz, L):
    """Fold batch elements per grid step so matmul M (= Bb*L) approaches 256."""
    target = max(1, min(256 // max(L, 1), 8, Bsz))
    bb = 1
    for cand in range(target, 0, -1):
        if Bsz % cand == 0:
            bb = cand
            break
    # keep the (8,128) block rule happy when there is more than one grid step
    if Bsz // bb > 1 and (bb * L) % 8 != 0:
        bb = Bsz
    return bb


def _vmem_limit_bytes():
    """Explicit scoped-VMEM budget (review: default 16/32 MiB is too small)."""
    try:
        cap = int(pltpu.get_tpu_info().vmem_capacity_bytes)
    except Exception:
        cap = 64 * 1024 * 1024
    limit = min(cap - cap // 4, 100 * 1024 * 1024)   # ~48 MiB on v7x, ~96 MiB v5e/v6e
    return int(max(limit, 32 * 1024 * 1024))


def _const_spec(shape, buffered):
    """BlockSpec for a weight whose block never changes: single-buffered if possible."""
    zeros = (0,) * len(shape)
    index_map = lambda *_: zeros
    if buffered and hasattr(pl, "Buffered"):
        try:
            return pl.BlockSpec(shape, index_map, pipeline_mode=pl.Buffered(1))
        except TypeError:
            pass
    return pl.BlockSpec(shape, index_map)


# ----------------------------------------------------------------------------
# Fused Mamba mixer block kernel (one grid step == Bb folded batch elements)
# ----------------------------------------------------------------------------
def mamba_block_kernel(h_ref, norm_w_ref, in_w_ref, conv_w_ref, conv_b_ref,
                       x_w_ref, dt_w_ref, dt_b_ref, A_T_ref, d_skip_ref,
                       out_w_ref, o_ref,
                       dt_s, du_s, bc_s, y_s, state_s, *, Bb, L):
    f32 = jnp.float32
    bf16 = jnp.bfloat16
    d_conv, d_inner = conv_w_ref.shape
    d_state = A_T_ref.shape[0]
    dt_rank = dt_w_ref.shape[0]
    t_chunk = _time_chunk(L)
    n_chunks = L // t_chunk

    x = h_ref[...].astype(f32)                                   # [Bb*L, D]

    # --- RMSNorm (pre-mixer) ---
    var = jnp.mean(x * x, axis=-1, keepdims=True)
    xn = x * lax.rsqrt(var + EPS) * norm_w_ref[...]

    # --- in_proj (bf16 MXU operands, f32 accumulate) ---
    proj = jnp.dot(xn.astype(bf16), in_w_ref[...],
                   preferred_element_type=f32)                   # [Bb*L, 2*d_inner]
    hs_in = proj[:, :d_inner]
    gate = proj[:, d_inner:]

    # --- causal depthwise conv over time, per batch element (no cross-batch leak)
    # TODO(synk): sublane-aligned pad / pltpu.roll variant of the shifted slices.
    conv_w = conv_w_ref[...]
    conv_b = conv_b_ref[...]
    conv_parts = []
    for b in range(Bb):
        hb = hs_in[b * L:(b + 1) * L, :]                          # [L, d_inner]
        hb_pad = jnp.concatenate(
            [jnp.zeros((d_conv - 1, d_inner), f32), hb], axis=0)
        acc = conv_b
        for k in range(d_conv):
            acc = acc + hb_pad[k:k + L, :] * conv_w[k:k + 1, :]
        conv_parts.append(acc)
    hs = jax.nn.silu(jnp.concatenate(conv_parts, axis=0)
                     if Bb > 1 else conv_parts[0])                # [Bb*L, d_inner]

    # --- x_proj -> (dt, B, C) ; dt_proj + softplus (bf16 MXU) ---
    ssm_p = jnp.dot(hs.astype(bf16), x_w_ref[...],
                    preferred_element_type=f32)                   # [Bb*L, dt_rank+2S]
    dt = jax.nn.softplus(
        jnp.dot(ssm_p[:, :dt_rank].astype(bf16), dt_w_ref[...],
                preferred_element_type=f32) + dt_b_ref[...])      # [Bb*L, d_inner]

    # --- stage per-step scan inputs in VMEM scratch ---
    dt_s[...] = dt
    du_s[...] = dt * hs
    bc_s[:, 0:2 * d_state] = ssm_p[:, dt_rank:]                   # lanes > 2S unused

    A_T = A_T_ref[...]                                            # -exp(A_log).T, [S, d_inner]

    # --- selective scan: per batch element, chunked + unrolled ---------------
    for b in range(Bb):
        state_s[...] = jnp.zeros((d_state, d_inner), f32)
        row0 = b * L

        @pl.loop(0, n_chunks)
        def _(c, row0=row0):
            base = pl.multiple_of(row0 + c * t_chunk, t_chunk)
            dt_c = dt_s[pl.ds(base, t_chunk), :]                  # [T, d_inner]
            du_c = du_s[pl.ds(base, t_chunk), :]                  # [T, d_inner]
            bc_c = bc_s[pl.ds(base, t_chunk), :]                  # [T, bc_pad]
            bct = jnp.transpose(bc_c)                             # [bc_pad, T]

            # one batched EUP exp per chunk (review: single [T*S, d_inner] call)
            dA_all = jnp.exp(jnp.concatenate(
                [dt_c[t:t + 1, :] * A_T for t in range(t_chunk)],
                axis=0))                                          # [T*S, d_inner]
            # dBu lane-broadcasts are computed before the serial loop so the
            # scheduler overlaps them with the fma recurrence chain.
            dbu_all = [du_c[t:t + 1, :] * bct[0:d_state, t:t + 1]
                       for t in range(t_chunk)]                   # each [S, d_inner]

            st = state_s[...]                                     # [S, d_inner]
            rows = []
            for t in range(t_chunk):                              # unrolled
                dA_t = dA_all[t * d_state:(t + 1) * d_state, :]
                st = dA_t * st + dbu_all[t]                       # recurrence
                c_t = bct[d_state:2 * d_state, t:t + 1]           # [S, 1]
                rows.append(jnp.sum(st * c_t, axis=0, keepdims=True))
            state_s[...] = st
            y_s[pl.ds(base, t_chunk), :] = jnp.concatenate(rows, axis=0)

    # --- skip term, gating, out_proj (bf16 MXU), residual ---
    y = y_s[...] + hs * d_skip_ref[...]
    y = y * jax.nn.silu(gate)
    out = jnp.dot(y.astype(bf16), out_w_ref[...], preferred_element_type=f32)
    o_ref[...] = (x + out).astype(o_ref.dtype)


def mamba_block(h2d, p, Bsz, L, *, single_buffer_weights, vmem_limit):
    M, D = h2d.shape
    d_conv, d_inner = p['conv_w'].shape
    d_state = p['A_T'].shape[0]
    dt_rank = p['dt_w'].shape[0]
    Bb = _batch_fold(Bsz, L)
    Mb = Bb * L
    bc_pad = ((2 * d_state + 127) // 128) * 128

    def wspec(shape):
        return _const_spec(shape, single_buffer_weights)

    in_specs = [
        pl.BlockSpec((Mb, D), lambda i: (i, 0)),                        # hidden
        wspec((1, D)),                                                  # norm_w
        wspec((D, 2 * d_inner)),                                        # in_proj (bf16)
        wspec((d_conv, d_inner)),                                       # conv w
        wspec((1, d_inner)),                                            # conv b
        wspec((d_inner, dt_rank + 2 * d_state)),                        # x_proj (bf16)
        wspec((dt_rank, d_inner)),                                      # dt_proj w (bf16)
        wspec((1, d_inner)),                                            # dt_proj b
        wspec((d_state, d_inner)),                                      # A = -exp(A_log).T
        wspec((1, d_inner)),                                            # D (skip)
        wspec((d_inner, D)),                                            # out_proj (bf16)
    ]
    return pl.pallas_call(
        partial(mamba_block_kernel, Bb=Bb, L=L),
        out_shape=jax.ShapeDtypeStruct((M, D), h2d.dtype),
        grid_spec=pltpu.PrefetchScalarGridSpec(
            num_scalar_prefetch=0,
            grid=(M // Mb,),
            in_specs=in_specs,
            out_specs=pl.BlockSpec((Mb, D), lambda i: (i, 0)),
            scratch_shapes=[
                pltpu.VMEM((Mb, d_inner), jnp.float32),        # dt
                pltpu.VMEM((Mb, d_inner), jnp.float32),        # dt * u
                pltpu.VMEM((Mb, bc_pad), jnp.float32),         # [B | C] lane-padded
                pltpu.VMEM((Mb, d_inner), jnp.float32),        # scan outputs y
                pltpu.VMEM((d_state, d_inner), jnp.float32),   # carried SSM state
            ]),
        compiler_params=pltpu.CompilerParams(
            dimension_semantics=("parallel",),
            vmem_limit_bytes=vmem_limit),
    )(h2d, p['norm_w'], p['in_w'], p['conv_w'], p['conv_b'], p['x_w'],
      p['dt_w'], p['dt_b'], p['A_T'], p['D_param'], p['out_w'])


# ----------------------------------------------------------------------------
# Final RMSNorm + lm_head kernel: standard (vocab-tile, M-tile) matmul
# ----------------------------------------------------------------------------
def head_kernel(h_ref, nw_ref, lm_ref, o_ref):
    f32 = jnp.float32
    x = h_ref[...].astype(f32)                                    # [tm, D]
    var = jnp.mean(x * x, axis=-1, keepdims=True)
    xn = (x * lax.rsqrt(var + EPS) * nw_ref[...]).astype(jnp.bfloat16)
    o_ref[...] = jnp.dot(xn, lm_ref[...],
                         preferred_element_type=f32).astype(o_ref.dtype)


def lm_head_call(h2d, norm_f, lm_w, *, vmem_limit):
    M, D = h2d.shape
    V = lm_w.shape[1]
    tn = V                                    # vocab tile: lane-dense, VMEM-bounded (bf16)
    for cand in (1024, 512, 256, 128):
        if V % cand == 0:
            tn = cand
            break
    tm = M                                    # M tile
    if M > 512:
        for cand in (512, 256, 128, 64, 32, 16, 8):
            if M % cand == 0:
                tm = cand
                break
    # vocab axis outer -> weight tile index constant across the inner M axis,
    # so the (D, V) weight streams from HBM once instead of once per batch.
    return pl.pallas_call(
        head_kernel,
        out_shape=jax.ShapeDtypeStruct((M, V), jnp.float32),
        grid_spec=pltpu.PrefetchScalarGridSpec(
            num_scalar_prefetch=0,
            grid=(V // tn, M // tm),
            in_specs=[pl.BlockSpec((tm, D), lambda v, m: (m, 0)),
                      pl.BlockSpec((1, D), lambda v, m: (0, 0)),
                      pl.BlockSpec((D, tn), lambda v, m: (0, v))],
            out_specs=pl.BlockSpec((tm, tn), lambda v, m: (m, v))),
        compiler_params=pltpu.CompilerParams(
            dimension_semantics=("parallel", "parallel"),
            vmem_limit_bytes=vmem_limit),
    )(h2d, norm_f, lm_w)


# ----------------------------------------------------------------------------
# Full forward (glue in plain JAX)
# ----------------------------------------------------------------------------
def mamba_forward(src, params, *, single_buffer_weights=True):
    """src: [L, B] int32  ->  logits [L, B, V]  (matches MambaModel2.forward)."""
    L, Bsz = src.shape
    D = params['embed'].shape[1]
    tokens = src.T                                     # [B, L]  (src.T.contiguous())
    h = jnp.take(params['embed'], tokens, axis=0)      # [B, L, D]  (gather stays in XLA)
    h2d = h.reshape(Bsz * L, D).astype(jnp.float32)
    vmem_limit = _vmem_limit_bytes()
    for layer in params['layers']:
        h2d = mamba_block(h2d, layer, Bsz, L,
                          single_buffer_weights=single_buffer_weights,
                          vmem_limit=vmem_limit)
    logits = lm_head_call(h2d, params['norm_f'], params['lm_head'],
                          vmem_limit=vmem_limit)       # [B*L, V]
    logits = logits.reshape(Bsz, L, -1)
    return jnp.transpose(logits, (1, 0, 2))            # [L, B, V]


# ----------------------------------------------------------------------------
# Pure-JAX reference (same math + same bf16 matmul operands, for verification)
# ----------------------------------------------------------------------------
def _mm(a, b):
    return lax.dot_general(a.astype(jnp.bfloat16), b.astype(jnp.bfloat16),
                           dimension_numbers=(((a.ndim - 1,), (0,)), ((), ())),
                           preferred_element_type=jnp.float32)


def ref_forward(src, params):
    f32 = jnp.float32
    tokens = src.T
    h = params['embed'][tokens].astype(f32)
    for p in params['layers']:
        x = h
        var = jnp.mean(x * x, axis=-1, keepdims=True)
        xn = x * lax.rsqrt(var + EPS) * p['norm_w'][0]
        proj = _mm(xn, p['in_w'])
        d_conv, d_inner = p['conv_w'].shape
        d_state = p['A_T'].shape[0]
        dt_rank = p['dt_w'].shape[0]
        hs, gate = proj[..., :d_inner], proj[..., d_inner:]
        L = hs.shape[1]
        pad = jnp.pad(hs, ((0, 0), (d_conv - 1, 0), (0, 0)))
        conv = sum(pad[:, k:k + L, :] * p['conv_w'][k][None, None, :]
                   for k in range(d_conv))
        hs = jax.nn.silu(conv + p['conv_b'][0])
        ssm_p = _mm(hs, p['x_w'])
        dt_in = ssm_p[..., :dt_rank]
        Bm = ssm_p[..., dt_rank:dt_rank + d_state]
        Cm = ssm_p[..., dt_rank + d_state:dt_rank + 2 * d_state]
        dt = jax.nn.softplus(_mm(dt_in, p['dt_w']) + p['dt_b'][0])
        A = p['A_T'].T                                   # [d_inner, d_state]
        dA = jnp.exp(dt[..., None] * A[None, None])
        dBu = (dt * hs)[..., None] * Bm[:, :, None, :]

        def scan_fn(state, inp):
            dA_t, dBu_t, C_t = inp
            state = dA_t * state + dBu_t
            return state, jnp.sum(state * C_t[:, None, :], axis=-1)

        init = jnp.zeros((h.shape[0], d_inner, d_state), f32)
        _, ys = lax.scan(scan_fn, init,
                         (dA.transpose(1, 0, 2, 3), dBu.transpose(1, 0, 2, 3),
                          Cm.transpose(1, 0, 2)))
        y = ys.transpose(1, 0, 2)
        y = y + hs * p['D_param'][0]
        y = y * jax.nn.silu(gate)
        h = x + _mm(y, p['out_w'])
    var = jnp.mean(h * h, axis=-1, keepdims=True)
    hn = h * lax.rsqrt(var + EPS) * params['norm_f'][0]
    return jnp.transpose(_mm(hn, params['lm_head']), (1, 0, 2))


# ----------------------------------------------------------------------------
# Deterministic parameter init (shapes follow MambaConfig; tiny synthetic sizes)
# ----------------------------------------------------------------------------
def init_params(key, V, D, d_state, d_conv, expand, n_layers):
    f32, bf16 = jnp.float32, jnp.bfloat16
    d_inner = expand * D
    dt_rank = max(1, -(-D // 16))  # ceil(D / 16)
    keys = jax.random.split(key, 2 + n_layers)
    embed = jax.random.normal(keys[0], (V, D), f32) * 0.02
    layers = []
    for i in range(n_layers):
        lk = jax.random.split(keys[2 + i], 6)
        A_log = jnp.log(jnp.broadcast_to(
            jnp.arange(1, d_state + 1, dtype=f32), (d_inner, d_state)))
        layers.append(dict(
            norm_w=jnp.ones((1, D), f32),
            in_w=(jax.random.normal(lk[0], (D, 2 * d_inner), f32) * 0.02).astype(bf16),
            conv_w=jax.random.normal(lk[1], (d_conv, d_inner), f32) * 0.1,
            conv_b=jnp.zeros((1, d_inner), f32),
            x_w=(jax.random.normal(lk[2], (d_inner, dt_rank + 2 * d_state),
                                   f32) * 0.02).astype(bf16),
            dt_w=(jax.random.normal(lk[3], (dt_rank, d_inner),
                                    f32) * (dt_rank ** -0.5)).astype(bf16),
            dt_b=jax.random.uniform(lk[4], (1, d_inner), f32, -4.0, -2.0),
            A_T=(-jnp.exp(A_log)).T,                 # precomputed, [d_state, d_inner]
            D_param=jnp.ones((1, d_inner), f32),
            out_w=(jax.random.normal(lk[5], (d_inner, D), f32) * 0.02).astype(bf16),
        ))
    return dict(embed=embed, layers=layers,
                norm_f=jnp.ones((1, D), f32),
                lm_head=embed.T.astype(bf16))        # tied lm_head weights (bf16)


# TODO(synk): generate2 (autoregressive sampling loop + ProgressStreamer) is
# host-side inference orchestration, not part of the forward hot path.

if __name__ == "__main__":
    V, D, d_state, d_conv, expand, n_layers = 32, 32, 8, 4, 2, 2
    L, B = 8, 2

    key = jax.random.PRNGKey(0)
    params = init_params(key, V, D, d_state, d_conv, expand, n_layers)
    src = jax.random.randint(jax.random.fold_in(key, 123), (L, B), 0, V,
                             dtype=jnp.int32)

    fwd = jax.jit(partial(mamba_forward, single_buffer_weights=True))
    try:
        out = jax.block_until_ready(fwd(src, params))
    except Exception:
        # pl.Buffered(1) pipeline_mode not supported by this JAX build:
        # fall back to default double-buffered weight BlockSpecs.
        fwd = jax.jit(partial(mamba_forward, single_buffer_weights=False))
        out = jax.block_until_ready(fwd(src, params))

    assert out.shape == (L, B, V), out.shape
    assert bool(jnp.all(jnp.isfinite(out)))

    ref = jax.block_until_ready(ref_forward(src, params))
    max_diff = float(jnp.max(jnp.abs(out - ref)))
    assert max_diff < 1e-2, f"mismatch vs reference: {max_diff}"

    print("KERNEL_OK")
</pallas_src>

<mosaic_0001>
module attributes {stable_mosaic.version = 11 : i64} {
  func.func @head_kernel(%arg0: i32, %arg1: i32, %arg2: memref<16x32xf32, #tpu.memory_space<vmem>>, %arg3: memref<1x32xf32, #tpu.memory_space<vmem>>, %arg4: memref<32x32xbf16, #tpu.memory_space<vmem>>, %arg5: memref<16x32xf32, #tpu.memory_space<vmem>>) attributes {dimension_semantics = [#tpu.dimension_semantics<parallel>, #tpu.dimension_semantics<parallel>], iteration_bounds = array<i64: 1, 1>, scalar_prefetch = 0 : i64, scratch_operands = 0 : i64, tpu.core_type = #tpu.core_type<tc>, window_params = [{transform_indices = @transform_0, window_bounds = array<i64: 16, 32>}, {pipeline_mode = #tpu.pipeline_mode<synchronous>, transform_indices = @transform_1, window_bounds = array<i64: 1, 32>}, {transform_indices = @transform_2, window_bounds = array<i64: 32, 32>}, {transform_indices = @transform_3, window_bounds = array<i64: 16, 32>}]} {
    %c0 = arith.constant 0 : index
    %c0_0 = arith.constant 0 : index
    %0 = vector.load %arg2[%c0, %c0_0] : memref<16x32xf32, #tpu.memory_space<vmem>>, vector<16x32xf32>
    %1 = arith.mulf %0, %0 : vector<16x32xf32>
    %cst = arith.constant dense<0.000000e+00> : vector<16xf32>
    %2 = vector.multi_reduction <add>, %1, %cst [1] : vector<16x32xf32> to vector<16xf32>
    %3 = vector.shape_cast %2 : vector<16xf32> to vector<16x1xf32>
    %cst_1 = arith.constant 3.200000e+01 : f32
    %4 = vector.broadcast %cst_1 : f32 to vector<16x1xf32>
    %5 = arith.divf %3, %4 : vector<16x1xf32>
    %cst_2 = arith.constant 9.99999974E-6 : f32
    %6 = vector.broadcast %cst_2 : f32 to vector<16x1xf32>
    %7 = arith.addf %5, %6 : vector<16x1xf32>
    %8 = math.rsqrt %7 : vector<16x1xf32>
    %9 = vector.broadcast %8 : vector<16x1xf32> to vector<16x32xf32>
    %10 = arith.mulf %0, %9 : vector<16x32xf32>
    %c0_3 = arith.constant 0 : index
    %c0_4 = arith.constant 0 : index
    %11 = vector.load %arg3[%c0_3, %c0_4] : memref<1x32xf32, #tpu.memory_space<vmem>>, vector<1x32xf32>
    %12 = vector.broadcast %11 : vector<1x32xf32> to vector<16x32xf32>
    %13 = arith.mulf %10, %12 : vector<16x32xf32>
    %14 = arith.truncf %13 : vector<16x32xf32> to vector<16x32xbf16>
    %c0_5 = arith.constant 0 : index
    %c0_6 = arith.constant 0 : index
    %15 = vector.load %arg4[%c0_5, %c0_6] : memref<32x32xbf16, #tpu.memory_space<vmem>>, vector<32x32xbf16>
    %cst_7 = arith.constant dense<0.000000e+00> : vector<16x32xf32>
    %16 = tpu.matmul %14, %15, %cst_7 {dimension_numbers = #tpu.dot_dimension_numbers<[1], [0], [0], [1], [0, 0, 1, 1], [], []>} : vector<16x32xbf16>, vector<32x32xbf16>, vector<16x32xf32> -> vector<16x32xf32>
    %c0_8 = arith.constant 0 : index
    %c0_9 = arith.constant 0 : index
    %17 = vector.load %arg5[%c0_8, %c0_9] : memref<16x32xf32, #tpu.memory_space<vmem>>, vector<16x32xf32>
    tpu.vector_store %arg5[%c0_8, %c0_9], %16 {strides = array<i32>} : memref<16x32xf32, #tpu.memory_space<vmem>>, vector<16x32xf32>,
    return
  }
  func.func @transform_0(%arg0: i32, %arg1: i32) -> (i32, i32) {
    %c0_i32 = arith.constant 0 : i32
    %c0_i32_0 = arith.constant 0 : i32
    return %arg1, %c0_i32 : i32, i32
  }
  func.func @transform_1(%arg0: i32, %arg1: i32) -> (i32, i32) {
    %c0_i32 = arith.constant 0 : i32
    %c0_i32_0 = arith.constant 0 : i32
    %c0_i32_1 = arith.constant 0 : i32
    return %c0_i32, %c0_i32_0 : i32, i32
  }
  func.func @transform_2(%arg0: i32, %arg1: i32) -> (i32, i32) {
    %c0_i32 = arith.constant 0 : i32
    %c0_i32_0 = arith.constant 0 : i32
    return %c0_i32, %arg0 : i32, i32
  }
  func.func @transform_3(%arg0: i32, %arg1: i32) -> (i32, i32) {
    %c0_i32 = arith.constant 0 : i32
    return %arg1, %arg0 : i32, i32
  }
}

module attributes {stable_mosaic.version = 11 : i64} {
  func.func @mamba_block_kernel(%arg0: i32, %arg1: memref<16x32xf32, #tpu.memory_space<vmem>>, %arg2: memref<1x32xf32, #tpu.memory_space<vmem>>, %arg3: memref<32x128xbf16, #tpu.memory_space<vmem>>, %arg4: memref<4x64xf32, #tpu.memory_space<vmem>>, %arg5: memref<1x64xf32, #tpu.memory_space<vmem>>, %arg6: memref<64x18xbf16, #tpu.memory_space<vmem>>, %arg7: memref<2x64xbf16, #tpu.memory_space<vmem>>, %arg8: memref<1x64xf32, #tpu.memory_space<vmem>>, %arg9: memref<8x64xf32, #tpu.memory_space<vmem>>, %arg10: memref<1x64xf32, #tpu.memory_space<vmem>>, %arg11: memref<64x32xbf16, #tpu.memory_space<vmem>>, %arg12: memref<16x32xf32, #tpu.memory_space<vmem>>, %arg13: memref<16x64xf32, #tpu.memory_space<vmem>>, %arg14: memref<16x64xf32, #tpu.memory_space<vmem>>, %arg15: memref<16x128xf32, #tpu.memory_space<vmem>>, %arg16: memref<16x64xf32, #tpu.memory_space<vmem>>, %arg17: memref<8x64xf32, #tpu.memory_space<vmem>>) attributes {dimension_semantics = [#tpu.dimension_semantics<parallel>], iteration_bounds = array<i64: 1>, scalar_prefetch = 0 : i64, scratch_operands = 5 : i64, tpu.core_type = #tpu.core_type<tc>, window_params = [{transform_indices = @transform_0, window_bounds = array<i64: 16, 32>}, {pipeline_mode = #tpu.pipeline_mode<synchronous>, transform_indices = @transform_1, window_bounds = array<i64: 1, 32>}, {pipeline_mode = #tpu.pipeline_mode<synchronous>, transform_indices = @transform_2, window_bounds = array<i64: 32, 128>}, {pipeline_mode = #tpu.pipeline_mode<synchronous>, transform_indices = @transform_3, window_bounds = array<i64: 4, 64>}, {pipeline_mode = #tpu.pipeline_mode<synchronous>, transform_indices = @transform_4, window_bounds = array<i64: 1, 64>}, {pipeline_mode = #tpu.pipeline_mode<synchronous>, transform_indices = @transform_5, window_bounds = array<i64: 64, 18>}, {pipeline_mode = #tpu.pipeline_mode<synchronous>, transform_indices = @transform_6, window_bounds = array<i64: 2, 64>}, {pipeline_mode = #tpu.pipeline_mode<synchronous>, transform_indices = @transform_7, window_bounds = array<i64: 1, 64>}, {pipeline_mode = #tpu.pipeline_mode<synchronous>, transform_indices = @transform_8, window_bounds = array<i64: 8, 64>}, {pipeline_mode = #tpu.pipeline_mode<synchronous>, transform_indices = @transform_9, window_bounds = array<i64: 1, 64>}, {pipeline_mode = #tpu.pipeline_mode<synchronous>, transform_indices = @transform_10, window_bounds = array<i64: 64, 32>}, {transform_indices = @transform_11, window_bounds = array<i64: 16, 32>}]} {
    %c0 = arith.constant 0 : index
    %c0_0 = arith.constant 0 : index
    %0 = vector.load %arg1[%c0, %c0_0] : memref<16x32xf32, #tpu.memory_space<vmem>>, vector<16x32xf32>
    %1 = arith.mulf %0, %0 : vector<16x32xf32>
    %cst = arith.constant dense<0.000000e+00> : vector<16xf32>
    %2 = vector.multi_reduction <add>, %1, %cst [1] : vector<16x32xf32> to vector<16xf32>
    %3 = vector.shape_cast %2 : vector<16xf32> to vector<16x1xf32>
    %cst_1 = arith.constant 3.200000e+01 : f32
    %4 = vector.broadcast %cst_1 : f32 to vector<16x1xf32>
    %5 = arith.divf %3, %4 : vector<16x1xf32>
    %cst_2 = arith.constant 9.99999974E-6 : f32
    %6 = vector.broadcast %cst_2 : f32 to vector<16x1xf32>
    %7 = arith.addf %5, %6 : vector<16x1xf32>
    %8 = math.rsqrt %7 : vector<16x1xf32>
    %9 = vector.broadcast %8 : vector<16x1xf32> to vector<16x32xf32>
    %10 = arith.mulf %0, %9 : vector<16x32xf32>
    %c0_3 = arith.constant 0 : index
    %c0_4 = arith.constant 0 : index
    %11 = vector.load %arg2[%c0_3, %c0_4] : memref<1x32xf32, #tpu.memory_space<vmem>>, vector<1x32xf32>
    %12 = vector.broadcast %11 : vector<1x32xf32> to vector<16x32xf32>
    %13 = arith.mulf %10, %12 : vector<16x32xf32>
    %14 = arith.truncf %13 : vector<16x32xf32> to vector<16x32xbf16>
    %c0_5 = arith.constant 0 : index
    %c0_6 = arith.constant 0 : index
    %15 = vector.load %arg3[%c0_5, %c0_6] : memref<32x128xbf16, #tpu.memory_space<vmem>>, vector<32x128xbf16>
    %cst_7 = arith.constant dense<0.000000e+00> : vector<16x128xf32>
    %16 = tpu.matmul %14, %15, %cst_7 {dimension_numbers = #tpu.dot_dimension_numbers<[1], [0], [0], [1], [0, 0, 1, 1], [], []>} : vector<16x32xbf16>, vector<32x128xbf16>, vector<16x128xf32> -> vector<16x128xf32>
    %17 = vector.extract_strided_slice %16 {offsets = [0, 0], sizes = [16, 64], strides = [1, 1]} : vector<16x128xf32> to vector<16x64xf32>
    %18 = vector.extract_strided_slice %16 {offsets = [0, 64], sizes = [16, 64], strides = [1, 1]} : vector<16x128xf32> to vector<16x64xf32>
    %c0_8 = arith.constant 0 : index
    %c0_9 = arith.constant 0 : index
    %19 = vector.load %arg4[%c0_8, %c0_9] : memref<4x64xf32, #tpu.memory_space<vmem>>, vector<4x64xf32>
    %c0_10 = arith.constant 0 : index
    %c0_11 = arith.constant 0 : index
    %20 = vector.load %arg5[%c0_10, %c0_11] : memref<1x64xf32, #tpu.memory_space<vmem>>, vector<1x64xf32>
    %21 = vector.extract_strided_slice %17 {offsets = [0, 0], sizes = [8, 64], strides = [1, 1]} : vector<16x64xf32> to vector<8x64xf32>
    %cst_12 = arith.constant 0.000000e+00 : f32
    %22 = vector.broadcast %cst_12 : f32 to vector<3x64xf32>
    %23 = tpu.concatenate %22, %21 in 0 : vector<3x64xf32>, vector<8x64xf32> -> vector<11x64xf32>
    %24 = vector.extract_strided_slice %23 {offsets = [0, 0], sizes = [8, 64], strides = [1, 1]} : vector<11x64xf32> to vector<8x64xf32>
    %25 = vector.extract_strided_slice %19 {offsets = [0, 0], sizes = [1, 64], strides = [1, 1]} : vector<4x64xf32> to vector<1x64xf32>
    %26 = vector.broadcast %25 : vector<1x64xf32> to vector<8x64xf32>
    %27 = arith.mulf %24, %26 : vector<8x64xf32>
    %28 = vector.broadcast %20 : vector<1x64xf32> to vector<8x64xf32>
    %29 = arith.addf %28, %27 : vector<8x64xf32>
    %30 = vector.extract_strided_slice %23 {offsets = [1, 0], sizes = [8, 64], strides = [1, 1]} : vector<11x64xf32> to vector<8x64xf32>
    %31 = vector.extract_strided_slice %19 {offsets = [1, 0], sizes = [1, 64], strides = [1, 1]} : vector<4x64xf32> to vector<1x64xf32>
    %32 = vector.broadcast %31 : vector<1x64xf32> to vector<8x64xf32>
    %33 = arith.mulf %30, %32 : vector<8x64xf32>
    %34 = arith.addf %29, %33 : vector<8x64xf32>
    %35 = vector.extract_strided_slice %23 {offsets = [2, 0], sizes = [8, 64], strides = [1, 1]} : vector<11x64xf32> to vector<8x64xf32>
    %36 = vector.extract_strided_slice %19 {offsets = [2, 0], sizes = [1, 64], strides = [1, 1]} : vector<4x64xf32> to vector<1x64xf32>
    %37 = vector.broadcast %36 : vector<1x64xf32> to vector<8x64xf32>
    %38 = arith.mulf %35, %37 : vector<8x64xf32>
    %39 = arith.addf %34, %38 : vector<8x64xf32>
    %40 = vector.extract_strided_slice %23 {offsets = [3, 0], sizes = [8, 64], strides = [1, 1]} : vector<11x64xf32> to vector<8x64xf32>
    %41 = vector.extract_strided_slice %19 {offsets = [3, 0], sizes = [1, 64], strides = [1, 1]} : vector<4x64xf32> to vector<1x64xf32>
    %42 = vector.broadcast %41 : vector<1x64xf32> to vector<8x64xf32>
    %43 = arith.mulf %40, %42 : vector<8x64xf32>
    %44 = arith.addf %39, %43 : vector<8x64xf32>
    %45 = vector.extract_strided_slice %17 {offsets = [8, 0], sizes = [8, 64], strides = [1, 1]} : vector<16x64xf32> to vector<8x64xf32>
    %cst_13 = arith.constant 0.000000e+00 : f32
    %46 = vector.broadcast %cst_13 : f32 to vector<3x64xf32>
    %47 = tpu.concatenate %46, %45 in 0 : vector<3x64xf32>, vector<8x64xf32> -> vector<11x64xf32>
    %48 = vector.extract_strided_slice %47 {offsets = [0, 0], sizes = [8, 64], strides = [1, 1]} : vector<11x64xf32> to vector<8x64xf32>
    %49 = vector.extract_strided_slice %19 {offsets = [0, 0], sizes = [1, 64], strides = [1, 1]} : vector<4x64xf32> to vector<1x64xf32>
    %50 = vector.broadcast %49 : vector<1x64xf32> to vector<8x64xf32>
    %51 = arith.mulf %48, %50 : vector<8x64xf32>
    %52 = vector.broadcast %20 : vector<1x64xf32> to vector<8x64xf32>
    %53 = arith.addf %52, %51 : vector<8x64xf32>
    %54 = vector.extract_strided_slice %47 {offsets = [1, 0], sizes = [8, 64], strides = [1, 1]} : vector<11x64xf32> to vector<8x64xf32>
    %55 = vector.extract_strided_slice %19 {offsets = [1, 0], sizes = [1, 64], strides = [1, 1]} : vector<4x64xf32> to vector<1x64xf32>
    %56 = vector.broadcast %55 : vector<1x64xf32> to vector<8x64xf32>
    %57 = arith.mulf %54, %56 : vector<8x64xf32>
    %58 = arith.addf %53, %57 : vector<8x64xf32>
    %59 = vector.extract_strided_slice %47 {offsets = [2, 0], sizes = [8, 64], strides = [1, 1]} : vector<11x64xf32> to vector<8x64xf32>
    %60 = vector.extract_strided_slice %19 {offsets = [2, 0], sizes = [1, 64], strides = [1, 1]} : vector<4x64xf32> to vector<1x64xf32>
    %61 = vector.broadcast %60 : vector<1x64xf32> to vector<8x64xf32>
    %62 = arith.mulf %59, %61 : vector<8x64xf32>
    %63 = arith.addf %58, %62 : vector<8x64xf32>
    %64 = vector.extract_strided_slice %47 {offsets = [3, 0], sizes = [8, 64], strides = [1, 1]} : vector<11x64xf32> to vector<8x64xf32>
    %65 = vector.extract_strided_slice %19 {offsets = [3, 0], sizes = [1, 64], strides = [1, 1]} : vector<4x64xf32> to vector<1x64xf32>
    %66 = vector.broadcast %65 : vector<1x64xf32> to vector<8x64xf32>
    %67 = arith.mulf %64, %66 : vector<8x64xf32>
    %68 = arith.addf %63, %67 : vector<8x64xf32>
    %69 = tpu.concatenate %44, %68 in 0 : vector<8x64xf32>, vector<8x64xf32> -> vector<16x64xf32>
    %70 = arith.negf %69 : vector<16x64xf32>
    %71 = math.exp %70 : vector<16x64xf32>
    %cst_14 = arith.constant 1.000000e+00 : f32
    %72 = vector.broadcast %cst_14 : f32 to vector<16x64xf32>
    %73 = arith.addf %72, %71 : vector<16x64xf32>
    %74 = arith.divf %72, %73 : vector<16x64xf32>
    %75 = arith.mulf %69, %74 : vector<16x64xf32>
    %76 = arith.truncf %75 : vector<16x64xf32> to vector<16x64xbf16>
    %c0_15 = arith.constant 0 : index
    %c0_16 = arith.constant 0 : index
    %77 = vector.load %arg6[%c0_15, %c0_16] : memref<64x18xbf16, #tpu.memory_space<vmem>>, vector<64x18xbf16>
    %cst_17 = arith.constant dense<0.000000e+00> : vector<16x18xf32>
    %78 = tpu.matmul %76, %77, %cst_17 {dimension_numbers = #tpu.dot_dimension_numbers<[1], [0], [0], [1], [0, 0, 1, 1], [], []>} : vector<16x64xbf16>, vector<64x18xbf16>, vector<16x18xf32> -> vector<16x18xf32>
    %79 = vector.extract_strided_slice %78 {offsets = [0, 0], sizes = [16, 2], strides = [1, 1]} : vector<16x18xf32> to vector<16x2xf32>
    %80 = arith.truncf %79 : vector<16x2xf32> to vector<16x2xbf16>
    %c0_18 = arith.constant 0 : index
    %c0_19 = arith.constant 0 : index
    %81 = vector.load %arg7[%c0_18, %c0_19] : memref<2x64xbf16, #tpu.memory_space<vmem>>, vector<2x64xbf16>
    %cst_20 = arith.constant dense<0.000000e+00> : vector<16x64xf32>
    %82 = tpu.matmul %80, %81, %cst_20 {dimension_numbers = #tpu.dot_dimension_numbers<[1], [0], [0], [1], [0, 0, 1, 1], [], []>} : vector<16x2xbf16>, vector<2x64xbf16>, vector<16x64xf32> -> vector<16x64xf32>
    %c0_21 = arith.constant 0 : index
    %c0_22 = arith.constant 0 : index
    %83 = vector.load %arg8[%c0_21, %c0_22] : memref<1x64xf32, #tpu.memory_space<vmem>>, vector<1x64xf32>
    %84 = vector.broadcast %83 : vector<1x64xf32> to vector<16x64xf32>
    %85 = arith.addf %82, %84 : vector<16x64xf32>
    %cst_23 = arith.constant 0.000000e+00 : f32
    %86 = vector.broadcast %cst_23 : f32 to vector<16x64xf32>
    %87 = arith.maximumf %85, %86 : vector<16x64xf32>
    %88 = vector.broadcast %cst_23 : f32 to vector<16x64xf32>
    %89 = arith.subf %85, %88 : vector<16x64xf32>
    %90 = arith.cmpf one, %89, %89 : vector<16x64xf32>
    %91 = vector.broadcast %cst_23 : f32 to vector<16x64xf32>
    %92 = arith.addf %85, %91 : vector<16x64xf32>
    %93 = math.absf %89 : vector<16x64xf32>
    %cst_24 = arith.constant 0.000000e+00 : f32
    %94 = vector.broadcast %cst_24 : f32 to vector<16x64xf32>
    %95 = arith.subf %94, %93 : vector<16x64xf32>
    %96 = math.exp %95 : vector<16x64xf32>
    %97 = math.log1p %96 : vector<16x64xf32>
    %98 = arith.addf %87, %97 : vector<16x64xf32>
    %99 = arith.select %90, %92, %98 : vector<16x64xi1>, vector<16x64xf32>
    %c0_25 = arith.constant 0 : index
    %c0_26 = arith.constant 0 : index
    %100 = vector.load %arg13[%c0_25, %c0_26] : memref<16x64xf32, #tpu.memory_space<vmem>>, vector<16x64xf32>
    tpu.vector_store %arg13[%c0_25, %c0_26], %99 {strides = array<i32>} : memref<16x64xf32, #tpu.memory_space<vmem>>, vector<16x64xf32>,
    %101 = arith.mulf %99, %75 : vector<16x64xf32>
    %c0_27 = arith.constant 0 : index
    %c0_28 = arith.constant 0 : index
    %102 = vector.load %arg14[%c0_27, %c0_28] : memref<16x64xf32, #tpu.memory_space<vmem>>, vector<16x64xf32>
    tpu.vector_store %arg14[%c0_27, %c0_28], %101 {strides = array<i32>} : memref<16x64xf32, #tpu.memory_space<vmem>>, vector<16x64xf32>,
    %103 = vector.extract_strided_slice %78 {offsets = [0, 2], sizes = [16, 16], strides = [1, 1]} : vector<16x18xf32> to vector<16x16xf32>
    %c0_29 = arith.constant 0 : index
    %c0_30 = arith.constant 0 : index
    %104 = vector.load %arg15[%c0_29, %c0_30] : memref<16x128xf32, #tpu.memory_space<vmem>>, vector<16x16xf32>
    tpu.vector_store %arg15[%c0_29, %c0_30], %103 {strides = array<i32>} : memref<16x128xf32, #tpu.memory_space<vmem>>, vector<16x16xf32>,
    %c0_31 = arith.constant 0 : index
    %c0_32 = arith.constant 0 : index
    %105 = vector.load %arg9[%c0_31, %c0_32] : memref<8x64xf32, #tpu.memory_space<vmem>>, vector<8x64xf32>
    %cst_33 = arith.constant 0.000000e+00 : f32
    %106 = vector.broadcast %cst_33 : f32 to vector<8x64xf32>
    %c0_34 = arith.constant 0 : index
    %c0_35 = arith.constant 0 : index
    %107 = vector.load %arg17[%c0_34, %c0_35] : memref<8x64xf32, #tpu.memory_space<vmem>>, vector<8x64xf32>
    tpu.vector_store %arg17[%c0_34, %c0_35], %106 {strides = array<i32>} : memref<8x64xf32, #tpu.memory_space<vmem>>, vector<8x64xf32>,
    %c0_i32 = arith.constant 0 : i32
    %c1_i32 = arith.constant 1 : i32
    %108 = arith.muli %c0_i32, %c1_i32 : i32
    %c0_i32_36 = arith.constant 0 : i32
    %109 = arith.addi %c0_i32_36, %108 : i32
    %c8_i32 = arith.constant 8 : i32
    %110 = arith.muli %109, %c8_i32 : i32
    %c0_i32_37 = arith.constant 0 : i32
    %111 = arith.addi %c0_i32_37, %110 : i32
    %112 = tpu.assume_multiple %111, 8 : i32
    %113 = arith.index_cast %112 : i32 to index
    %c0_38 = arith.constant 0 : index
    %114 = vector.load %arg13[%113, %c0_38] : memref<16x64xf32, #tpu.memory_space<vmem>>, vector<8x64xf32>
    %115 = arith.index_cast %112 : i32 to index
    %c0_39 = arith.constant 0 : index
    %116 = vector.load %arg14[%115, %c0_39] : memref<16x64xf32, #tpu.memory_space<vmem>>, vector<8x64xf32>
    %117 = arith.index_cast %112 : i32 to index
    %c0_40 = arith.constant 0 : index
    %118 = vector.load %arg15[%117, %c0_40] : memref<16x128xf32, #tpu.memory_space<vmem>>, vector<8x128xf32>
    %119 = tpu.transpose %118, [1, 0] : vector<8x128xf32> -> vector<128x8xf32>
    %120 = vector.extract_strided_slice %114 {offsets = [0, 0], sizes = [1, 64], strides = [1, 1]} : vector<8x64xf32> to vector<1x64xf32>
    %121 = vector.broadcast %120 : vector<1x64xf32> to vector<8x64xf32>
    %122 = arith.mulf %121, %105 : vector<8x64xf32>
    %123 = vector.extract_strided_slice %114 {offsets = [1, 0], sizes = [1, 64], strides = [1, 1]} : vector<8x64xf32> to vector<1x64xf32>
    %124 = vector.broadcast %123 : vector<1x64xf32> to vector<8x64xf32>
    %125 = arith.mulf %124, %105 : vector<8x64xf32>
    %126 = vector.extract_strided_slice %114 {offsets = [2, 0], sizes = [1, 64], strides = [1, 1]} : vector<8x64xf32> to vector<1x64xf32>
    %127 = vector.broadcast %126 : vector<1x64xf32> to vector<8x64xf32>
    %128 = arith.mulf %127, %105 : vector<8x64xf32>
    %129 = vector.extract_strided_slice %114 {offsets = [3, 0], sizes = [1, 64], strides = [1, 1]} : vector<8x64xf32> to vector<1x64xf32>
    %130 = vector.broadcast %129 : vector<1x64xf32> to vector<8x64xf32>
    %131 = arith.mulf %130, %105 : vector<8x64xf32>
    %132 = vector.extract_strided_slice %114 {offsets = [4, 0], sizes = [1, 64], strides = [1, 1]} : vector<8x64xf32> to vector<1x64xf32>
    %133 = vector.broadcast %132 : vector<1x64xf32> to vector<8x64xf32>
    %134 = arith.mulf %133, %105 : vector<8x64xf32>
    %135 = vector.extract_strided_slice %114 {offsets = [5, 0], sizes = [1, 64], strides = [1, 1]} : vector<8x64xf32> to vector<1x64xf32>
    %136 = vector.broadcast %135 : vector<1x64xf32> to vector<8x64xf32>
    %137 = arith.mulf %136, %105 : vector<8x64xf32>
    %138 = vector.extract_strided_slice %114 {offsets = [6, 0], sizes = [1, 64], strides = [1, 1]} : vector<8x64xf32> to vector<1x64xf32>
    %139 = vector.broadcast %138 : vector<1x64xf32> to vector<8x64xf32>
    %140 = arith.mulf %139, %105 : vector<8x64xf32>
    %141 = vector.extract_strided_slice %114 {offsets = [7, 0], sizes = [1, 64], strides = [1, 1]} : vector<8x64xf32> to vector<1x64xf32>
    %142 = vector.broadcast %141 : vector<1x64xf32> to vector<8x64xf32>
    %143 = arith.mulf %142, %105 : vector<8x64xf32>
    %144 = tpu.concatenate %122, %125, %128, %131, %134, %137, %140, %143 in 0 : vector<8x64xf32>, vector<8x64xf32>, vector<8x64xf32>, vector<8x64xf32>, vector<8x64xf32>, vector<8x64xf32>, vector<8x64xf32>, vector<8x64xf32> -> vector<64x64xf32>
    %145 = math.exp %144 : vector<64x64xf32>
    %146 = vector.extract_strided_slice %116 {offsets = [0, 0], sizes = [1, 64], strides = [1, 1]} : vector<8x64xf32> to vector<1x64xf32>
    %147 = vector.extract_strided_slice %119 {offsets = [0, 0], sizes = [8, 1], strides = [1, 1]} : vector<128x8xf32> to vector<8x1xf32>
    %148 = vector.broadcast %146 : vector<1x64xf32> to vector<8x64xf32>
    %149 = vector.broadcast %147 : vector<8x1xf32> to vector<8x64xf32>
    %150 = arith.mulf %148, %149 : vector<8x64xf32>
    %151 = vector.extract_strided_slice %116 {offsets = [1, 0], sizes = [1, 64], strides = [1, 1]} : vector<8x64xf32> to vector<1x64xf32>
    %152 = vector.extract_strided_slice %119 {offsets = [0, 1], sizes = [8, 1], strides = [1, 1]} : vector<128x8xf32> to vector<8x1xf32>
    %153 = vector.broadcast %151 : vector<1x64xf32> to vector<8x64xf32>
    %154 = vector.broadcast %152 : vector<8x1xf32> to vector<8x64xf32>
    %155 = arith.mulf %153, %154 : vector<8x64xf32>
    %156 = vector.extract_strided_slice %116 {offsets = [2, 0], sizes = [1, 64], strides = [1, 1]} : vector<8x64xf32> to vector<1x64xf32>
    %157 = vector.extract_strided_slice %119 {offsets = [0, 2], sizes = [8, 1], strides = [1, 1]} : vector<128x8xf32> to vector<8x1xf32>
    %158 = vector.broadcast %156 : vector<1x64xf32> to vector<8x64xf32>
    %159 = vector.broadcast %157 : vector<8x1xf32> to vector<8x64xf32>
    %160 = arith.mulf %158, %159 : vector<8x64xf32>
    %161 = vector.extract_strided_slice %116 {offsets = [3, 0], sizes = [1, 64], strides = [1, 1]} : vector<8x64xf32> to vector<1x64xf32>
    %162 = vector.extract_strided_slice %119 {offsets = [0, 3], sizes = [8, 1], strides = [1, 1]} : vector<128x8xf32> to vector<8x1xf32>
    %163 = vector.broadcast %161 : vector<1x64xf32> to vector<8x64xf32>
    %164 = vector.broadcast %162 : vector<8x1xf32> to vector<8x64xf32>
    %165 = arith.mulf %163, %164 : vector<8x64xf32>
    %166 = vector.extract_strided_slice %116 {offsets = [4, 0], sizes = [1, 64], strides = [1, 1]} : vector<8x64xf32> to vector<1x64xf32>
    %167 = vector.extract_strided_slice %119 {offsets = [0, 4], sizes = [8, 1], strides = [1, 1]} : vector<128x8xf32> to vector<8x1xf32>
    %168 = vector.broadcast %166 : vector<1x64xf32> to vector<8x64xf32>
    %169 = vector.broadcast %167 : vector<8x1xf32> to vector<8x64xf32>
    %170 = arith.mulf %168, %169 : vector<8x64xf32>
    %171 = vector.extract_strided_slice %116 {offsets = [5, 0], sizes = [1, 64], strides = [1, 1]} : vector<8x64xf32> to vector<1x64xf32>
    %172 = vector.extract_strided_slice %119 {offsets = [0, 5], sizes = [8, 1], strides = [1, 1]} : vector<128x8xf32> to vector<8x1xf32>
    %173 = vector.broadcast %171 : vector<1x64xf32> to vector<8x64xf32>
    %174 = vector.broadcast %172 : vector<8x1xf32> to vector<8x64xf32>
    %175 = arith.mulf %173, %174 : vector<8x64xf32>
    %176 = vector.extract_strided_slice %116 {offsets = [6, 0], sizes = [1, 64], strides = [1, 1]} : vector<8x64xf32> to vector<1x64xf32>
    %177 = vector.extract_strided_slice %119 {offsets = [0, 6], sizes = [8, 1], strides = [1, 1]} : vector<128x8xf32> to vector<8x1xf32>
    %178 = vector.broadcast %176 : vector<1x64xf32> to vector<8x64xf32>
    %179 = vector.broadcast %177 : vector<8x1xf32> to vector<8x64xf32>
    %180 = arith.mulf %178, %179 : vector<8x64xf32>
    %181 = vector.extract_strided_slice %116 {offsets = [7, 0], sizes = [1, 64], strides = [1, 1]} : vector<8x64xf32> to vector<1x64xf32>
    %182 = vector.extract_strided_slice %119 {offsets = [0, 7], sizes = [8, 1], strides = [1, 1]} : vector<128x8xf32> to vector<8x1xf32>
    %183 = vector.broadcast %181 : vector<1x64xf32> to vector<8x64xf32>
    %184 = vector.broadcast %182 : vector<8x1xf32> to vector<8x64xf32>
    %185 = arith.mulf %183, %184 : vector<8x64xf32>
    %c0_41 = arith.constant 0 : index
    %c0_42 = arith.constant 0 : index
    %186 = vector.load %arg17[%c0_41, %c0_42] : memref<8x64xf32, #tpu.memory_space<vmem>>, vector<8x64xf32>
    %187 = vector.extract_strided_slice %145 {offsets = [0, 0], sizes = [8, 64], strides = [1, 1]} : vector<64x64xf32> to vector<8x64xf32>
    %188 = arith.mulf %187, %186 : vector<8x64xf32>
    %189 = arith.addf %188, %150 : vector<8x64xf32>
    %190 = vector.extract_strided_slice %119 {offsets = [8, 0], sizes = [8, 1], strides = [1, 1]} : vector<128x8xf32> to vector<8x1xf32>
    %191 = vector.broadcast %190 : vector<8x1xf32> to vector<8x64xf32>
    %192 = arith.mulf %189, %191 : vector<8x64xf32>
    %cst_43 = arith.constant dense<0.000000e+00> : vector<64xf32>
    %193 = vector.multi_reduction <add>, %192, %cst_43 [0] : vector<8x64xf32> to vector<64xf32>
    %194 = vector.shape_cast %193 : vector<64xf32> to vector<1x64xf32>
    %195 = vector.extract_strided_slice %145 {offsets = [8, 0], sizes = [8, 64], strides = [1, 1]} : vector<64x64xf32> to vector<8x64xf32>
    %196 = arith.mulf %195, %189 : vector<8x64xf32>
    %197 = arith.addf %196, %155 : vector<8x64xf32>
    %198 = vector.extract_strided_slice %119 {offsets = [8, 1], sizes = [8, 1], strides = [1, 1]} : vector<128x8xf32> to vector<8x1xf32>
    %199 = vector.broadcast %198 : vector<8x1xf32> to vector<8x64xf32>
    %200 = arith.mulf %197, %199 : vector<8x64xf32>
    %cst_44 = arith.constant dense<0.000000e+00> : vector<64xf32>
    %201 = vector.multi_reduction <add>, %200, %cst_44 [0] : vector<8x64xf32> to vector<64xf32>
    %202 = vector.shape_cast %201 : vector<64xf32> to vector<1x64xf32>
    %203 = vector.extract_strided_slice %145 {offsets = [16, 0], sizes = [8, 64], strides = [1, 1]} : vector<64x64xf32> to vector<8x64xf32>
    %204 = arith.mulf %203, %197 : vector<8x64xf32>
    %205 = arith.addf %204, %160 : vector<8x64xf32>
    %206 = vector.extract_strided_slice %119 {offsets = [8, 2], sizes = [8, 1], strides = [1, 1]} : vector<128x8xf32> to vector<8x1xf32>
    %207 = vector.broadcast %206 : vector<8x1xf32> to vector<8x64xf32>
    %208 = arith.mulf %205, %207 : vector<8x64xf32>
    %cst_45 = arith.constant dense<0.000000e+00> : vector<64xf32>
    %209 = vector.multi_reduction <add>, %208, %cst_45 [0] : vector<8x64xf32> to vector<64xf32>
    %210 = vector.shape_cast %209 : vector<64xf32> to vector<1x64xf32>
    %211 = vector.extract_strided_slice %145 {offsets = [24, 0], sizes = [8, 64], strides = [1, 1]} : vector<64x64xf32> to vector<8x64xf32>
    %212 = arith.mulf %211, %205 : vector<8x64xf32>
    %213 = arith.addf %212, %165 : vector<8x64xf32>
    %214 = vector.extract_strided_slice %119 {offsets = [8, 3], sizes = [8, 1], strides = [1, 1]} : vector<128x8xf32> to vector<8x1xf32>
    %215 = vector.broadcast %214 : vector<8x1xf32> to vector<8x64xf32>
    %216 = arith.mulf %213, %215 : vector<8x64xf32>
    %cst_46 = arith.constant dense<0.000000e+00> : vector<64xf32>
    %217 = vector.multi_reduction <add>, %216, %cst_46 [0] : vector<8x64xf32> to vector<64xf32>
    %218 = vector.shape_cast %217 : vector<64xf32> to vector<1x64xf32>
    %219 = vector.extract_strided_slice %145 {offsets = [32, 0], sizes = [8, 64], strides = [1, 1]} : vector<64x64xf32> to vector<8x64xf32>
    %220 = arith.mulf %219, %213 : vector<8x64xf32>
    %221 = arith.addf %220, %170 : vector<8x64xf32>
    %222 = vector.extract_strided_slice %119 {offsets = [8, 4], sizes = [8, 1], strides = [1, 1]} : vector<128x8xf32> to vector<8x1xf32>
    %223 = vector.broadcast %222 : vector<8x1xf32> to vector<8x64xf32>
    %224 = arith.mulf %221, %223 : vector<8x64xf32>
    %cst_47 = arith.constant dense<0.000000e+00> : vector<64xf32>
    %225 = vector.multi_reduction <add>, %224, %cst_47 [0] : vector<8x64xf32> to vector<64xf32>
    %226 = vector.shape_cast %225 : vector<64xf32> to vector<1x64xf32>
    %227 = vector.extract_strided_slice %145 {offsets = [40, 0], sizes = [8, 64], strides = [1, 1]} : vector<64x64xf32> to vector<8x64xf32>
    %228 = arith.mulf %227, %221 : vector<8x64xf32>
    %229 = arith.addf %228, %175 : vector<8x64xf32>
    %230 = vector.extract_strided_slice %119 {offsets = [8, 5], sizes = [8, 1], strides = [1, 1]} : vector<128x8xf32> to vector<8x1xf32>
    %231 = vector.broadcast %230 : vector<8x1xf32> to vector<8x64xf32>
    %232 = arith.mulf %229, %231 : vector<8x64xf32>
    %cst_48 = arith.constant dense<0.000000e+00> : vector<64xf32>
    %233 = vector.multi_reduction <add>, %232, %cst_48 [0] : vector<8x64xf32> to vector<64xf32>
    %234 = vector.shape_cast %233 : vector<64xf32> to vector<1x64xf32>
    %235 = vector.extract_strided_slice %145 {offsets = [48, 0], sizes = [8, 64], strides = [1, 1]} : vector<64x64xf32> to vector<8x64xf32>
    %236 = arith.mulf %235, %229 : vector<8x64xf32>
    %237 = arith.addf %236, %180 : vector<8x64xf32>
    %238 = vector.extract_strided_slice %119 {offsets = [8, 6], sizes = [8, 1], strides = [1, 1]} : vector<128x8xf32> to vector<8x1xf32>
    %239 = vector.broadcast %238 : vector<8x1xf32> to vector<8x64xf32>
    %240 = arith.mulf %237, %239 : vector<8x64xf32>
    %cst_49 = arith.constant dense<0.000000e+00> : vector<64xf32>
    %241 = vector.multi_reduction <add>, %240, %cst_49 [0] : vector<8x64xf32> to vector<64xf32>
    %242 = vector.shape_cast %241 : vector<64xf32> to vector<1x64xf32>
    %243 = vector.extract_strided_slice %145 {offsets = [56, 0], sizes = [8, 64], strides = [1, 1]} : vector<64x64xf32> to vector<8x64xf32>
    %244 = arith.mulf %243, %237 : vector<8x64xf32>
    %245 = arith.addf %244, %185 : vector<8x64xf32>
    %246 = vector.extract_strided_slice %119 {offsets = [8, 7], sizes = [8, 1], strides = [1, 1]} : vector<128x8xf32> to vector<8x1xf32>
    %247 = vector.broadcast %246 : vector<8x1xf32> to vector<8x64xf32>
    %248 = arith.mulf %245, %247 : vector<8x64xf32>
    %cst_50 = arith.constant dense<0.000000e+00> : vector<64xf32>
    %249 = vector.multi_reduction <add>, %248, %cst_50 [0] : vector<8x64xf32> to vector<64xf32>
    %250 = vector.shape_cast %249 : vector<64xf32> to vector<1x64xf32>
    %c0_51 = arith.constant 0 : index
    %c0_52 = arith.constant 0 : index
    %251 = vector.load %arg17[%c0_51, %c0_52] : memref<8x64xf32, #tpu.memory_space<vmem>>, vector<8x64xf32>
    tpu.vector_store %arg17[%c0_51, %c0_52], %245 {strides = array<i32>} : memref<8x64xf32, #tpu.memory_space<vmem>>, vector<8x64xf32>,
    %252 = tpu.concatenate %194, %202, %210, %218, %226, %234, %242, %250 in 0 : vector<1x64xf32>, vector<1x64xf32>, vector<1x64xf32>, vector<1x64xf32>, vector<1x64xf32>, vector<1x64xf32>, vector<1x64xf32>, vector<1x64xf32> -> vector<8x64xf32>
    %253 = arith.index_cast %112 : i32 to index
    %c0_53 = arith.constant 0 : index
    %254 = vector.load %arg16[%253, %c0_53] : memref<16x64xf32, #tpu.memory_space<vmem>>, vector<8x64xf32>
    tpu.vector_store %arg16[%253, %c0_53], %252 {strides = array<i32>} : memref<16x64xf32, #tpu.memory_space<vmem>>, vector<8x64xf32>,
    %c1_i32_54 = arith.constant 1 : i32
    %cst_55 = arith.constant 0.000000e+00 : f32
    %255 = vector.broadcast %cst_55 : f32 to vector<8x64xf32>
    %c0_56 = arith.constant 0 : index
    %c0_57 = arith.constant 0 : index
    %256 = vector.load %arg17[%c0_56, %c0_57] : memref<8x64xf32, #tpu.memory_space<vmem>>, vector<8x64xf32>
    tpu.vector_store %arg17[%c0_56, %c0_57], %255 {strides = array<i32>} : memref<8x64xf32, #tpu.memory_space<vmem>>, vector<8x64xf32>,
    %c0_i32_58 = arith.constant 0 : i32
    %c1_i32_59 = arith.constant 1 : i32
    %257 = arith.muli %c0_i32_58, %c1_i32_59 : i32
    %c0_i32_60 = arith.constant 0 : i32
    %258 = arith.addi %c0_i32_60, %257 : i32
    %c8_i32_61 = arith.constant 8 : i32
    %259 = arith.muli %258, %c8_i32_61 : i32
    %c8_i32_62 = arith.constant 8 : i32
    %260 = arith.addi %c8_i32_62, %259 : i32
    %261 = tpu.assume_multiple %260, 8 : i32
    %262 = arith.index_cast %261 : i32 to index
    %c0_63 = arith.constant 0 : index
    %263 = vector.load %arg13[%262, %c0_63] : memref<16x64xf32, #tpu.memory_space<vmem>>, vector<8x64xf32>
    %264 = arith.index_cast %261 : i32 to index
    %c0_64 = arith.constant 0 : index
    %265 = vector.load %arg14[%264, %c0_64] : memref<16x64xf32, #tpu.memory_space<vmem>>, vector<8x64xf32>
    %266 = arith.index_cast %261 : i32 to index
    %c0_65 = arith.constant 0 : index
    %267 = vector.load %arg15[%266, %c0_65] : memref<16x128xf32, #tpu.memory_space<vmem>>, vector<8x128xf32>
    %268 = tpu.transpose %267, [1, 0] : vector<8x128xf32> -> vector<128x8xf32>
    %269 = vector.extract_strided_slice %263 {offsets = [0, 0], sizes = [1, 64], strides = [1, 1]} : vector<8x64xf32> to vector<1x64xf32>
    %270 = vector.broadcast %269 : vector<1x64xf32> to vector<8x64xf32>
    %271 = arith.mulf %270, %105 : vector<8x64xf32>
    %272 = vector.extract_strided_slice %263 {offsets = [1, 0], sizes = [1, 64], strides = [1, 1]} : vector<8x64xf32> to vector<1x64xf32>
    %273 = vector.broadcast %272 : vector<1x64xf32> to vector<8x64xf32>
    %274 = arith.mulf %273, %105 : vector<8x64xf32>
    %275 = vector.extract_strided_slice %263 {offsets = [2, 0], sizes = [1, 64], strides = [1, 1]} : vector<8x64xf32> to vector<1x64xf32>
    %276 = vector.broadcast %275 : vector<1x64xf32> to vector<8x64xf32>
    %277 = arith.mulf %276, %105 : vector<8x64xf32>
    %278 = vector.extract_strided_slice %263 {offsets = [3, 0], sizes = [1, 64], strides = [1, 1]} : vector<8x64xf32> to vector<1x64xf32>
    %279 = vector.broadcast %278 : vector<1x64xf32> to vector<8x64xf32>
    %280 = arith.mulf %279, %105 : vector<8x64xf32>
    %281 = vector.extract_strided_slice %263 {offsets = [4, 0], sizes = [1, 64], strides = [1, 1]} : vector<8x64xf32> to vector<1x64xf32>
    %282 = vector.broadcast %281 : vector<1x64xf32> to vector<8x64xf32>
    %283 = arith.mulf %282, %105 : vector<8x64xf32>
    %284 = vector.extract_strided_slice %263 {offsets = [5, 0], sizes = [1, 64], strides = [1, 1]} : vector<8x64xf32> to vector<1x64xf32>
    %285 = vector.broadcast %284 : vector<1x64xf32> to vector<8x64xf32>
    %286 = arith.mulf %285, %105 : vector<8x64xf32>
    %287 = vector.extract_strided_slice %263 {offsets = [6, 0], sizes = [1, 64], strides = [1, 1]} : vector<8x64xf32> to vector<1x64xf32>
    %288 = vector.broadcast %287 : vector<1x64xf32> to vector<8x64xf32>
    %289 = arith.mulf %288, %105 : vector<8x64xf32>
    %290 = vector.extract_strided_slice %263 {offsets = [7, 0], sizes = [1, 64], strides = [1, 1]} : vector<8x64xf32> to vector<1x64xf32>
    %291 = vector.broadcast %290 : vector<1x64xf32> to vector<8x64xf32>
    %292 = arith.mulf %291, %105 : vector<8x64xf32>
    %293 = tpu.concatenate %271, %274, %277, %280, %283, %286, %289, %292 in 0 : vector<8x64xf32>, vector<8x64xf32>, vector<8x64xf32>, vector<8x64xf32>, vector<8x64xf32>, vector<8x64xf32>, vector<8x64xf32>, vector<8x64xf32> -> vector<64x64xf32>
    %294 = math.exp %293 : vector<64x64xf32>
    %295 = vector.extract_strided_slice %265 {offsets = [0, 0], sizes = [1, 64], strides = [1, 1]} : vector<8x64xf32> to vector<1x64xf32>
    %296 = vector.extract_strided_slice %268 {offsets = [0, 0], sizes = [8, 1], strides = [1, 1]} : vector<128x8xf32> to vector<8x1xf32>
    %297 = vector.broadcast %295 : vector<1x64xf32> to vector<8x64xf32>
    %298 = vector.broadcast %296 : vector<8x1xf32> to vector<8x64xf32>
    %299 = arith.mulf %297, %298 : vector<8x64xf32>
    %300 = vector.extract_strided_slice %265 {offsets = [1, 0], sizes = [1, 64], strides = [1, 1]} : vector<8x64xf32> to vector<1x64xf32>
    %301 = vector.extract_strided_slice %268 {offsets = [0, 1], sizes = [8, 1], strides = [1, 1]} : vector<128x8xf32> to vector<8x1xf32>
    %302 = vector.broadcast %300 : vector<1x64xf32> to vector<8x64xf32>
    %303 = vector.broadcast %301 : vector<8x1xf32> to vector<8x64xf32>
    %304 = arith.mulf %302, %303 : vector<8x64xf32>
    %305 = vector.extract_strided_slice %265 {offsets = [2, 0], sizes = [1, 64], strides = [1, 1]} : vector<8x64xf32> to vector<1x64xf32>
    %306 = vector.extract_strided_slice %268 {offsets = [0, 2], sizes = [8, 1], strides = [1, 1]} : vector<128x8xf32> to vector<8x1xf32>
    %307 = vector.broadcast %305 : vector<1x64xf32> to vector<8x64xf32>
    %308 = vector.broadcast %306 : vector<8x1xf32> to vector<8x64xf32>
    %309 = arith.mulf %307, %308 : vector<8x64xf32>
    %310 = vector.extract_strided_slice %265 {offsets = [3, 0], sizes = [1, 64], strides = [1, 1]} : vector<8x64xf32> to vector<1x64xf32>
    %311 = vector.extract_strided_slice %268 {offsets = [0, 3], sizes = [8, 1], strides = [1, 1]} : vector<128x8xf32> to vector<8x1xf32>
    %312 = vector.broadcast %310 : vector<1x64xf32> to vector<8x64xf32>
    %313 = vector.broadcast %311 : vector<8x1xf32> to vector<8x64xf32>
    %314 = arith.mulf %312, %313 : vector<8x64xf32>
    %315 = vector.extract_strided_slice %265 {offsets = [4, 0], sizes = [1, 64], strides = [1, 1]} : vector<8x64xf32> to vector<1x64xf32>
    %316 = vector.extract_strided_slice %268 {offsets = [0, 4], sizes = [8, 1], strides = [1, 1]} : vector<128x8xf32> to vector<8x1xf32>
    %317 = vector.broadcast %315 : vector<1x64xf32> to vector<8x64xf32>
    %318 = vector.broadcast %316 : vector<8x1xf32> to vector<8x64xf32>
    %319 = arith.mulf %317, %318 : vector<8x64xf32>
    %320 = vector.extract_strided_slice %265 {offsets = [5, 0], sizes = [1, 64], strides = [1, 1]} : vector<8x64xf32> to vector<1x64xf32>
    %321 = vector.extract_strided_slice %268 {offsets = [0, 5], sizes = [8, 1], strides = [1, 1]} : vector<128x8xf32> to vector<8x1xf32>
    %322 = vector.broadcast %320 : vector<1x64xf32> to vector<8x64xf32>
    %323 = vector.broadcast %321 : vector<8x1xf32> to vector<8x64xf32>
    %324 = arith.mulf %322, %323 : vector<8x64xf32>
    %325 = vector.extract_strided_slice %265 {offsets = [6, 0], sizes = [1, 64], strides = [1, 1]} : vector<8x64xf32> to vector<1x64xf32>
    %326 = vector.extract_strided_slice %268 {offsets = [0, 6], sizes = [8, 1], strides = [1, 1]} : vector<128x8xf32> to vector<8x1xf32>
    %327 = vector.broadcast %325 : vector<1x64xf32> to vector<8x64xf32>
    %328 = vector.broadcast %326 : vector<8x1xf32> to vector<8x64xf32>
    %329 = arith.mulf %327, %328 : vector<8x64xf32>
    %330 = vector.extract_strided_slice %265 {offsets = [7, 0], sizes = [1, 64], strides = [1, 1]} : vector<8x64xf32> to vector<1x64xf32>
    %331 = vector.extract_strided_slice %268 {offsets = [0, 7], sizes = [8, 1], strides = [1, 1]} : vector<128x8xf32> to vector<8x1xf32>
    %332 = vector.broadcast %330 : vector<1x64xf32> to vector<8x64xf32>
    %333 = vector.broadcast %331 : vector<8x1xf32> to vector<8x64xf32>
    %334 = arith.mulf %332, %333 : vector<8x64xf32>
    %c0_66 = arith.constant 0 : index
    %c0_67 = arith.constant 0 : index
    %335 = vector.load %arg17[%c0_66, %c0_67] : memref<8x64xf32, #tpu.memory_space<vmem>>, vector<8x64xf32>
    %336 = vector.extract_strided_slice %294 {offsets = [0, 0], sizes = [8, 64], strides = [1, 1]} : vector<64x64xf32> to vector<8x64xf32>
    %337 = arith.mulf %336, %335 : vector<8x64xf32>
    %338 = arith.addf %337, %299 : vector<8x64xf32>
    %339 = vector.extract_strided_slice %268 {offsets = [8, 0], sizes = [8, 1], strides = [1, 1]} : vector<128x8xf32> to vector<8x1xf32>
    %340 = vector.broadcast %339 : vector<8x1xf32> to vector<8x64xf32>
    %341 = arith.mulf %338, %340 : vector<8x64xf32>
    %cst_68 = arith.constant dense<0.000000e+00> : vector<64xf32>
    %342 = vector.multi_reduction <add>, %341, %cst_68 [0] : vector<8x64xf32> to vector<64xf32>
    %343 = vector.shape_cast %342 : vector<64xf32> to vector<1x64xf32>
    %344 = vector.extract_strided_slice %294 {offsets = [8, 0], sizes = [8, 64], strides = [1, 1]} : vector<64x64xf32> to vector<8x64xf32>
    %345 = arith.mulf %344, %338 : vector<8x64xf32>
    %346 = arith.addf %345, %304 : vector<8x64xf32>
    %347 = vector.extract_strided_slice %268 {offsets = [8, 1], sizes = [8, 1], strides = [1, 1]} : vector<128x8xf32> to vector<8x1xf32>
    %348 = vector.broadcast %347 : vector<8x1xf32> to vector<8x64xf32>
    %349 = arith.mulf %346, %348 : vector<8x64xf32>
    %cst_69 = arith.constant dense<0.000000e+00> : vector<64xf32>
    %350 = vector.multi_reduction <add>, %349, %cst_69 [0] : vector<8x64xf32> to vector<64xf32>
    %351 = vector.shape_cast %350 : vector<64xf32> to vector<1x64xf32>
    %352 = vector.extract_strided_slice %294 {offsets = [16, 0], sizes = [8, 64], strides = [1, 1]} : vector<64x64xf32> to vector<8x64xf32>
    %353 = arith.mulf %352, %346 : vector<8x64xf32>
    %354 = arith.addf %353, %309 : vector<8x64xf32>
    %355 = vector.extract_strided_slice %268 {offsets = [8, 2], sizes = [8, 1], strides = [1, 1]} : vector<128x8xf32> to vector<8x1xf32>
    %356 = vector.broadcast %355 : vector<8x1xf32> to vector<8x64xf32>
    %357 = arith.mulf %354, %356 : vector<8x64xf32>
    %cst_70 = arith.constant dense<0.000000e+00> : vector<64xf32>
    %358 = vector.multi_reduction <add>, %357, %cst_70 [0] : vector<8x64xf32> to vector<64xf32>
    %359 = vector.shape_cast %358 : vector<64xf32> to vector<1x64xf32>
    %360 = vector.extract_strided_slice %294 {offsets = [24, 0], sizes = [8, 64], strides = [1, 1]} : vector<64x64xf32> to vector<8x64xf32>
    %361 = arith.mulf %360, %354 : vector<8x64xf32>
    %362 = arith.addf %361, %314 : vector<8x64xf32>
    %363 = vector.extract_strided_slice %268 {offsets = [8, 3], sizes = [8, 1], strides = [1, 1]} : vector<128x8xf32> to vector<8x1xf32>
    %364 = vector.broadcast %363 : vector<8x1xf32> to vector<8x64xf32>
    %365 = arith.mulf %362, %364 : vector<8x64xf32>
    %cst_71 = arith.constant dense<0.000000e+00> : vector<64xf32>
    %366 = vector.multi_reduction <add>, %365, %cst_71 [0] : vector<8x64xf32> to vector<64xf32>
    %367 = vector.shape_cast %366 : vector<64xf32> to vector<1x64xf32>
    %368 = vector.extract_strided_slice %294 {offsets = [32, 0], sizes = [8, 64], strides = [1, 1]} : vector<64x64xf32> to vector<8x64xf32>
    %369 = arith.mulf %368, %362 : vector<8x64xf32>
    %370 = arith.addf %369, %319 : vector<8x64xf32>
    %371 = vector.extract_strided_slice %268 {offsets = [8, 4], sizes = [8, 1], strides = [1, 1]} : vector<128x8xf32> to vector<8x1xf32>
    %372 = vector.broadcast %371 : vector<8x1xf32> to vector<8x64xf32>
    %373 = arith.mulf %370, %372 : vector<8x64xf32>
    %cst_72 = arith.constant dense<0.000000e+00> : vector<64xf32>
    %374 = vector.multi_reduction <add>, %373, %cst_72 [0] : vector<8x64xf32> to vector<64xf32>
    %375 = vector.shape_cast %374 : vector<64xf32> to vector<1x64xf32>
    %376 = vector.extract_strided_slice %294 {offsets = [40, 0], sizes = [8, 64], strides = [1, 1]} : vector<64x64xf32> to vector<8x64xf32>
    %377 = arith.mulf %376, %370 : vector<8x64xf32>
    %378 = arith.addf %377, %324 : vector<8x64xf32>
    %379 = vector.extract_strided_slice %268 {offsets = [8, 5], sizes = [8, 1], strides = [1, 1]} : vector<128x8xf32> to vector<8x1xf32>
    %380 = vector.broadcast %379 : vector<8x1xf32> to vector<8x64xf32>
    %381 = arith.mulf %378, %380 : vector<8x64xf32>
    %cst_73 = arith.constant dense<0.000000e+00> : vector<64xf32>
    %382 = vector.multi_reduction <add>, %381, %cst_73 [0] : vector<8x64xf32> to vector<64xf32>
    %383 = vector.shape_cast %382 : vector<64xf32> to vector<1x64xf32>
    %384 = vector.extract_strided_slice %294 {offsets = [48, 0], sizes = [8, 64], strides = [1, 1]} : vector<64x64xf32> to vector<8x64xf32>
    %385 = arith.mulf %384, %378 : vector<8x64xf32>
    %386 = arith.addf %385, %329 : vector<8x64xf32>
    %387 = vector.extract_strided_slice %268 {offsets = [8, 6], sizes = [8, 1], strides = [1, 1]} : vector<128x8xf32> to vector<8x1xf32>
    %388 = vector.broadcast %387 : vector<8x1xf32> to vector<8x64xf32>
    %389 = arith.mulf %386, %388 : vector<8x64xf32>
    %cst_74 = arith.constant dense<0.000000e+00> : vector<64xf32>
    %390 = vector.multi_reduction <add>, %389, %cst_74 [0] : vector<8x64xf32> to vector<64xf32>
    %391 = vector.shape_cast %390 : vector<64xf32> to vector<1x64xf32>
    %392 = vector.extract_strided_slice %294 {offsets = [56, 0], sizes = [8, 64], strides = [1, 1]} : vector<64x64xf32> to vector<8x64xf32>
    %393 = arith.mulf %392, %386 : vector<8x64xf32>
    %394 = arith.addf %393, %334 : vector<8x64xf32>
    %395 = vector.extract_strided_slice %268 {offsets = [8, 7], sizes = [8, 1], strides = [1, 1]} : vector<128x8xf32> to vector<8x1xf32>
    %396 = vector.broadcast %395 : vector<8x1xf32> to vector<8x64xf32>
    %397 = arith.mulf %394, %396 : vector<8x64xf32>
    %cst_75 = arith.constant dense<0.000000e+00> : vector<64xf32>
    %398 = vector.multi_reduction <add>, %397, %cst_75 [0] : vector<8x64xf32> to vector<64xf32>
    %399 = vector.shape_cast %398 : vector<64xf32> to vector<1x64xf32>
    %c0_76 = arith.constant 0 : index
    %c0_77 = arith.constant 0 : index
    %400 = vector.load %arg17[%c0_76, %c0_77] : memref<8x64xf32, #tpu.memory_space<vmem>>, vector<8x64xf32>
    tpu.vector_store %arg17[%c0_76, %c0_77], %394 {strides = array<i32>} : memref<8x64xf32, #tpu.memory_space<vmem>>, vector<8x64xf32>,
    %401 = tpu.concatenate %343, %351, %359, %367, %375, %383, %391, %399 in 0 : vector<1x64xf32>, vector<1x64xf32>, vector<1x64xf32>, vector<1x64xf32>, vector<1x64xf32>, vector<1x64xf32>, vector<1x64xf32>, vector<1x64xf32> -> vector<8x64xf32>
    %402 = arith.index_cast %261 : i32 to index
    %c0_78 = arith.constant 0 : index
    %403 = vector.load %arg16[%402, %c0_78] : memref<16x64xf32, #tpu.memory_space<vmem>>, vector<8x64xf32>
    tpu.vector_store %arg16[%402, %c0_78], %401 {strides = array<i32>} : memref<16x64xf32, #tpu.memory_space<vmem>>, vector<8x64xf32>,
    %c1_i32_79 = arith.constant 1 : i32
    %c0_80 = arith.constant 0 : index
    %c0_81 = arith.constant 0 : index
    %404 = vector.load %arg16[%c0_80, %c0_81] : memref<16x64xf32, #tpu.memory_space<vmem>>, vector<16x64xf32>
    %c0_82 = arith.constant 0 : index
    %c0_83 = arith.constant 0 : index
    %405 = vector.load %arg10[%c0_82, %c0_83] : memref<1x64xf32, #tpu.memory_space<vmem>>, vector<1x64xf32>
    %406 = vector.broadcast %405 : vector<1x64xf32> to vector<16x64xf32>
    %407 = arith.mulf %75, %406 : vector<16x64xf32>
    %408 = arith.addf %404, %407 : vector<16x64xf32>
    %409 = arith.negf %18 : vector<16x64xf32>
    %410 = math.exp %409 : vector<16x64xf32>
    %cst_84 = arith.constant 1.000000e+00 : f32
    %411 = vector.broadcast %cst_84 : f32 to vector<16x64xf32>
    %412 = arith.addf %411, %410 : vector<16x64xf32>
    %413 = arith.divf %411, %412 : vector<16x64xf32>
    %414 = arith.mulf %18, %413 : vector<16x64xf32>
    %415 = arith.mulf %408, %414 : vector<16x64xf32>
    %416 = arith.truncf %415 : vector<16x64xf32> to vector<16x64xbf16>
    %c0_85 = arith.constant 0 : index
    %c0_86 = arith.constant 0 : index
    %417 = vector.load %arg11[%c0_85, %c0_86] : memref<64x32xbf16, #tpu.memory_space<vmem>>, vector<64x32xbf16>
    %cst_87 = arith.constant dense<0.000000e+00> : vector<16x32xf32>
    %418 = tpu.matmul %416, %417, %cst_87 {dimension_numbers = #tpu.dot_dimension_numbers<[1], [0], [0], [1], [0, 0, 1, 1], [], []>} : vector<16x64xbf16>, vector<64x32xbf16>, vector<16x32xf32> -> vector<16x32xf32>
    %419 = arith.addf %0, %418 : vector<16x32xf32>
    %c0_88 = arith.constant 0 : index
    %c0_89 = arith.constant 0 : index
    %420 = vector.load %arg12[%c0_88, %c0_89] : memref<16x32xf32, #tpu.memory_space<vmem>>, vector<16x32xf32>
    tpu.vector_store %arg12[%c0_88, %c0_89], %419 {strides = array<i32>} : memref<16x32xf32, #tpu.memory_space<vmem>>, vector<16x32xf32>,
    return
  }
  func.func @transform_0(%arg0: i32) -> (i32, i32) {
    %c0_i32 = arith.constant 0 : i32
    %c0_i32_0 = arith.constant 0 : i32
    return %arg0, %c0_i32 : i32, i32
  }
  func.func @transform_1(%arg0: i32) -> (i32, i32) {
    %c0_i32 = arith.constant 0 : i32
    %c0_i32_0 = arith.constant 0 : i32
    %c0_i32_1 = arith.constant 0 : i32
    return %c0_i32, %c0_i32_0 : i32, i32
  }
  func.func @transform_2(%arg0: i32) -> (i32, i32) {
    %c0_i32 = arith.constant 0 : i32
    %c0_i32_0 = arith.constant 0 : i32
    %c0_i32_1 = arith.constant 0 : i32
    return %c0_i32, %c0_i32_0 : i32, i32
  }
  func.func @transform_3(%arg0: i32) -> (i32, i32) {
    %c0_i32 = arith.constant 0 : i32
    %c0_i32_0 = arith.constant 0 : i32
    %c0_i32_1 = arith.constant 0 : i32
    return %c0_i32, %c0_i32_0 : i32, i32
  }
  func.func @transform_4(%arg0: i32) -> (i32, i32) {
    %c0_i32 = arith.constant 0 : i32
    %c0_i32_0 = arith.constant 0 : i32
    %c0_i32_1 = arith.constant 0 : i32
    return %c0_i32, %c0_i32_0 : i32, i32
  }
  func.func @transform_5(%arg0: i32) -> (i32, i32) {
    %c0_i32 = arith.constant 0 : i32
    %c0_i32_0 = arith.constant 0 : i32
    %c0_i32_1 = arith.constant 0 : i32
    return %c0_i32, %c0_i32_0 : i32, i32
  }
  func.func @transform_6(%arg0: i32) -> (i32, i32) {
    %c0_i32 = arith.constant 0 : i32
    %c0_i32_0 = arith.constant 0 : i32
    %c0_i32_1 = arith.constant 0 : i32
    return %c0_i32, %c0_i32_0 : i32, i32
  }
  func.func @transform_7(%arg0: i32) -> (i32, i32) {
    %c0_i32 = arith.constant 0 : i32
    %c0_i32_0 = arith.constant 0 : i32
    %c0_i32_1 = arith.constant 0 : i32
    return %c0_i32, %c0_i32_0 : i32, i32
  }
  func.func @transform_8(%arg0: i32) -> (i32, i32) {
    %c0_i32 = arith.constant 0 : i32
    %c0_i32_0 = arith.constant 0 : i32
    %c0_i32_1 = arith.constant 0 : i32
    return %c0_i32, %c0_i32_0 : i32, i32
  }
  func.func @transform_9(%arg0: i32) -> (i32, i32) {
    %c0_i32 = arith.constant 0 : i32
    %c0_i32_0 = arith.constant 0 : i32
    %c0_i32_1 = arith.constant 0 : i32
    return %c0_i32, %c0_i32_0 : i32, i32
  }
  func.func @transform_10(%arg0: i32) -> (i32, i32) {
    %c0_i32 = arith.constant 0 : i32
    %c0_i32_0 = arith.constant 0 : i32
    %c0_i32_1 = arith.constant 0 : i32
    return %c0_i32, %c0_i32_0 : i32, i32
  }
  func.func @transform_11(%arg0: i32) -> (i32, i32) {
    %c0_i32 = arith.constant 0 : i32
    %c0_i32_0 = arith.constant 0 : i32
    return %arg0, %c0_i32 : i32, i32
  }
}

module attributes {stable_mosaic.version = 11 : i64} {
  func.func @head_kernel(%arg0: i32, %arg1: i32, %arg2: memref<16x32xf32, #tpu.memory_space<vmem>>, %arg3: memref<1x32xf32, #tpu.memory_space<vmem>>, %arg4: memref<32x32xbf16, #tpu.memory_space<vmem>>, %arg5: memref<16x32xf32, #tpu.memory_space<vmem>>) attributes {dimension_semantics = [#tpu.dimension_semantics<parallel>, #tpu.dimension_semantics<parallel>], iteration_bounds = array<i64: 1, 1>, scalar_prefetch = 0 : i64, scratch_operands = 0 : i64, tpu.core_type = #tpu.core_type<tc>, window_params = [{transform_indices = @transform_0, window_bounds = array<i64: 16, 32>}, {pipeline_mode = #tpu.pipeline_mode<synchronous>, transform_indices = @transform_1, window_bounds = array<i64: 1, 32>}, {transform_indices = @transform_2, window_bounds = array<i64: 32, 32>}, {transform_indices = @transform_3, window_bounds = array<i64: 16, 32>}]} {
    %c0 = arith.constant 0 : index
    %c0_0 = arith.constant 0 : index
    %0 = vector.load %arg2[%c0, %c0_0] : memref<16x32xf32, #tpu.memory_space<vmem>>, vector<16x32xf32>
    %1 = arith.mulf %0, %0 : vector<16x32xf32>
    %cst = arith.constant dense<0.000000e+00> : vector<16xf32>
    %2 = vector.multi_reduction <add>, %1, %cst [1] : vector<16x32xf32> to vector<16xf32>
    %3 = vector.shape_cast %2 : vector<16xf32> to vector<16x1xf32>
    %cst_1 = arith.constant 3.200000e+01 : f32
    %4 = vector.broadcast %cst_1 : f32 to vector<16x1xf32>
    %5 = arith.divf %3, %4 : vector<16x1xf32>
    %cst_2 = arith.constant 9.99999974E-6 : f32
    %6 = vector.broadcast %cst_2 : f32 to vector<16x1xf32>
    %7 = arith.addf %5, %6 : vector<16x1xf32>
    %8 = math.rsqrt %7 : vector<16x1xf32>
    %9 = vector.broadcast %8 : vector<16x1xf32> to vector<16x32xf32>
    %10 = arith.mulf %0, %9 : vector<16x32xf32>
    %c0_3 = arith.constant 0 : index
    %c0_4 = arith.constant 0 : index
    %11 = vector.load %arg3[%c0_3, %c0_4] : memref<1x32xf32, #tpu.memory_space<vmem>>, vector<1x32xf32>
    %12 = vector.broadcast %11 : vector<1x32xf32> to vector<16x32xf32>
    %13 = arith.mulf %10, %12 : vector<16x32xf32>
    %14 = arith.truncf %13 : vector<16x32xf32> to vector<16x32xbf16>
    %c0_5 = arith.constant 0 : index
    %c0_6 = arith.constant 0 : index
    %15 = vector.load %arg4[%c0_5, %c0_6] : memref<32x32xbf16, #tpu.memory_space<vmem>>, vector<32x32xbf16>
    %cst_7 = arith.constant dense<0.000000e+00> : vector<16x32xf32>
    %16 = tpu.matmul %14, %15, %cst_7 {dimension_numbers = #tpu.dot_dimension_numbers<[1], [0], [0], [1], [0, 0, 1, 1], [], []>} : vector<16x32xbf16>, vector<32x32xbf16>, vector<16x32xf32> -> vector<16x32xf32>
    %c0_8 = arith.constant 0 : index
    %c0_9 = arith.constant 0 : index
    %17 = vector.load %arg5[%c0_8, %c0_9] : memref<16x32xf32, #tpu.memory_space<vmem>>, vector<16x32xf32>
    tpu.vector_store %arg5[%c0_8, %c0_9], %16 {strides = array<i32>} : memref<16x32xf32, #tpu.memory_space<vmem>>, vector<16x32xf32>,
    return
  }
  func.func @transform_0(%arg0: i32, %arg1: i32) -> (i32, i32) {
    %c0_i32 = arith.constant 0 : i32
    %c0_i32_0 = arith.constant 0 : i32
    return %arg1, %c0_i32 : i32, i32
  }
  func.func @transform_1(%arg0: i32, %arg1: i32) -> (i32, i32) {
    %c0_i32 = arith.constant 0 : i32
    %c0_i32_0 = arith.constant 0 : i32
    %c0_i32_1 = arith.constant 0 : i32
    return %c0_i32, %c0_i32_0 : i32, i32
  }
  func.func @transform_2(%arg0: i32, %arg1: i32) -> (i32, i32) {
    %c0_i32 = arith.constant 0 : i32
    %c0_i32_0 = arith.constant 0 : i32
    return %c0_i32, %arg0 : i32, i32
  }
  func.func @transform_3(%arg0: i32, %arg1: i32) -> (i32, i32) {
    %c0_i32 = arith.constant 0 : i32
    return %arg1, %arg0 : i32, i32
  }
}

module attributes {stable_mosaic.version = 11 : i64} {
  func.func @mamba_block_kernel(%arg0: i32, %arg1: memref<16x32xf32, #tpu.memory_space<vmem>>, %arg2: memref<1x32xf32, #tpu.memory_space<vmem>>, %arg3: memref<32x128xbf16, #tpu.memory_space<vmem>>, %arg4: memref<4x64xf32, #tpu.memory_space<vmem>>, %arg5: memref<1x64xf32, #tpu.memory_space<vmem>>, %arg6: memref<64x18xbf16, #tpu.memory_space<vmem>>, %arg7: memref<2x64xbf16, #tpu.memory_space<vmem>>, %arg8: memref<1x64xf32, #tpu.memory_space<vmem>>, %arg9: memref<8x64xf32, #tpu.memory_space<vmem>>, %arg10: memref<1x64xf32, #tpu.memory_space<vmem>>, %arg11: memref<64x32xbf16, #tpu.memory_space<vmem>>, %arg12: memref<16x32xf32, #tpu.memory_space<vmem>>, %arg13: memref<16x64xf32, #tpu.memory_space<vmem>>, %arg14: memref<16x64xf32, #tpu.memory_space<vmem>>, %arg15: memref<16x128xf32, #tpu.memory_space<vmem>>, %arg16: memref<16x64xf32, #tpu.memory_space<vmem>>, %arg17: memref<8x64xf32, #tpu.memory_space<vmem>>) attributes {dimension_semantics = [#tpu.dimension_semantics<parallel>], iteration_bounds = array<i64: 1>, scalar_prefetch = 0 : i64, scratch_operands = 5 : i64, tpu.core_type = #tpu.core_type<tc>, window_params = [{transform_indices = @transform_0, window_bounds = array<i64: 16, 32>}, {pipeline_mode = #tpu.pipeline_mode<synchronous>, transform_indices = @transform_1, window_bounds = array<i64: 1, 32>}, {pipeline_mode = #tpu.pipeline_mode<synchronous>, transform_indices = @transform_2, window_bounds = array<i64: 32, 128>}, {pipeline_mode = #tpu.pipeline_mode<synchronous>, transform_indices = @transform_3, window_bounds = array<i64: 4, 64>}, {pipeline_mode = #tpu.pipeline_mode<synchronous>, transform_indices = @transform_4, window_bounds = array<i64: 1, 64>}, {pipeline_mode = #tpu.pipeline_mode<synchronous>, transform_indices = @transform_5, window_bounds = array<i64: 64, 18>}, {pipeline_mode = #tpu.pipeline_mode<synchronous>, transform_indices = @transform_6, window_bounds = array<i64: 2, 64>}, {pipeline_mode = #tpu.pipeline_mode<synchronous>, transform_indices = @transform_7, window_bounds = array<i64: 1, 64>}, {pipeline_mode = #tpu.pipeline_mode<synchronous>, transform_indices = @transform_8, window_bounds = array<i64: 8, 64>}, {pipeline_mode = #tpu.pipeline_mode<synchronous>, transform_indices = @transform_9, window_bounds = array<i64: 1, 64>}, {pipeline_mode = #tpu.pipeline_mode<synchronous>, transform_indices = @transform_10, window_bounds = array<i64: 64, 32>}, {transform_indices = @transform_11, window_bounds = array<i64: 16, 32>}]} {
    %c0 = arith.constant 0 : index
    %c0_0 = arith.constant 0 : index
    %0 = vector.load %arg1[%c0, %c0_0] : memref<16x32xf32, #tpu.memory_space<vmem>>, vector<16x32xf32>
    %1 = arith.mulf %0, %0 : vector<16x32xf32>
    %cst = arith.constant dense<0.000000e+00> : vector<16xf32>
    %2 = vector.multi_reduction <add>, %1, %cst [1] : vector<16x32xf32> to vector<16xf32>
    %3 = vector.shape_cast %2 : vector<16xf32> to vector<16x1xf32>
    %cst_1 = arith.constant 3.200000e+01 : f32
    %4 = vector.broadcast %cst_1 : f32 to vector<16x1xf32>
    %5 = arith.divf %3, %4 : vector<16x1xf32>
    %cst_2 = arith.constant 9.99999974E-6 : f32
    %6 = vector.broadcast %cst_2 : f32 to vector<16x1xf32>
    %7 = arith.addf %5, %6 : vector<16x1xf32>
    %8 = math.rsqrt %7 : vector<16x1xf32>
    %9 = vector.broadcast %8 : vector<16x1xf32> to vector<16x32xf32>
    %10 = arith.mulf %0, %9 : vector<16x32xf32>
    %c0_3 = arith.constant 0 : index
    %c0_4 = arith.constant 0 : index
    %11 = vector.load %arg2[%c0_3, %c0_4] : memref<1x32xf32, #tpu.memory_space<vmem>>, vector<1x32xf32>
    %12 = vector.broadcast %11 : vector<1x32xf32> to vector<16x32xf32>
    %13 = arith.mulf %10, %12 : vector<16x32xf32>
    %14 = arith.truncf %13 : vector<16x32xf32> to vector<16x32xbf16>
    %c0_5 = arith.constant 0 : index
    %c0_6 = arith.constant 0 : index
    %15 = vector.load %arg3[%c0_5, %c0_6] : memref<32x128xbf16, #tpu.memory_space<vmem>>, vector<32x128xbf16>
    %cst_7 = arith.constant dense<0.000000e+00> : vector<16x128xf32>
    %16 = tpu.matmul %14, %15, %cst_7 {dimension_numbers = #tpu.dot_dimension_numbers<[1], [0], [0], [1], [0, 0, 1, 1], [], []>} : vector<16x32xbf16>, vector<32x128xbf16>, vector<16x128xf32> -> vector<16x128xf32>
    %17 = vector.extract_strided_slice %16 {offsets = [0, 0], sizes = [16, 64], strides = [1, 1]} : vector<16x128xf32> to vector<16x64xf32>
    %18 = vector.extract_strided_slice %16 {offsets = [0, 64], sizes = [16, 64], strides = [1, 1]} : vector<16x128xf32> to vector<16x64xf32>
    %c0_8 = arith.constant 0 : index
    %c0_9 = arith.constant 0 : index
    %19 = vector.load %arg4[%c0_8, %c0_9] : memref<4x64xf32, #tpu.memory_space<vmem>>, vector<4x64xf32>
    %c0_10 = arith.constant 0 : index
    %c0_11 = arith.constant 0 : index
    %20 = vector.load %arg5[%c0_10, %c0_11] : memref<1x64xf32, #tpu.memory_space<vmem>>, vector<1x64xf32>
    %21 = vector.extract_strided_slice %17 {offsets = [0, 0], sizes = [8, 64], strides = [1, 1]} : vector<16x64xf32> to vector<8x64xf32>
    %cst_12 = arith.constant 0.000000e+00 : f32
    %22 = vector.broadcast %cst_12 : f32 to vector<3x64xf32>
    %23 = tpu.concatenate %22, %21 in 0 : vector<3x64xf32>, vector<8x64xf32> -> vector<11x64xf32>
    %24 = vector.extract_strided_slice %23 {offsets = [0, 0], sizes = [8, 64], strides = [1, 1]} : vector<11x64xf32> to vector<8x64xf32>
    %25 = vector.extract_strided_slice %19 {offsets = [0, 0], sizes = [1, 64], strides = [1, 1]} : vector<4x64xf32> to vector<1x64xf32>
    %26 = vector.broadcast %25 : vector<1x64xf32> to vector<8x64xf32>
    %27 = arith.mulf %24, %26 : vector<8x64xf32>
    %28 = vector.broadcast %20 : vector<1x64xf32> to vector<8x64xf32>
    %29 = arith.addf %28, %27 : vector<8x64xf32>
    %30 = vector.extract_strided_slice %23 {offsets = [1, 0], sizes = [8, 64], strides = [1, 1]} : vector<11x64xf32> to vector<8x64xf32>
    %31 = vector.extract_strided_slice %19 {offsets = [1, 0], sizes = [1, 64], strides = [1, 1]} : vector<4x64xf32> to vector<1x64xf32>
    %32 = vector.broadcast %31 : vector<1x64xf32> to vector<8x64xf32>
    %33 = arith.mulf %30, %32 : vector<8x64xf32>
    %34 = arith.addf %29, %33 : vector<8x64xf32>
    %35 = vector.extract_strided_slice %23 {offsets = [2, 0], sizes = [8, 64], strides = [1, 1]} : vector<11x64xf32> to vector<8x64xf32>
    %36 = vector.extract_strided_slice %19 {offsets = [2, 0], sizes = [1, 64], strides = [1, 1]} : vector<4x64xf32> to vector<1x64xf32>
    %37 = vector.broadcast %36 : vector<1x64xf32> to vector<8x64xf32>
    %38 = arith.mulf %35, %37 : vector<8x64xf32>
    %39 = arith.addf %34, %38 : vector<8x64xf32>
    %40 = vector.extract_strided_slice %23 {offsets = [3, 0], sizes = [8, 64], strides = [1, 1]} : vector<11x64xf32> to vector<8x64xf32>
    %41 = vector.extract_strided_slice %19 {offsets = [3, 0], sizes = [1, 64], strides = [1, 1]} : vector<4x64xf32> to vector<1x64xf32>
    %42 = vector.broadcast %41 : vector<1x64xf32> to vector<8x64xf32>
    %43 = arith.mulf %40, %42 : vector<8x64xf32>
    %44 = arith.addf %39, %43 : vector<8x64xf32>
    %45 = vector.extract_strided_slice %17 {offsets = [8, 0], sizes = [8, 64], strides = [1, 1]} : vector<16x64xf32> to vector<8x64xf32>
    %cst_13 = arith.constant 0.000000e+00 : f32
    %46 = vector.broadcast %cst_13 : f32 to vector<3x64xf32>
    %47 = tpu.concatenate %46, %45 in 0 : vector<3x64xf32>, vector<8x64xf32> -> vector<11x64xf32>
    %48 = vector.extract_strided_slice %47 {offsets = [0, 0], sizes = [8, 64], strides = [1, 1]} : vector<11x64xf32> to vector<8x64xf32>
    %49 = vector.extract_strided_slice %19 {offsets = [0, 0], sizes = [1, 64], strides = [1, 1]} : vector<4x64xf32> to vector<1x64xf32>
    %50 = vector.broadcast %49 : vector<1x64xf32> to vector<8x64xf32>
    %51 = arith.mulf %48, %50 : vector<8x64xf32>
    %52 = vector.broadcast %20 : vector<1x64xf32> to vector<8x64xf32>
    %53 = arith.addf %52, %51 : vector<8x64xf32>
    %54 = vector.extract_strided_slice %47 {offsets = [1, 0], sizes = [8, 64], strides = [1, 1]} : vector<11x64xf32> to vector<8x64xf32>
    %55 = vector.extract_strided_slice %19 {offsets = [1, 0], sizes = [1, 64], strides = [1, 1]} : vector<4x64xf32> to vector<1x64xf32>
    %56 = vector.broadcast %55 : vector<1x64xf32> to vector<8x64xf32>
    %57 = arith.mulf %54, %56 : vector<8x64xf32>
    %58 = arith.addf %53, %57 : vector<8x64xf32>
    %59 = vector.extract_strided_slice %47 {offsets = [2, 0], sizes = [8, 64], strides = [1, 1]} : vector<11x64xf32> to vector<8x64xf32>
    %60 = vector.extract_strided_slice %19 {offsets = [2, 0], sizes = [1, 64], strides = [1, 1]} : vector<4x64xf32> to vector<1x64xf32>
    %61 = vector.broadcast %60 : vector<1x64xf32> to vector<8x64xf32>
    %62 = arith.mulf %59, %61 : vector<8x64xf32>
    %63 = arith.addf %58, %62 : vector<8x64xf32>
    %64 = vector.extract_strided_slice %47 {offsets = [3, 0], sizes = [8, 64], strides = [1, 1]} : vector<11x64xf32> to vector<8x64xf32>
    %65 = vector.extract_strided_slice %19 {offsets = [3, 0], sizes = [1, 64], strides = [1, 1]} : vector<4x64xf32> to vector<1x64xf32>
    %66 = vector.broadcast %65 : vector<1x64xf32> to vector<8x64xf32>
    %67 = arith.mulf %64, %66 : vector<8x64xf32>
    %68 = arith.addf %63, %67 : vector<8x64xf32>
    %69 = tpu.concatenate %44, %68 in 0 : vector<8x64xf32>, vector<8x64xf32> -> vector<16x64xf32>
    %70 = arith.negf %69 : vector<16x64xf32>
    %71 = math.exp %70 : vector<16x64xf32>
    %cst_14 = arith.constant 1.000000e+00 : f32
    %72 = vector.broadcast %cst_14 : f32 to vector<16x64xf32>
    %73 = arith.addf %72, %71 : vector<16x64xf32>
    %74 = arith.divf %72, %73 : vector<16x64xf32>
    %75 = arith.mulf %69, %74 : vector<16x64xf32>
    %76 = arith.truncf %75 : vector<16x64xf32> to vector<16x64xbf16>
    %c0_15 = arith.constant 0 : index
    %c0_16 = arith.constant 0 : index
    %77 = vector.load %arg6[%c0_15, %c0_16] : memref<64x18xbf16, #tpu.memory_space<vmem>>, vector<64x18xbf16>
    %cst_17 = arith.constant dense<0.000000e+00> : vector<16x18xf32>
    %78 = tpu.matmul %76, %77, %cst_17 {dimension_numbers = #tpu.dot_dimension_numbers<[1], [0], [0], [1], [0, 0, 1, 1], [], []>} : vector<16x64xbf16>, vector<64x18xbf16>, vector<16x18xf32> -> vector<16x18xf32>
    %79 = vector.extract_strided_slice %78 {offsets = [0, 0], sizes = [16, 2], strides = [1, 1]} : vector<16x18xf32> to vector<16x2xf32>
    %80 = arith.truncf %79 : vector<16x2xf32> to vector<16x2xbf16>
    %c0_18 = arith.constant 0 : index
    %c0_19 = arith.constant 0 : index
    %81 = vector.load %arg7[%c0_18, %c0_19] : memref<2x64xbf16, #tpu.memory_space<vmem>>, vector<2x64xbf16>
    %cst_20 = arith.constant dense<0.000000e+00> : vector<16x64xf32>
    %82 = tpu.matmul %80, %81, %cst_20 {dimension_numbers = #tpu.dot_dimension_numbers<[1], [0], [0], [1], [0, 0, 1, 1], [], []>} : vector<16x2xbf16>, vector<2x64xbf16>, vector<16x64xf32> -> vector<16x64xf32>
    %c0_21 = arith.constant 0 : index
    %c0_22 = arith.constant 0 : index
    %83 = vector.load %arg8[%c0_21, %c0_22] : memref<1x64xf32, #tpu.memory_space<vmem>>, vector<1x64xf32>
    %84 = vector.broadcast %83 : vector<1x64xf32> to vector<16x64xf32>
    %85 = arith.addf %82, %84 : vector<16x64xf32>
    %cst_23 = arith.constant 0.000000e+00 : f32
    %86 = vector.broadcast %cst_23 : f32 to vector<16x64xf32>
    %87 = arith.maximumf %85, %86 : vector<16x64xf32>
    %88 = vector.broadcast %cst_23 : f32 to vector<16x64xf32>
    %89 = arith.subf %85, %88 : vector<16x64xf32>
    %90 = arith.cmpf one, %89, %89 : vector<16x64xf32>
    %91 = vector.broadcast %cst_23 : f32 to vector<16x64xf32>
    %92 = arith.addf %85, %91 : vector<16x64xf32>
    %93 = math.absf %89 : vector<16x64xf32>
    %cst_24 = arith.constant 0.000000e+00 : f32
    %94 = vector.broadcast %cst_24 : f32 to vector<16x64xf32>
    %95 = arith.subf %94, %93 : vector<16x64xf32>
    %96 = math.exp %95 : vector<16x64xf32>
    %97 = math.log1p %96 : vector<16x64xf32>
    %98 = arith.addf %87, %97 : vector<16x64xf32>
    %99 = arith.select %90, %92, %98 : vector<16x64xi1>, vector<16x64xf32>
    %c0_25 = arith.constant 0 : index
    %c0_26 = arith.constant 0 : index
    %100 = vector.load %arg13[%c0_25, %c0_26] : memref<16x64xf32, #tpu.memory_space<vmem>>, vector<16x64xf32>
    tpu.vector_store %arg13[%c0_25, %c0_26], %99 {strides = array<i32>} : memref<16x64xf32, #tpu.memory_space<vmem>>, vector<16x64xf32>,
    %101 = arith.mulf %99, %75 : vector<16x64xf32>
    %c0_27 = arith.constant 0 : index
    %c0_28 = arith.constant 0 : index
    %102 = vector.load %arg14[%c0_27, %c0_28] : memref<16x64xf32, #tpu.memory_space<vmem>>, vector<16x64xf32>
    tpu.vector_store %arg14[%c0_27, %c0_28], %101 {strides = array<i32>} : memref<16x64xf32, #tpu.memory_space<vmem>>, vector<16x64xf32>,
    %103 = vector.extract_strided_slice %78 {offsets = [0, 2], sizes = [16, 16], strides = [1, 1]} : vector<16x18xf32> to vector<16x16xf32>
    %c0_29 = arith.constant 0 : index
    %c0_30 = arith.constant 0 : index
    %104 = vector.load %arg15[%c0_29, %c0_30] : memref<16x128xf32, #tpu.memory_space<vmem>>, vector<16x16xf32>
    tpu.vector_store %arg15[%c0_29, %c0_30], %103 {strides = array<i32>} : memref<16x128xf32, #tpu.memory_space<vmem>>, vector<16x16xf32>,
    %c0_31 = arith.constant 0 : index
    %c0_32 = arith.constant 0 : index
    %105 = vector.load %arg9[%c0_31, %c0_32] : memref<8x64xf32, #tpu.memory_space<vmem>>, vector<8x64xf32>
    %cst_33 = arith.constant 0.000000e+00 : f32
    %106 = vector.broadcast %cst_33 : f32 to vector<8x64xf32>
    %c0_34 = arith.constant 0 : index
    %c0_35 = arith.constant 0 : index
    %107 = vector.load %arg17[%c0_34, %c0_35] : memref<8x64xf32, #tpu.memory_space<vmem>>, vector<8x64xf32>
    tpu.vector_store %arg17[%c0_34, %c0_35], %106 {strides = array<i32>} : memref<8x64xf32, #tpu.memory_space<vmem>>, vector<8x64xf32>,
    %c0_i32 = arith.constant 0 : i32
    %c1_i32 = arith.constant 1 : i32
    %108 = arith.muli %c0_i32, %c1_i32 : i32
    %c0_i32_36 = arith.constant 0 : i32
    %109 = arith.addi %c0_i32_36, %108 : i32
    %c8_i32 = arith.constant 8 : i32
    %110 = arith.muli %109, %c8_i32 : i32
    %c0_i32_37 = arith.constant 0 : i32
    %111 = arith.addi %c0_i32_37, %110 : i32
    %112 = tpu.assume_multiple %111, 8 : i32
    %113 = arith.index_cast %112 : i32 to index
    %c0_38 = arith.constant 0 : index
    %114 = vector.load %arg13[%113, %c0_38] : memref<16x64xf32, #tpu.memory_space<vmem>>, vector<8x64xf32>
    %115 = arith.index_cast %112 : i32 to index
    %c0_39 = arith.constant 0 : index
    %116 = vector.load %arg14[%115, %c0_39] : memref<16x64xf32, #tpu.memory_space<vmem>>, vector<8x64xf32>
    %117 = arith.index_cast %112 : i32 to index
    %c0_40 = arith.constant 0 : index
    %118 = vector.load %arg15[%117, %c0_40] : memref<16x128xf32, #tpu.memory_space<vmem>>, vector<8x128xf32>
    %119 = tpu.transpose %118, [1, 0] : vector<8x128xf32> -> vector<128x8xf32>
    %120 = vector.extract_strided_slice %114 {offsets = [0, 0], sizes = [1, 64], strides = [1, 1]} : vector<8x64xf32> to vector<1x64xf32>
    %121 = vector.broadcast %120 : vector<1x64xf32> to vector<8x64xf32>
    %122 = arith.mulf %121, %105 : vector<8x64xf32>
    %123 = vector.extract_strided_slice %114 {offsets = [1, 0], sizes = [1, 64], strides = [1, 1]} : vector<8x64xf32> to vector<1x64xf32>
    %124 = vector.broadcast %123 : vector<1x64xf32> to vector<8x64xf32>
    %125 = arith.mulf %124, %105 : vector<8x64xf32>
    %126 = vector.extract_strided_slice %114 {offsets = [2, 0], sizes = [1, 64], strides = [1, 1]} : vector<8x64xf32> to vector<1x64xf32>
    %127 = vector.broadcast %126 : vector<1x64xf32> to vector<8x64xf32>
    %128 = arith.mulf %127, %105 : vector<8x64xf32>
    %129 = vector.extract_strided_slice %114 {offsets = [3, 0], sizes = [1, 64], strides = [1, 1]} : vector<8x64xf32> to vector<1x64xf32>
    %130 = vector.broadcast %129 : vector<1x64xf32> to vector<8x64xf32>
    %131 = arith.mulf %130, %105 : vector<8x64xf32>
    %132 = vector.extract_strided_slice %114 {offsets = [4, 0], sizes = [1, 64], strides = [1, 1]} : vector<8x64xf32> to vector<1x64xf32>
    %133 = vector.broadcast %132 : vector<1x64xf32> to vector<8x64xf32>
    %134 = arith.mulf %133, %105 : vector<8x64xf32>
    %135 = vector.extract_strided_slice %114 {offsets = [5, 0], sizes = [1, 64], strides = [1, 1]} : vector<8x64xf32> to vector<1x64xf32>
    %136 = vector.broadcast %135 : vector<1x64xf32> to vector<8x64xf32>
    %137 = arith.mulf %136, %105 : vector<8x64xf32>
    %138 = vector.extract_strided_slice %114 {offsets = [6, 0], sizes = [1, 64], strides = [1, 1]} : vector<8x64xf32> to vector<1x64xf32>
    %139 = vector.broadcast %138 : vector<1x64xf32> to vector<8x64xf32>
    %140 = arith.mulf %139, %105 : vector<8x64xf32>
    %141 = vector.extract_strided_slice %114 {offsets = [7, 0], sizes = [1, 64], strides = [1, 1]} : vector<8x64xf32> to vector<1x64xf32>
    %142 = vector.broadcast %141 : vector<1x64xf32> to vector<8x64xf32>
    %143 = arith.mulf %142, %105 : vector<8x64xf32>
    %144 = tpu.concatenate %122, %125, %128, %131, %134, %137, %140, %143 in 0 : vector<8x64xf32>, vector<8x64xf32>, vector<8x64xf32>, vector<8x64xf32>, vector<8x64xf32>, vector<8x64xf32>, vector<8x64xf32>, vector<8x64xf32> -> vector<64x64xf32>
    %145 = math.exp %144 : vector<64x64xf32>
    %146 = vector.extract_strided_slice %116 {offsets = [0, 0], sizes = [1, 64], strides = [1, 1]} : vector<8x64xf32> to vector<1x64xf32>
    %147 = vector.extract_strided_slice %119 {offsets = [0, 0], sizes = [8, 1], strides = [1, 1]} : vector<128x8xf32> to vector<8x1xf32>
    %148 = vector.broadcast %146 : vector<1x64xf32> to vector<8x64xf32>
    %149 = vector.broadcast %147 : vector<8x1xf32> to vector<8x64xf32>
    %150 = arith.mulf %148, %149 : vector<8x64xf32>
    %151 = vector.extract_strided_slice %116 {offsets = [1, 0], sizes = [1, 64], strides = [1, 1]} : vector<8x64xf32> to vector<1x64xf32>
    %152 = vector.extract_strided_slice %119 {offsets = [0, 1], sizes = [8, 1], strides = [1, 1]} : vector<128x8xf32> to vector<8x1xf32>
    %153 = vector.broadcast %151 : vector<1x64xf32> to vector<8x64xf32>
    %154 = vector.broadcast %152 : vector<8x1xf32> to vector<8x64xf32>
    %155 = arith.mulf %153, %154 : vector<8x64xf32>
    %156 = vector.extract_strided_slice %116 {offsets = [2, 0], sizes = [1, 64], strides = [1, 1]} : vector<8x64xf32> to vector<1x64xf32>
    %157 = vector.extract_strided_slice %119 {offsets = [0, 2], sizes = [8, 1], strides = [1, 1]} : vector<128x8xf32> to vector<8x1xf32>
    %158 = vector.broadcast %156 : vector<1x64xf32> to vector<8x64xf32>
    %159 = vector.broadcast %157 : vector<8x1xf32> to vector<8x64xf32>
    %160 = arith.mulf %158, %159 : vector<8x64xf32>
    %161 = vector.extract_strided_slice %116 {offsets = [3, 0], sizes = [1, 64], strides = [1, 1]} : vector<8x64xf32> to vector<1x64xf32>
    %162 = vector.extract_strided_slice %119 {offsets = [0, 3], sizes = [8, 1], strides = [1, 1]} : vector<128x8xf32> to vector<8x1xf32>
    %163 = vector.broadcast %161 : vector<1x64xf32> to vector<8x64xf32>
    %164 = vector.broadcast %162 : vector<8x1xf32> to vector<8x64xf32>
    %165 = arith.mulf %163, %164 : vector<8x64xf32>
    %166 = vector.extract_strided_slice %116 {offsets = [4, 0], sizes = [1, 64], strides = [1, 1]} : vector<8x64xf32> to vector<1x64xf32>
    %167 = vector.extract_strided_slice %119 {offsets = [0, 4], sizes = [8, 1], strides = [1, 1]} : vector<128x8xf32> to vector<8x1xf32>
    %168 = vector.broadcast %166 : vector<1x64xf32> to vector<8x64xf32>
    %169 = vector.broadcast %167 : vector<8x1xf32> to vector<8x64xf32>
    %170 = arith.mulf %168, %169 : vector<8x64xf32>
    %171 = vector.extract_strided_slice %116 {offsets = [5, 0], sizes = [1, 64], strides = [1, 1]} : vector<8x64xf32> to vector<1x64xf32>
    %172 = vector.extract_strided_slice %119 {offsets = [0, 5], sizes = [8, 1], strides = [1, 1]} : vector<128x8xf32> to vector<8x1xf32>
    %173 = vector.broadcast %171 : vector<1x64xf32> to vector<8x64xf32>
    %174 = vector.broadcast %172 : vector<8x1xf32> to vector<8x64xf32>
    %175 = arith.mulf %173, %174 : vector<8x64xf32>
    %176 = vector.extract_strided_slice %116 {offsets = [6, 0], sizes = [1, 64], strides = [1, 1]} : vector<8x64xf32> to vector<1x64xf32>
    %177 = vector.extract_strided_slice %119 {offsets = [0, 6], sizes = [8, 1], strides = [1, 1]} : vector<128x8xf32> to vector<8x1xf32>
    %178 = vector.broadcast %176 : vector<1x64xf32> to vector<8x64xf32>
    %179 = vector.broadcast %177 : vector<8x1xf32> to vector<8x64xf32>
    %180 = arith.mulf %178, %179 : vector<8x64xf32>
    %181 = vector.extract_strided_slice %116 {offsets = [7, 0], sizes = [1, 64], strides = [1, 1]} : vector<8x64xf32> to vector<1x64xf32>
    %182 = vector.extract_strided_slice %119 {offsets = [0, 7], sizes = [8, 1], strides = [1, 1]} : vector<128x8xf32> to vector<8x1xf32>
    %183 = vector.broadcast %181 : vector<1x64xf32> to vector<8x64xf32>
    %184 = vector.broadcast %182 : vector<8x1xf32> to vector<8x64xf32>
    %185 = arith.mulf %183, %184 : vector<8x64xf32>
    %c0_41 = arith.constant 0 : index
    %c0_42 = arith.constant 0 : index
    %186 = vector.load %arg17[%c0_41, %c0_42] : memref<8x64xf32, #tpu.memory_space<vmem>>, vector<8x64xf32>
    %187 = vector.extract_strided_slice %145 {offsets = [0, 0], sizes = [8, 64], strides = [1, 1]} : vector<64x64xf32> to vector<8x64xf32>
    %188 = arith.mulf %187, %186 : vector<8x64xf32>
    %189 = arith.addf %188, %150 : vector<8x64xf32>
    %190 = vector.extract_strided_slice %119 {offsets = [8, 0], sizes = [8, 1], strides = [1, 1]} : vector<128x8xf32> to vector<8x1xf32>
    %191 = vector.broadcast %190 : vector<8x1xf32> to vector<8x64xf32>
    %192 = arith.mulf %189, %191 : vector<8x64xf32>
    %cst_43 = arith.constant dense<0.000000e+00> : vector<64xf32>
    %193 = vector.multi_reduction <add>, %192, %cst_43 [0] : vector<8x64xf32> to vector<64xf32>
    %194 = vector.shape_cast %193 : vector<64xf32> to vector<1x64xf32>
    %195 = vector.extract_strided_slice %145 {offsets = [8, 0], sizes = [8, 64], strides = [1, 1]} : vector<64x64xf32> to vector<8x64xf32>
    %196 = arith.mulf %195, %189 : vector<8x64xf32>
    %197 = arith.addf %196, %155 : vector<8x64xf32>
    %198 = vector.extract_strided_slice %119 {offsets = [8, 1], sizes = [8, 1], strides = [1, 1]} : vector<128x8xf32> to vector<8x1xf32>
    %199 = vector.broadcast %198 : vector<8x1xf32> to vector<8x64xf32>
    %200 = arith.mulf %197, %199 : vector<8x64xf32>
    %cst_44 = arith.constant dense<0.000000e+00> : vector<64xf32>
    %201 = vector.multi_reduction <add>, %200, %cst_44 [0] : vector<8x64xf32> to vector<64xf32>
    %202 = vector.shape_cast %201 : vector<64xf32> to vector<1x64xf32>
    %203 = vector.extract_strided_slice %145 {offsets = [16, 0], sizes = [8, 64], strides = [1, 1]} : vector<64x64xf32> to vector<8x64xf32>
    %204 = arith.mulf %203, %197 : vector<8x64xf32>
    %205 = arith.addf %204, %160 : vector<8x64xf32>
    %206 = vector.extract_strided_slice %119 {offsets = [8, 2], sizes = [8, 1], strides = [1, 1]} : vector<128x8xf32> to vector<8x1xf32>
    %207 = vector.broadcast %206 : vector<8x1xf32> to vector<8x64xf32>
    %208 = arith.mulf %205, %207 : vector<8x64xf32>
    %cst_45 = arith.constant dense<0.000000e+00> : vector<64xf32>
    %209 = vector.multi_reduction <add>, %208, %cst_45 [0] : vector<8x64xf32> to vector<64xf32>
    %210 = vector.shape_cast %209 : vector<64xf32> to vector<1x64xf32>
    %211 = vector.extract_strided_slice %145 {offsets = [24, 0], sizes = [8, 64], strides = [1, 1]} : vector<64x64xf32> to vector<8x64xf32>
    %212 = arith.mulf %211, %205 : vector<8x64xf32>
    %213 = arith.addf %212, %165 : vector<8x64xf32>
    %214 = vector.extract_strided_slice %119 {offsets = [8, 3], sizes = [8, 1], strides = [1, 1]} : vector<128x8xf32> to vector<8x1xf32>
    %215 = vector.broadcast %214 : vector<8x1xf32> to vector<8x64xf32>
    %216 = arith.mulf %213, %215 : vector<8x64xf32>
    %cst_46 = arith.constant dense<0.000000e+00> : vector<64xf32>
    %217 = vector.multi_reduction <add>, %216, %cst_46 [0] : vector<8x64xf32> to vector<64xf32>
    %218 = vector.shape_cast %217 : vector<64xf32> to vector<1x64xf32>
    %219 = vector.extract_strided_slice %145 {offsets = [32, 0], sizes = [8, 64], strides = [1, 1]} : vector<64x64xf32> to vector<8x64xf32>
    %220 = arith.mulf %219, %213 : vector<8x64xf32>
    %221 = arith.addf %220, %170 : vector<8x64xf32>
    %222 = vector.extract_strided_slice %119 {offsets = [8, 4], sizes = [8, 1], strides = [1, 1]} : vector<128x8xf32> to vector<8x1xf32>
    %223 = vector.broadcast %222 : vector<8x1xf32> to vector<8x64xf32>
    %224 = arith.mulf %221, %223 : vector<8x64xf32>
    %cst_47 = arith.constant dense<0.000000e+00> : vector<64xf32>
    %225 = vector.multi_reduction <add>, %224, %cst_47 [0] : vector<8x64xf32> to vector<64xf32>
    %226 = vector.shape_cast %225 : vector<64xf32> to vector<1x64xf32>
    %227 = vector.extract_strided_slice %145 {offsets = [40, 0], sizes = [8, 64], strides = [1, 1]} : vector<64x64xf32> to vector<8x64xf32>
    %228 = arith.mulf %227, %221 : vector<8x64xf32>
    %229 = arith.addf %228, %175 : vector<8x64xf32>
    %230 = vector.extract_strided_slice %119 {offsets = [8, 5], sizes = [8, 1], strides = [1, 1]} : vector<128x8xf32> to vector<8x1xf32>
    %231 = vector.broadcast %230 : vector<8x1xf32> to vector<8x64xf32>
    %232 = arith.mulf %229, %231 : vector<8x64xf32>
    %cst_48 = arith.constant dense<0.000000e+00> : vector<64xf32>
    %233 = vector.multi_reduction <add>, %232, %cst_48 [0] : vector<8x64xf32> to vector<64xf32>
    %234 = vector.shape_cast %233 : vector<64xf32> to vector<1x64xf32>
    %235 = vector.extract_strided_slice %145 {offsets = [48, 0], sizes = [8, 64], strides = [1, 1]} : vector<64x64xf32> to vector<8x64xf32>
    %236 = arith.mulf %235, %229 : vector<8x64xf32>
    %237 = arith.addf %236, %180 : vector<8x64xf32>
    %238 = vector.extract_strided_slice %119 {offsets = [8, 6], sizes = [8, 1], strides = [1, 1]} : vector<128x8xf32> to vector<8x1xf32>
    %239 = vector.broadcast %238 : vector<8x1xf32> to vector<8x64xf32>
    %240 = arith.mulf %237, %239 : vector<8x64xf32>
    %cst_49 = arith.constant dense<0.000000e+00> : vector<64xf32>
    %241 = vector.multi_reduction <add>, %240, %cst_49 [0] : vector<8x64xf32> to vector<64xf32>
    %242 = vector.shape_cast %241 : vector<64xf32> to vector<1x64xf32>
    %243 = vector.extract_strided_slice %145 {offsets = [56, 0], sizes = [8, 64], strides = [1, 1]} : vector<64x64xf32> to vector<8x64xf32>
    %244 = arith.mulf %243, %237 : vector<8x64xf32>
    %245 = arith.addf %244, %185 : vector<8x64xf32>
    %246 = vector.extract_strided_slice %119 {offsets = [8, 7], sizes = [8, 1], strides = [1, 1]} : vector<128x8xf32> to vector<8x1xf32>
    %247 = vector.broadcast %246 : vector<8x1xf32> to vector<8x64xf32>
    %248 = arith.mulf %245, %247 : vector<8x64xf32>
    %cst_50 = arith.constant dense<0.000000e+00> : vector<64xf32>
    %249 = vector.multi_reduction <add>, %248, %cst_50 [0] : vector<8x64xf32> to vector<64xf32>
    %250 = vector.shape_cast %249 : vector<64xf32> to vector<1x64xf32>
    %c0_51 = arith.constant 0 : index
    %c0_52 = arith.constant 0 : index
    %251 = vector.load %arg17[%c0_51, %c0_52] : memref<8x64xf32, #tpu.memory_space<vmem>>, vector<8x64xf32>
    tpu.vector_store %arg17[%c0_51, %c0_52], %245 {strides = array<i32>} : memref<8x64xf32, #tpu.memory_space<vmem>>, vector<8x64xf32>,
    %252 = tpu.concatenate %194, %202, %210, %218, %226, %234, %242, %250 in 0 : vector<1x64xf32>, vector<1x64xf32>, vector<1x64xf32>, vector<1x64xf32>, vector<1x64xf32>, vector<1x64xf32>, vector<1x64xf32>, vector<1x64xf32> -> vector<8x64xf32>
    %253 = arith.index_cast %112 : i32 to index
    %c0_53 = arith.constant 0 : index
    %254 = vector.load %arg16[%253, %c0_53] : memref<16x64xf32, #tpu.memory_space<vmem>>, vector<8x64xf32>
    tpu.vector_store %arg16[%253, %c0_53], %252 {strides = array<i32>} : memref<16x64xf32, #tpu.memory_space<vmem>>, vector<8x64xf32>,
    %c1_i32_54 = arith.constant 1 : i32
    %cst_55 = arith.constant 0.000000e+00 : f32
    %255 = vector.broadcast %cst_55 : f32 to vector<8x64xf32>
    %c0_56 = arith.constant 0 : index
    %c0_57 = arith.constant 0 : index
    %256 = vector.load %arg17[%c0_56, %c0_57] : memref<8x64xf32, #tpu.memory_space<vmem>>, vector<8x64xf32>
    tpu.vector_store %arg17[%c0_56, %c0_57], %255 {strides = array<i32>} : memref<8x64xf32, #tpu.memory_space<vmem>>, vector<8x64xf32>,
    %c0_i32_58 = arith.constant 0 : i32
    %c1_i32_59 = arith.constant 1 : i32
    %257 = arith.muli %c0_i32_58, %c1_i32_59 : i32
    %c0_i32_60 = arith.constant 0 : i32
    %258 = arith.addi %c0_i32_60, %257 : i32
    %c8_i32_61 = arith.constant 8 : i32
    %259 = arith.muli %258, %c8_i32_61 : i32
    %c8_i32_62 = arith.constant 8 : i32
    %260 = arith.addi %c8_i32_62, %259 : i32
    %261 = tpu.assume_multiple %260, 8 : i32
    %262 = arith.index_cast %261 : i32 to index
    %c0_63 = arith.constant 0 : index
    %263 = vector.load %arg13[%262, %c0_63] : memref<16x64xf32, #tpu.memory_space<vmem>>, vector<8x64xf32>
    %264 = arith.index_cast %261 : i32 to index
    %c0_64 = arith.constant 0 : index
    %265 = vector.load %arg14[%264, %c0_64] : memref<16x64xf32, #tpu.memory_space<vmem>>, vector<8x64xf32>
    %266 = arith.index_cast %261 : i32 to index
    %c0_65 = arith.constant 0 : index
    %267 = vector.load %arg15[%266, %c0_65] : memref<16x128xf32, #tpu.memory_space<vmem>>, vector<8x128xf32>
    %268 = tpu.transpose %267, [1, 0] : vector<8x128xf32> -> vector<128x8xf32>
    %269 = vector.extract_strided_slice %263 {offsets = [0, 0], sizes = [1, 64], strides = [1, 1]} : vector<8x64xf32> to vector<1x64xf32>
    %270 = vector.broadcast %269 : vector<1x64xf32> to vector<8x64xf32>
    %271 = arith.mulf %270, %105 : vector<8x64xf32>
    %272 = vector.extract_strided_slice %263 {offsets = [1, 0], sizes = [1, 64], strides = [1, 1]} : vector<8x64xf32> to vector<1x64xf32>
    %273 = vector.broadcast %272 : vector<1x64xf32> to vector<8x64xf32>
    %274 = arith.mulf %273, %105 : vector<8x64xf32>
    %275 = vector.extract_strided_slice %263 {offsets = [2, 0], sizes = [1, 64], strides = [1, 1]} : vector<8x64xf32> to vector<1x64xf32>
    %276 = vector.broadcast %275 : vector<1x64xf32> to vector<8x64xf32>
    %277 = arith.mulf %276, %105 : vector<8x64xf32>
    %278 = vector.extract_strided_slice %263 {offsets = [3, 0], sizes = [1, 64], strides = [1, 1]} : vector<8x64xf32> to vector<1x64xf32>
    %279 = vector.broadcast %278 : vector<1x64xf32> to vector<8x64xf32>
    %280 = arith.mulf %279, %105 : vector<8x64xf32>
    %281 = vector.extract_strided_slice %263 {offsets = [4, 0], sizes = [1, 64], strides = [1, 1]} : vector<8x64xf32> to vector<1x64xf32>
    %282 = vector.broadcast %281 : vector<1x64xf32> to vector<8x64xf32>
    %283 = arith.mulf %282, %105 : vector<8x64xf32>
    %284 = vector.extract_strided_slice %263 {offsets = [5, 0], sizes = [1, 64], strides = [1, 1]} : vector<8x64xf32> to vector<1x64xf32>
    %285 = vector.broadcast %284 : vector<1x64xf32> to vector<8x64xf32>
    %286 = arith.mulf %285, %105 : vector<8x64xf32>
    %287 = vector.extract_strided_slice %263 {offsets = [6, 0], sizes = [1, 64], strides = [1, 1]} : vector<8x64xf32> to vector<1x64xf32>
    %288 = vector.broadcast %287 : vector<1x64xf32> to vector<8x64xf32>
    %289 = arith.mulf %288, %105 : vector<8x64xf32>
    %290 = vector.extract_strided_slice %263 {offsets = [7, 0], sizes = [1, 64], strides = [1, 1]} : vector<8x64xf32> to vector<1x64xf32>
    %291 = vector.broadcast %290 : vector<1x64xf32> to vector<8x64xf32>
    %292 = arith.mulf %291, %105 : vector<8x64xf32>
    %293 = tpu.concatenate %271, %274, %277, %280, %283, %286, %289, %292 in 0 : vector<8x64xf32>, vector<8x64xf32>, vector<8x64xf32>, vector<8x64xf32>, vector<8x64xf32>, vector<8x64xf32>, vector<8x64xf32>, vector<8x64xf32> -> vector<64x64xf32>
    %294 = math.exp %293 : vector<64x64xf32>
    %295 = vector.extract_strided_slice %265 {offsets = [0, 0], sizes = [1, 64], strides = [1, 1]} : vector<8x64xf32> to vector<1x64xf32>
    %296 = vector.extract_strided_slice %268 {offsets = [0, 0], sizes = [8, 1], strides = [1, 1]} : vector<128x8xf32> to vector<8x1xf32>
    %297 = vector.broadcast %295 : vector<1x64xf32> to vector<8x64xf32>
    %298 = vector.broadcast %296 : vector<8x1xf32> to vector<8x64xf32>
    %299 = arith.mulf %297, %298 : vector<8x64xf32>
    %300 = vector.extract_strided_slice %265 {offsets = [1, 0], sizes = [1, 64], strides = [1, 1]} : vector<8x64xf32> to vector<1x64xf32>
    %301 = vector.extract_strided_slice %268 {offsets = [0, 1], sizes = [8, 1], strides = [1, 1]} : vector<128x8xf32> to vector<8x1xf32>
    %302 = vector.broadcast %300 : vector<1x64xf32> to vector<8x64xf32>
    %303 = vector.broadcast %301 : vector<8x1xf32> to vector<8x64xf32>
    %304 = arith.mulf %302, %303 : vector<8x64xf32>
    %305 = vector.extract_strided_slice %265 {offsets = [2, 0], sizes = [1, 64], strides = [1, 1]} : vector<8x64xf32> to vector<1x64xf32>
    %306 = vector.extract_strided_slice %268 {offsets = [0, 2], sizes = [8, 1], strides = [1, 1]} : vector<128x8xf32> to vector<8x1xf32>
    %307 = vector.broadcast %305 : vector<1x64xf32> to vector<8x64xf32>
    %308 = vector.broadcast %306 : vector<8x1xf32> to vector<8x64xf32>
    %309 = arith.mulf %307, %308 : vector<8x64xf32>
    %310 = vector.extract_strided_slice %265 {offsets = [3, 0], sizes = [1, 64], strides = [1, 1]} : vector<8x64xf32> to vector<1x64xf32>
    %311 = vector.extract_strided_slice %268 {offsets = [0, 3], sizes = [8, 1], strides = [1, 1]} : vector<128x8xf32> to vector<8x1xf32>
    %312 = vector.broadcast %310 : vector<1x64xf32> to vector<8x64xf32>
    %313 = vector.broadcast %311 : vector<8x1xf32> to vector<8x64xf32>
    %314 = arith.mulf %312, %313 : vector<8x64xf32>
    %315 = vector.extract_strided_slice %265 {offsets = [4, 0], sizes = [1, 64], strides = [1, 1]} : vector<8x64xf32> to vector<1x64xf32>
    %316 = vector.extract_strided_slice %268 {offsets = [0, 4], sizes = [8, 1], strides = [1, 1]} : vector<128x8xf32> to vector<8x1xf32>
    %317 = vector.broadcast %315 : vector<1x64xf32> to vector<8x64xf32>
    %318 = vector.broadcast %316 : vector<8x1xf32> to vector<8x64xf32>
    %319 = arith.mulf %317, %318 : vector<8x64xf32>
    %320 = vector.extract_strided_slice %265 {offsets = [5, 0], sizes = [1, 64], strides = [1, 1]} : vector<8x64xf32> to vector<1x64xf32>
    %321 = vector.extract_strided_slice %268 {offsets = [0, 5], sizes = [8, 1], strides = [1, 1]} : vector<128x8xf32> to vector<8x1xf32>
    %322 = vector.broadcast %320 : vector<1x64xf32> to vector<8x64xf32>
    %323 = vector.broadcast %321 : vector<8x1xf32> to vector<8x64xf32>
    %324 = arith.mulf %322, %323 : vector<8x64xf32>
    %325 = vector.extract_strided_slice %265 {offsets = [6, 0], sizes = [1, 64], strides = [1, 1]} : vector<8x64xf32> to vector<1x64xf32>
    %326 = vector.extract_strided_slice %268 {offsets = [0, 6], sizes = [8, 1], strides = [1, 1]} : vector<128x8xf32> to vector<8x1xf32>
    %327 = vector.broadcast %325 : vector<1x64xf32> to vector<8x64xf32>
    %328 = vector.broadcast %326 : vector<8x1xf32> to vector<8x64xf32>
    %329 = arith.mulf %327, %328 : vector<8x64xf32>
    %330 = vector.extract_strided_slice %265 {offsets = [7, 0], sizes = [1, 64], strides = [1, 1]} : vector<8x64xf32> to vector<1x64xf32>
    %331 = vector.extract_strided_slice %268 {offsets = [0, 7], sizes = [8, 1], strides = [1, 1]} : vector<128x8xf32> to vector<8x1xf32>
    %332 = vector.broadcast %330 : vector<1x64xf32> to vector<8x64xf32>
    %333 = vector.broadcast %331 : vector<8x1xf32> to vector<8x64xf32>
    %334 = arith.mulf %332, %333 : vector<8x64xf32>
    %c0_66 = arith.constant 0 : index
    %c0_67 = arith.constant 0 : index
    %335 = vector.load %arg17[%c0_66, %c0_67] : memref<8x64xf32, #tpu.memory_space<vmem>>, vector<8x64xf32>
    %336 = vector.extract_strided_slice %294 {offsets = [0, 0], sizes = [8, 64], strides = [1, 1]} : vector<64x64xf32> to vector<8x64xf32>
    %337 = arith.mulf %336, %335 : vector<8x64xf32>
    %338 = arith.addf %337, %299 : vector<8x64xf32>
    %339 = vector.extract_strided_slice %268 {offsets = [8, 0], sizes = [8, 1], strides = [1, 1]} : vector<128x8xf32> to vector<8x1xf32>
    %340 = vector.broadcast %339 : vector<8x1xf32> to vector<8x64xf32>
    %341 = arith.mulf %338, %340 : vector<8x64xf32>
    %cst_68 = arith.constant dense<0.000000e+00> : vector<64xf32>
    %342 = vector.multi_reduction <add>, %341, %cst_68 [0] : vector<8x64xf32> to vector<64xf32>
    %343 = vector.shape_cast %342 : vector<64xf32> to vector<1x64xf32>
    %344 = vector.extract_strided_slice %294 {offsets = [8, 0], sizes = [8, 64], strides = [1, 1]} : vector<64x64xf32> to vector<8x64xf32>
    %345 = arith.mulf %344, %338 : vector<8x64xf32>
    %346 = arith.addf %345, %304 : vector<8x64xf32>
    %347 = vector.extract_strided_slice %268 {offsets = [8, 1], sizes = [8, 1], strides = [1, 1]} : vector<128x8xf32> to vector<8x1xf32>
    %348 = vector.broadcast %347 : vector<8x1xf32> to vector<8x64xf32>
    %349 = arith.mulf %346, %348 : vector<8x64xf32>
    %cst_69 = arith.constant dense<0.000000e+00> : vector<64xf32>
    %350 = vector.multi_reduction <add>, %349, %cst_69 [0] : vector<8x64xf32> to vector<64xf32>
    %351 = vector.shape_cast %350 : vector<64xf32> to vector<1x64xf32>
    %352 = vector.extract_strided_slice %294 {offsets = [16, 0], sizes = [8, 64], strides = [1, 1]} : vector<64x64xf32> to vector<8x64xf32>
    %353 = arith.mulf %352, %346 : vector<8x64xf32>
    %354 = arith.addf %353, %309 : vector<8x64xf32>
    %355 = vector.extract_strided_slice %268 {offsets = [8, 2], sizes = [8, 1], strides = [1, 1]} : vector<128x8xf32> to vector<8x1xf32>
    %356 = vector.broadcast %355 : vector<8x1xf32> to vector<8x64xf32>
    %357 = arith.mulf %354, %356 : vector<8x64xf32>
    %cst_70 = arith.constant dense<0.000000e+00> : vector<64xf32>
    %358 = vector.multi_reduction <add>, %357, %cst_70 [0] : vector<8x64xf32> to vector<64xf32>
    %359 = vector.shape_cast %358 : vector<64xf32> to vector<1x64xf32>
    %360 = vector.extract_strided_slice %294 {offsets = [24, 0], sizes = [8, 64], strides = [1, 1]} : vector<64x64xf32> to vector<8x64xf32>
    %361 = arith.mulf %360, %354 : vector<8x64xf32>
    %362 = arith.addf %361, %314 : vector<8x64xf32>
    %363 = vector.extract_strided_slice %268 {offsets = [8, 3], sizes = [8, 1], strides = [1, 1]} : vector<128x8xf32> to vector<8x1xf32>
    %364 = vector.broadcast %363 : vector<8x1xf32> to vector<8x64xf32>
    %365 = arith.mulf %362, %364 : vector<8x64xf32>
    %cst_71 = arith.constant dense<0.000000e+00> : vector<64xf32>
    %366 = vector.multi_reduction <add>, %365, %cst_71 [0] : vector<8x64xf32> to vector<64xf32>
    %367 = vector.shape_cast %366 : vector<64xf32> to vector<1x64xf32>
    %368 = vector.extract_strided_slice %294 {offsets = [32, 0], sizes = [8, 64], strides = [1, 1]} : vector<64x64xf32> to vector<8x64xf32>
    %369 = arith.mulf %368, %362 : vector<8x64xf32>
    %370 = arith.addf %369, %319 : vector<8x64xf32>
    %371 = vector.extract_strided_slice %268 {offsets = [8, 4], sizes = [8, 1], strides = [1, 1]} : vector<128x8xf32> to vector<8x1xf32>
    %372 = vector.broadcast %371 : vector<8x1xf32> to vector<8x64xf32>
    %373 = arith.mulf %370, %372 : vector<8x64xf32>
    %cst_72 = arith.constant dense<0.000000e+00> : vector<64xf32>
    %374 = vector.multi_reduction <add>, %373, %cst_72 [0] : vector<8x64xf32> to vector<64xf32>
    %375 = vector.shape_cast %374 : vector<64xf32> to vector<1x64xf32>
    %376 = vector.extract_strided_slice %294 {offsets = [40, 0], sizes = [8, 64], strides = [1, 1]} : vector<64x64xf32> to vector<8x64xf32>
    %377 = arith.mulf %376, %370 : vector<8x64xf32>
    %378 = arith.addf %377, %324 : vector<8x64xf32>
    %379 = vector.extract_strided_slice %268 {offsets = [8, 5], sizes = [8, 1], strides = [1, 1]} : vector<128x8xf32> to vector<8x1xf32>
    %380 = vector.broadcast %379 : vector<8x1xf32> to vector<8x64xf32>
    %381 = arith.mulf %378, %380 : vector<8x64xf32>
    %cst_73 = arith.constant dense<0.000000e+00> : vector<64xf32>
    %382 = vector.multi_reduction <add>, %381, %cst_73 [0] : vector<8x64xf32> to vector<64xf32>
    %383 = vector.shape_cast %382 : vector<64xf32> to vector<1x64xf32>
    %384 = vector.extract_strided_slice %294 {offsets = [48, 0], sizes = [8, 64], strides = [1, 1]} : vector<64x64xf32> to vector<8x64xf32>
    %385 = arith.mulf %384, %378 : vector<8x64xf32>
    %386 = arith.addf %385, %329 : vector<8x64xf32>
    %387 = vector.extract_strided_slice %268 {offsets = [8, 6], sizes = [8, 1], strides = [1, 1]} : vector<128x8xf32> to vector<8x1xf32>
    %388 = vector.broadcast %387 : vector<8x1xf32> to vector<8x64xf32>
    %389 = arith.mulf %386, %388 : vector<8x64xf32>
    %cst_74 = arith.constant dense<0.000000e+00> : vector<64xf32>
    %390 = vector.multi_reduction <add>, %389, %cst_74 [0] : vector<8x64xf32> to vector<64xf32>
    %391 = vector.shape_cast %390 : vector<64xf32> to vector<1x64xf32>
    %392 = vector.extract_strided_slice %294 {offsets = [56, 0], sizes = [8, 64], strides = [1, 1]} : vector<64x64xf32> to vector<8x64xf32>
    %393 = arith.mulf %392, %386 : vector<8x64xf32>
    %394 = arith.addf %393, %334 : vector<8x64xf32>
    %395 = vector.extract_strided_slice %268 {offsets = [8, 7], sizes = [8, 1], strides = [1, 1]} : vector<128x8xf32> to vector<8x1xf32>
    %396 = vector.broadcast %395 : vector<8x1xf32> to vector<8x64xf32>
    %397 = arith.mulf %394, %396 : vector<8x64xf32>
    %cst_75 = arith.constant dense<0.000000e+00> : vector<64xf32>
    %398 = vector.multi_reduction <add>, %397, %cst_75 [0] : vector<8x64xf32> to vector<64xf32>
    %399 = vector.shape_cast %398 : vector<64xf32> to vector<1x64xf32>
    %c0_76 = arith.constant 0 : index
    %c0_77 = arith.constant 0 : index
    %400 = vector.load %arg17[%c0_76, %c0_77] : memref<8x64xf32, #tpu.memory_space<vmem>>, vector<8x64xf32>
    tpu.vector_store %arg17[%c0_76, %c0_77], %394 {strides = array<i32>} : memref<8x64xf32, #tpu.memory_space<vmem>>, vector<8x64xf32>,
    %401 = tpu.concatenate %343, %351, %359, %367, %375, %383, %391, %399 in 0 : vector<1x64xf32>, vector<1x64xf32>, vector<1x64xf32>, vector<1x64xf32>, vector<1x64xf32>, vector<1x64xf32>, vector<1x64xf32>, vector<1x64xf32> -> vector<8x64xf32>
    %402 = arith.index_cast %261 : i32 to index
    %c0_78 = arith.constant 0 : index
    %403 = vector.load %arg16[%402, %c0_78] : memref<16x64xf32, #tpu.memory_space<vmem>>, vector<8x64xf32>
    tpu.vector_store %arg16[%402, %c0_78], %401 {strides = array<i32>} : memref<16x64xf32, #tpu.memory_space<vmem>>, vector<8x64xf32>,
    %c1_i32_79 = arith.constant 1 : i32
    %c0_80 = arith.constant 0 : index
    %c0_81 = arith.constant 0 : index
    %404 = vector.load %arg16[%c0_80, %c0_81] : memref<16x64xf32, #tpu.memory_space<vmem>>, vector<16x64xf32>
    %c0_82 = arith.constant 0 : index
    %c0_83 = arith.constant 0 : index
    %405 = vector.load %arg10[%c0_82, %c0_83] : memref<1x64xf32, #tpu.memory_space<vmem>>, vector<1x64xf32>
    %406 = vector.broadcast %405 : vector<1x64xf32> to vector<16x64xf32>
    %407 = arith.mulf %75, %406 : vector<16x64xf32>
    %408 = arith.addf %404, %407 : vector<16x64xf32>
    %409 = arith.negf %18 : vector<16x64xf32>
    %410 = math.exp %409 : vector<16x64xf32>
    %cst_84 = arith.constant 1.000000e+00 : f32
    %411 = vector.broadcast %cst_84 : f32 to vector<16x64xf32>
    %412 = arith.addf %411, %410 : vector<16x64xf32>
    %413 = arith.divf %411, %412 : vector<16x64xf32>
    %414 = arith.mulf %18, %413 : vector<16x64xf32>
    %415 = arith.mulf %408, %414 : vector<16x64xf32>
    %416 = arith.truncf %415 : vector<16x64xf32> to vector<16x64xbf16>
    %c0_85 = arith.constant 0 : index
    %c0_86 = arith.constant 0 : index
    %417 = vector.load %arg11[%c0_85, %c0_86] : memref<64x32xbf16, #tpu.memory_space<vmem>>, vector<64x32xbf16>
    %cst_87 = arith.constant dense<0.000000e+00> : vector<16x32xf32>
    %418 = tpu.matmul %416, %417, %cst_87 {dimension_numbers = #tpu.dot_dimension_numbers<[1], [0], [0], [1], [0, 0, 1, 1], [], []>} : vector<16x64xbf16>, vector<64x32xbf16>, vector<16x32xf32> -> vector<16x32xf32>
    %419 = arith.addf %0, %418 : vector<16x32xf32>
    %c0_88 = arith.constant 0 : index
    %c0_89 = arith.constant 0 : index
    %420 = vector.load %arg12[%c0_88, %c0_89] : memref<16x32xf32, #tpu.memory_space<vmem>>, vector<16x32xf32>
    tpu.vector_store %arg12[%c0_88, %c0_89], %419 {strides = array<i32>} : memref<16x32xf32, #tpu.memory_space<vmem>>, vector<16x32xf32>,
    return
  }
  func.func @transform_0(%arg0: i32) -> (i32, i32) {
    %c0_i32 = arith.constant 0 : i32
    %c0_i32_0 = arith.constant 0 : i32
    return %arg0, %c0_i32 : i32, i32
  }
  func.func @transform_1(%arg0: i32) -> (i32, i32) {
    %c0_i32 = arith.constant 0 : i32
    %c0_i32_0 = arith.constant 0 : i32
    %c0_i32_1 = arith.constant 0 : i32
    return %c0_i32, %c0_i32_0 : i32, i32
  }
  func.func @transform_2(%arg0: i32) -> (i32, i32) {
    %c0_i32 = arith.constant 0 : i32
    %c0_i32_0 = arith.constant 0 : i32
    %c0_i32_1 = arith.constant 0 : i32
    return %c0_i32, %c0_i32_0 : i32, i32
  }
  func.func @transform_3(%arg0: i32) -> (i32, i32) {
    %c0_i32 = arith.constant 0 : i32
    %c0_i32_0 = arith.constant 0 : i32
    %c0_i32_1 = arith.constant 0 : i32
    return %c0_i32, %c0_i32_0 : i32, i32
  }
  func.func @transform_4(%arg0: i32) -> (i32, i32) {
    %c0_i32 = arith.constant 0 : i32
    %c0_i32_0 = arith.constant 0 : i32
    %c0_i32_1 = arith.constant 0 : i32
    return %c0_i32, %c0_i32_0 : i32, i32
  }
  func.func @transform_5(%arg0: i32) -> (i32, i32) {
    %c0_i32 = arith.constant 0 : i32
    %c0_i32_0 = arith.constant 0 : i32
    %c0_i32_1 = arith.constant 0 : i32
    return %c0_i32, %c0_i32_0 : i32, i32
  }
  func.func @transform_6(%arg0: i32) -> (i32, i32) {
    %c0_i32 = arith.constant 0 : i32
    %c0_i32_0 = arith.constant 0 : i32
    %c0_i32_1 = arith.constant 0 : i32
    return %c0_i32, %c0_i32_0 : i32, i32
  }
  func.func @transform_7(%arg0: i32) -> (i32, i32) {
    %c0_i32 = arith.constant 0 : i32
    %c0_i32_0 = arith.constant 0 : i32
    %c0_i32_1 = arith.constant 0 : i32
    return %c0_i32, %c0_i32_0 : i32, i32
  }
  func.func @transform_8(%arg0: i32) -> (i32, i32) {
    %c0_i32 = arith.constant 0 : i32
    %c0_i32_0 = arith.constant 0 : i32
    %c0_i32_1 = arith.constant 0 : i32
    return %c0_i32, %c0_i32_0 : i32, i32
  }
  func.func @transform_9(%arg0: i32) -> (i32, i32) {
    %c0_i32 = arith.constant 0 : i32
    %c0_i32_0 = arith.constant 0 : i32
    %c0_i32_1 = arith.constant 0 : i32
    return %c0_i32, %c0_i32_0 : i32, i32
  }
  func.func @transform_10(%arg0: i32) -> (i32, i32) {
    %c0_i32 = arith.constant 0 : i32
    %c0_i32_0 = arith.constant 0 : i32
    %c0_i32_1 = arith.constant 0 : i32
    return %c0_i32, %c0_i32_0 : i32, i32
  }
  func.func @transform_11(%arg0: i32) -> (i32, i32) {
    %c0_i32 = arith.constant 0 : i32
    %c0_i32_0 = arith.constant 0 : i32
    return %arg0, %c0_i32 : i32, i32
  }
}

</mosaic_0001>

<llo_original>
// kernel: mamba_forward.5
$region0: #{mamba_forward.5}
  #allocation0 [shape = 'u32[]', space=smem, size = 0x4, offset = 0x4, fixed_abs, tag = 'smem constant byte address 0x4 - core index']
  #allocation1 [shape = 'u32[144,128]{1,0:T(1,128)}', space=vmem, size = 0x12000, scoped, tag = 'internal scratch']
  %s0 = inlined_call_operand.vmem [shape: f32[16,32], index: 0, kind: input, shape index: {}]
  %s1 = inlined_call_operand.vmem [shape: f32[1,32], index: 1, kind: input, shape index: {}]
  %s2 = inlined_call_operand.vmem [shape: bf16[32,32], index: 2, kind: input, shape index: {}]
  %s3 = inlined_call_operand.vmem [shape: f32[16,32], index: 3, kind: output, shape index: {}]
  %s4 = sld [smem:[#allocation0]]
  $region22: #{mamba_forward.5} parent=0
    _
  %s6 = ssub.s32 1, %s4
  %s7 = scalar_select 0, %s6, %s4
  // Predicated region
  $region2: #{mamba_forward.5} parent=0 // pred_check
    _
  $region3: #{mamba_forward.5} parent=0 // pred_check_branch
    %9 = sbr.rel (0) target = $region5
  $region4: #{mamba_forward.5} parent=0 // pred_region
    _
  $region5: #{mamba_forward.5} parent=0 // pred_fallthru
    _
  // Predicated region
  $region6: #{mamba_forward.5} parent=0 // pred_check
    _
  $region7: #{mamba_forward.5} parent=0 // pred_check_branch
    %11 = sbr.rel (0) target = $region9
  $region8: #{mamba_forward.5} parent=0 // pred_region
    _
  $region9: #{mamba_forward.5} parent=0 // pred_fallthru
    _
  // Predicated region
  $region10: #{mamba_forward.5} parent=0 // pred_check
    _
  $region11: #{mamba_forward.5} parent=0 // pred_check_branch
    %13 = sbr.rel (0) target = $region13
  $region12: #{mamba_forward.5} parent=0 // pred_region
    _
  $region13: #{mamba_forward.5} parent=0 // pred_fallthru
    _
  %v15 = vld [vmem:[%s0] sm:$0xff]
  %v16 = vld [vmem:[%s0 + $0x8] sm:$0xff]
  %v17 = vmul.f32 %v15, %v15
  %v18 = vmul.f32 %v16, %v16
  %vm19 = vcmask 261120
  %v20 = vsel %vm19, %v17, 0.0
  %21 = vadd.xlane.f32.xlu0 %v20
  %v22 = vpop.xlane.xlu0 %21
  %v23 = vsel %vm19, %v18, 0.0
  %24 = vadd.xlane.f32.xlu0 %v23
  %v25 = vpop.xlane.xlu0 %24
  %v26 = vrcp.pop 32.0
  %v27 = vmul.f32 %v22, %v26
  %v28 = vmul.f32 %v25, %v26
  %v29 = vadd.f32 %v27, 1e-05
  %v30 = vadd.f32 %v28, 1e-05
  %v31 = vrsqrt.pop %v29
  %v32 = vrsqrt.pop %v30
  %v33 = vmul.f32 %v15, %v31
  %v34 = vmul.f32 %v16, %v32
  %v35 = vld [vmem:[%s1] sm:$0x1]
  %v37 = vlaneseq
  %v38 = vshrl.u32 %v37, 7
  %v39 = vsub.s32 0, %v38
  %v40 = vrot.slane %v35, %v39
  %v42 = vmul.f32 %v33, %v40
  %v43 = vmul.f32 %v34, %v40
  %v44 = vpack.c.bf16 %v43, %v42
  %v45 = vld [vmem:[%s2] sm:$0xf]
  %v46 = vld [vmem:[%s2 + $0x4] sm:$0xf]
  %v47 = vld [vmem:[%s2 + $0x8] sm:$0xf]
  %v48 = vld [vmem:[%s2 + $0xc] sm:$0xf]
  %v53 = vunpack.c.l.b16 %v45
  %v54 = vunpack.c.l.b16 %v46
  %v55 = vunpack.c.l.b16 %v47
  %v56 = vunpack.c.l.b16 %v48
  %v57 = vpack.c.b16 %v54, %v53
  %v58 = vpack.c.b16 %v56, %v55
  %v62 = vsel %vm19, %v44, 0
  %64 = vmatprep.subr.bf16.mxu0 0
  %65 = vmatpush1.bf16.msra.mxu0 %v57
  %66 = vmatprep.subr.bf16.mxu0 0
  %67 = vmatpush1.bf16.msra.mxu0 %v58
  %68 = vmatprep.subr.bf16.mxu0 0
  %69 = vmatpush1.bf16.msra.mxu0 0
  %70 = vmatprep.subr.bf16.mxu0 0
  %71 = vmatpush1.bf16.msra.mxu0 0
  %72 = vmatprep.subr.bf16.mxu0 0
  %73 = vmatpush1.bf16.msra.mxu0 0
  %74 = vmatprep.subr.bf16.mxu0 0
  %75 = vmatpush1.bf16.msra.mxu0 0
  %76 = vmatprep.subr.bf16.mxu0 0
  %77 = vmatpush1.bf16.msra.mxu0 0
  %78 = vmatprep.subr.bf16.mxu0 0
  %79 = vmatpush1.bf16.msra.mxu0 0
  %80 = vmatprep.subr.bf16.mxu0 0
  %81 = vmatpush1.bf16.msra.mxu0 0
  %82 = vmatprep.subr.bf16.mxu0 0
  %83 = vmatpush1.bf16.msra.mxu0 0
  %84 = vmatprep.subr.bf16.mxu0 0
  %85 = vmatpush1.bf16.msra.mxu0 0
  %86 = vmatprep.subr.bf16.mxu0 0
  %87 = vmatpush1.bf16.msra.mxu0 0
  %88 = vmatprep.subr.bf16.mxu0 0
  %89 = vmatpush1.bf16.msra.mxu0 0
  %90 = vmatprep.subr.bf16.mxu0 0
  %91 = vmatpush1.bf16.msra.mxu0 0
  %92 = vmatprep.subr.bf16.mxu0 0
  %93 = vmatpush1.bf16.msra.mxu0 0
  %94 = vmatprep.subr.bf16.mxu0 0
  %95 = vmatpush1.bf16.msra.mxu0 0
  %96 = vmatprep.mubr.bf16.mxu0 0
  %97 = vmatmul.mubr.bf16.gmra.mrb[0].mxu0 %v62
  %v98 = vpop.f32.mrb[0].mxu0
  %v99 = vadd.f32 0.0, %v98
  %v100 = vpop.f32.mrb[0].mxu0
  %v101 = vpop.f32.mrb[0].mxu0
  %v102 = vadd.f32 0.0, %v101
  %v103 = vpop.f32.mrb[0].mxu0
  %104 = vdwg.mxu0
  %105 = vst.msk [vmem:[%s3] sm:$0xff] %vm19, %v99
  %106 = vst.msk [vmem:[%s3 + $0x8] sm:$0xff] %vm19, %v102
  // Predicated region
  $region14: #{mamba_forward.5} parent=0 // pred_check
    _
  $region15: #{mamba_forward.5} parent=0 // pred_check_branch
    %108 = sbr.rel (0) target = $region17
  $region16: #{mamba_forward.5} parent=0 // pred_region
    _
  $region17: #{mamba_forward.5} parent=0 // pred_fallthru
    _
  // Predicated region
  $region18: #{mamba_forward.5} parent=0 // pred_check
    _
  $region19: #{mamba_forward.5} parent=0 // pred_check_branch
    %110 = sbr.rel (0) target = $region21
  $region20: #{mamba_forward.5} parent=0 // pred_region
    _
  $region21: #{mamba_forward.5} parent=0 // pred_fallthru
    _

// kernel: mamba_forward.3
$region0: #{mamba_forward.3}
  #allocation0 [shape = 'u32[]', space=smem, size = 0x4, offset = 0x4, fixed_abs, tag = 'smem constant byte address 0x4 - core index']
  #allocation1 [shape = 'u32[144,128]{1,0:T(1,128)}', space=vmem, size = 0x12000, scoped, tag = 'internal scratch']
  #allocation2 [shape = 'f32[16,64]{1,0:T(8,128)}', space=vmem, size = 0x2000, scoped, tag = 'scratch operand']
  #allocation3 [shape = 'f32[16,64]{1,0:T(8,128)}', space=vmem, size = 0x2000, scoped, tag = 'scratch operand']
  #allocation4 [shape = 'f32[16,128]{1,0:T(8,128)}', space=vmem, size = 0x2000, scoped, tag = 'scratch operand']
  #allocation5 [shape = 'f32[16,64]{1,0:T(8,128)}', space=vmem, size = 0x2000, scoped, tag = 'scratch operand']
  #allocation6 [shape = 'f32[8,64]{1,0:T(8,128)}', space=vmem, size = 0x1000, scoped, tag = 'scratch operand']
  %s0 = inlined_call_operand.vmem [shape: f32[16,32], index: 0, kind: input, shape index: {}]
  %s1 = inlined_call_operand.vmem [shape: f32[1,32], index: 1, kind: input, shape index: {}]
  %s2 = inlined_call_operand.vmem [shape: bf16[32,128], index: 2, kind: input, shape index: {}]
  %s3 = inlined_call_operand.vmem [shape: f32[4,64], index: 3, kind: input, shape index: {}]
  %s4 = inlined_call_operand.vmem [shape: f32[1,64], index: 4, kind: input, shape index: {}]
  %s5 = inlined_call_operand.vmem [shape: bf16[64,18], index: 5, kind: input, shape index: {}]
  %s6 = inlined_call_operand.vmem [shape: bf16[2,64], index: 6, kind: input, shape index: {}]
  %s7 = inlined_call_operand.vmem [shape: f32[1,64], index: 7, kind: input, shape index: {}]
  %s8 = inlined_call_operand.vmem [shape: f32[8,64], index: 8, kind: input, shape index: {}]
  %s9 = inlined_call_operand.vmem [shape: f32[1,64], index: 9, kind: input, shape index: {}]
  %s10 = inlined_call_operand.vmem [shape: bf16[64,32], index: 10, kind: input, shape index: {}]
  %s11 = inlined_call_operand.vmem [shape: f32[16,32], index: 11, kind: output, shape index: {}]
  %s12 = sld [smem:[#allocation0]]
  $region54: #{mamba_forward.3} parent=0
    _
  %s14 = ssub.s32 1, %s12
  %s15 = scalar_select 0, %s14, %s12
  // Predicated region
  $region2: #{mamba_forward.3} parent=0 // pred_check
    _
  $region3: #{mamba_forward.3} parent=0 // pred_check_branch
    %17 = sbr.rel (0) target = $region5
  $region4: #{mamba_forward.3} parent=0 // pred_region
    _
  $region5: #{mamba_forward.3} parent=0 // pred_fallthru
    _
  // Predicated region
  $region6: #{mamba_forward.3} parent=0 // pred_check
    _
  $region7: #{mamba_forward.3} parent=0 // pred_check_branch
    %19 = sbr.rel (0) target = $region9
  $region8: #{mamba_forward.3} parent=0 // pred_region
    _
  $region9: #{mamba_forward.3} parent=0 // pred_fallthru
    _
  // Predicated region
  $region10: #{mamba_forward.3} parent=0 // pred_check
    _
  $region11: #{mamba_forward.3} parent=0 // pred_check_branch
    %21 = sbr.rel (0) target = $region13
  $region12: #{mamba_forward.3} parent=0 // pred_region
    _
  $region13: #{mamba_forward.3} parent=0 // pred_fallthru
    _
  // Predicated region
  $region14: #{mamba_forward.3} parent=0 // pred_check
    _
  $region15: #{mamba_forward.3} parent=0 // pred_check_branch
    %23 = sbr.rel (0) target = $region17
  $region16: #{mamba_forward.3} parent=0 // pred_region
    _
  $region17: #{mamba_forward.3} parent=0 // pred_fallthru
    _
  // Predicated region
  $region18: #{mamba_forward.3} parent=0 // pred_check
    _
  $region19: #{mamba_forward.3} parent=0 // pred_check_branch
    %25 = sbr.rel (0) target = $region21
  $region20: #{mamba_forward.3} parent=0 // pred_region
    _
  $region21: #{mamba_forward.3} parent=0 // pred_fallthru
    _
  // Predicated region
  $region22: #{mamba_forward.3} parent=0 // pred_check
    _
  $region23: #{mamba_forward.3} parent=0 // pred_check_branch
    %27 = sbr.rel (0) target = $region25
  $region24: #{mamba_forward.3} parent=0 // pred_region
    _
  $region25: #{mamba_forward.3} parent=0 // pred_fallthru
    _
  // Predicated region
  $region26: #{mamba_forward.3} parent=0 // pred_check
    _
  $region27: #{mamba_forward.3} parent=0 // pred_check_branch
    %29 = sbr.rel (0) target = $region29
  $region28: #{mamba_forward.3} parent=0 // pred_region
    _
  $region29: #{mamba_forward.3} parent=0 // pred_fallthru
    _
  // Predicated region
  $region30: #{mamba_forward.3} parent=0 // pred_check
    _
  $region31: #{mamba_forward.3} parent=0 // pred_check_branch
    %31 = sbr.rel (0) target = $region33
  $region32: #{mamba_forward.3} parent=0 // pred_region
    _
  $region33: #{mamba_forward.3} parent=0 // pred_fallthru
    _
  // Predicated region
  $region34: #{mamba_forward.3} parent=0 // pred_check
    _
  $region35: #{mamba_forward.3} parent=0 // pred_check_branch
    %33 = sbr.rel (0) target = $region37
  $region36: #{mamba_forward.3} parent=0 // pred_region
    _
  $region37: #{mamba_forward.3} parent=0 // pred_fallthru
    _
  // Predicated region
  $region38: #{mamba_forward.3} parent=0 // pred_check
    _
  $region39: #{mamba_forward.3} parent=0 // pred_check_branch
    %35 = sbr.rel (0) target = $region41
  $region40: #{mamba_forward.3} parent=0 // pred_region
    _
  $region41: #{mamba_forward.3} parent=0 // pred_fallthru
    _
  // Predicated region
  $region42: #{mamba_forward.3} parent=0 // pred_check
    _
  $region43: #{mamba_forward.3} parent=0 // pred_check_branch
    %37 = sbr.rel (0) target = $region45
  $region44: #{mamba_forward.3} parent=0 // pred_region
    _
  $region45: #{mamba_forward.3} parent=0 // pred_fallthru
    _
  %v39 = vld [vmem:[%s0] sm:$0xff]
  %v40 = vld [vmem:[%s0 + $0x8] sm:$0xff]
  %v41 = vmul.f32 %v39, %v39
  %v42 = vmul.f32 %v40, %v40
  %vm43 = vcmask 261120
  %v44 = vsel %vm43, %v41, 0.0
  %45 = vadd.xlane.f32.xlu0 %v44
  %v46 = vpop.xlane.xlu0 %45
  %v47 = vsel %vm43, %v42, 0.0
  %48 = vadd.xlane.f32.xlu0 %v47
  %v49 = vpop.xlane.xlu0 %48
  %v50 = vrcp.pop 32.0
  %v51 = vmul.f32 %v46, %v50
  %v52 = vmul.f32 %v49, %v50
  %v53 = vadd.f32 %v51, 1e-05
  %v54 = vadd.f32 %v52, 1e-05
  %v55 = vrsqrt.pop %v53
  %v56 = vrsqrt.pop %v54
  %v57 = vmul.f32 %v39, %v55
  %v58 = vmul.f32 %v40, %v56
  %v59 = vld [vmem:[%s1] sm:$0x1]
  %v61 = vlaneseq
  %v62 = vshrl.u32 %v61, 7
  %v63 = vsub.s32 0, %v62
  %v64 = vrot.slane %v59, %v63
  %v66 = vmul.f32 %v57, %v64
  %v67 = vmul.f32 %v58, %v64
  %v68 = vpack.c.bf16 %v67, %v66
  %v69 = vld [vmem:[%s2] sm:$0xf]
  %v70 = vld [vmem:[%s2 + $0x4] sm:$0xf]
  %v71 = vld [vmem:[%s2 + $0x8] sm:$0xf]
  %v72 = vld [vmem:[%s2 + $0xc] sm:$0xf]
  %v77 = vunpack.c.l.b16 %v69
  %v78 = vunpack.c.l.b16 %v70
  %v79 = vunpack.c.l.b16 %v71
  %v80 = vunpack.c.l.b16 %v72
  %v81 = vpack.c.b16 %v78, %v77
  %v82 = vpack.c.b16 %v80, %v79
  %v86 = vsel %vm43, %v68, 0
  %88 = vmatprep.subr.bf16.mxu0 0
  %89 = vmatpush1.bf16.msra.mxu0 %v81
  %90 = vmatprep.subr.bf16.mxu0 0
  %91 = vmatpush1.bf16.msra.mxu0 %v82
  %92 = vmatprep.subr.bf16.mxu0 0
  %93 = vmatpush1.bf16.msra.mxu0 0
  %94 = vmatprep.subr.bf16.mxu0 0
  %95 = vmatpush1.bf16.msra.mxu0 0
  %96 = vmatprep.subr.bf16.mxu0 0
  %97 = vmatpush1.bf16.msra.mxu0 0
  %98 = vmatprep.subr.bf16.mxu0 0
  %99 = vmatpush1.bf16.msra.mxu0 0
  %100 = vmatprep.subr.bf16.mxu0 0
  %101 = vmatpush1.bf16.msra.mxu0 0
  %102 = vmatprep.subr.bf16.mxu0 0
  %103 = vmatpush1.bf16.msra.mxu0 0
  %104 = vmatprep.subr.bf16.mxu0 0
  %105 = vmatpush1.bf16.msra.mxu0 0
  %106 = vmatprep.subr.bf16.mxu0 0
  %107 = vmatpush1.bf16.msra.mxu0 0
  %108 = vmatprep.subr.bf16.mxu0 0
  %109 = vmatpush1.bf16.msra.mxu0 0
  %110 = vmatprep.subr.bf16.mxu0 0
  %111 = vmatpush1.bf16.msra.mxu0 0
  %112 = vmatprep.subr.bf16.mxu0 0
  %113 = vmatpush1.bf16.msra.mxu0 0
  %114 = vmatprep.subr.bf16.mxu0 0
  %115 = vmatpush1.bf16.msra.mxu0 0
  %116 = vmatprep.subr.bf16.mxu0 0
  %117 = vmatpush1.bf16.msra.mxu0 0
  %118 = vmatprep.subr.bf16.mxu0 0
  %119 = vmatpush1.bf16.msra.mxu0 0
  %120 = vmatprep.mubr.bf16.mxu0 0
  %121 = vmatmul.mubr.bf16.gmra.mrb[0].mxu0 %v86
  %v122 = vpop.f32.mrb[0].mxu0
  %v123 = vadd.f32 0.0, %v122
  %v124 = vpop.f32.mrb[0].mxu0
  %v125 = vpop.f32.mrb[0].mxu0
  %v126 = vadd.f32 0.0, %v125
  %v127 = vpop.f32.mrb[0].mxu0
  %128 = vdwg.mxu0
  %v129 = vld [vmem:[%s3] sm:$0xf]
  %v130 = vld [vmem:[%s4] sm:$0x1]
  %v132 = vrot.slane %v123, 5
  %vm134 = vcmask 1042432
  %v135 = vsel %vm134, 0.0, %v132
  %v136 = vlaneseq
  %v137 = vshrl.u32 %v136, 7
  %v138 = vsub.s32 0, %v137
  %v139 = vrot.slane %v129, %v138
  %v140 = vmul.f32 %v135, %v139
  %v142 = vlaneseq
  %v143 = vshrl.u32 %v142, 7
  %v144 = vsub.s32 0, %v143
  %v145 = vrot.slane %v130, %v144
  %v147 = vadd.f32 %v145, %v140
  %v148 = vlaneseq
  %v149 = vshrl.u32 %v148, 7
  %v150 = vsub.s32 1, %v149
  %v151 = vrot.slane %v129, %v150
  %v152 = vmul.f32 %v135, %v151
  %v153 = vmul.f32 %v132, %v151
  %vm156 = vcmask 1046528
  %v157 = vrot.slane %v152, 1
  %v158 = vrot.slane %v153, 1
  %v159 = vsel %vm156, %v157, %v158
  %v161 = vadd.f32 %v147, %v159
  %v162 = vlaneseq
  %v163 = vshrl.u32 %v162, 7
  %v164 = vsub.s32 2, %v163
  %v165 = vrot.slane %v129, %v164
  %v166 = vmul.f32 %v135, %v165
  %v167 = vmul.f32 %v132, %v165
  %vm170 = vcmask 1045504
  %v171 = vrot.slane %v166, 2
  %v172 = vrot.slane %v167, 2
  %v173 = vsel %vm170, %v171, %v172
  %v175 = vadd.f32 %v161, %v173
  %v176 = vlaneseq
  %v177 = vshrl.u32 %v176, 7
  %v178 = vsub.s32 3, %v177
  %v179 = vrot.slane %v129, %v178
  %v180 = vmul.f32 %v135, %v179
  %v181 = vmul.f32 %v132, %v179
  %vm184 = vcmask 1044480
  %v185 = vrot.slane %v180, 3
  %v186 = vrot.slane %v181, 3
  %v187 = vsel %vm184, %v185, %v186
  %v189 = vadd.f32 %v175, %v187
  %v191 = vrot.slane %v126, 5
  %v193 = vsel %vm134, 0.0, %v191
  %v194 = vmul.f32 %v193, %v139
  %v195 = vadd.f32 %v145, %v194
  %v196 = vmul.f32 %v193, %v151
  %v197 = vmul.f32 %v191, %v151
  %v200 = vrot.slane %v196, 1
  %v201 = vrot.slane %v197, 1
  %v202 = vsel %vm156, %v200, %v201
  %v204 = vadd.f32 %v195, %v202
  %v205 = vmul.f32 %v193, %v165
  %v206 = vmul.f32 %v191, %v165
  %v209 = vrot.slane %v205, 2
  %v210 = vrot.slane %v206, 2
  %v211 = vsel %vm170, %v209, %v210
  %v213 = vadd.f32 %v204, %v211
  %v214 = vmul.f32 %v193, %v179
  %v215 = vmul.f32 %v191, %v179
  %v218 = vrot.slane %v214, 3
  %v219 = vrot.slane %v215, 3
  %v220 = vsel %vm184, %v218, %v219
  %v222 = vadd.f32 %v213, %v220
  %v223 = vxor.u32 %v189, 2147483648
  %v224 = vxor.u32 %v222, 2147483648
  %v225 = vmul.f32 %v223, 1.442695
  %v226 = vpow.pop %v225
  %v227 = vmul.f32 %v224, 1.442695
  %v228 = vpow.pop %v227
  %v229 = vadd.f32 %v226, 1.0
  %v230 = vadd.f32 %v228, 1.0
  %v231 = vrcp.pop %v229
  %v232 = vmul.f32 1.0, %v231
  %v233 = vrcp.pop %v230
  %v234 = vmul.f32 1.0, %v233
  %v235 = vmul.f32 %v189, %v232
  %v236 = vmul.f32 %v222, %v234
  %v237 = vpack.c.bf16 %v236, %v235
  %v238 = vld [vmem:[%s5] sm:$0xf]
  %v239 = vld [vmem:[%s5 + $0x4] sm:$0xf]
  %v240 = vld [vmem:[%s5 + $0x8] sm:$0xf]
  %v241 = vld [vmem:[%s5 + $0xc] sm:$0xf]
  %v242 = vld [vmem:[%s5 + $0x10] sm:$0xf]
  %v243 = vld [vmem:[%s5 + $0x14] sm:$0xf]
  %v244 = vld [vmem:[%s5 + $0x18] sm:$0xf]
  %v245 = vld [vmem:[%s5 + $0x1c] sm:$0xf]
  %v254 = vunpack.c.l.b16 %v238
  %v255 = vunpack.c.l.b16 %v239
  %v256 = vunpack.c.l.b16 %v240
  %v257 = vunpack.c.l.b16 %v241
  %v258 = vunpack.c.l.b16 %v242
  %v259 = vunpack.c.l.b16 %v243
  %v260 = vunpack.c.l.b16 %v244
  %v261 = vunpack.c.l.b16 %v245
  %v262 = vpack.c.b16 %v255, %v254
  %v263 = vpack.c.b16 %v257, %v256
  %v264 = vpack.c.b16 %v259, %v258
  %v265 = vpack.c.b16 %v261, %v260
  %vm270 = vcmask 523264
  %v272 = vsel %vm270, %v237, 0
  %274 = vmatprep.subr.bf16.mxu0 0
  %275 = vmatpush1.bf16.msra.mxu0 %v262
  %276 = vmatprep.subr.bf16.mxu0 0
  %277 = vmatpush1.bf16.msra.mxu0 %v263
  %278 = vmatprep.subr.bf16.mxu0 0
  %279 = vmatpush1.bf16.msra.mxu0 %v264
  %280 = vmatprep.subr.bf16.mxu0 0
  %281 = vmatpush1.bf16.msra.mxu0 %v265
  %282 = vmatprep.subr.bf16.mxu0 0
  %283 = vmatpush1.bf16.msra.mxu0 0
  %284 = vmatprep.subr.bf16.mxu0 0
  %285 = vmatpush1.bf16.msra.mxu0 0
  %286 = vmatprep.subr.bf16.mxu0 0
  %287 = vmatpush1.bf16.msra.mxu0 0
  %288 = vmatprep.subr.bf16.mxu0 0
  %289 = vmatpush1.bf16.msra.mxu0 0
  %290 = vmatprep.subr.bf16.mxu0 0
  %291 = vmatpush1.bf16.msra.mxu0 0
  %292 = vmatprep.subr.bf16.mxu0 0
  %293 = vmatpush1.bf16.msra.mxu0 0
  %294 = vmatprep.subr.bf16.mxu0 0
  %295 = vmatpush1.bf16.msra.mxu0 0
  %296 = vmatprep.subr.bf16.mxu0 0
  %297 = vmatpush1.bf16.msra.mxu0 0
  %298 = vmatprep.subr.bf16.mxu0 0
  %299 = vmatpush1.bf16.msra.mxu0 0
  %300 = vmatprep.subr.bf16.mxu0 0
  %301 = vmatpush1.bf16.msra.mxu0 0
  %302 = vmatprep.subr.bf16.mxu0 0
  %303 = vmatpush1.bf16.msra.mxu0 0
  %304 = vmatprep.subr.bf16.mxu0 0
  %305 = vmatpush1.bf16.msra.mxu0 0
  %306 = vmatprep.mubr.bf16.mxu0 0
  %307 = vmatmul.mubr.bf16.gmra.mrb[0].mxu0 %v272
  %v308 = vpop.f32.mrb[0].mxu0
  %v309 = vadd.f32 0.0, %v308
  %v310 = vpop.f32.mrb[0].mxu0
  %v311 = vpop.f32.mrb[0].mxu0
  %v312 = vadd.f32 0.0, %v311
  %v313 = vpop.f32.mrb[0].mxu0
  %314 = vdwg.mxu0
  %v315 = vpack.c.bf16 %v312, %v309
  %v316 = vld [vmem:[%s6] sm:$0x1]
  %v317 = vld [vmem:[%s7] sm:$0x1]
  %v319 = vlaneseq
  %v320 = vshrl.u32 %v319, 7
  %v321 = vsub.s32 0, %v320
  %v322 = vrot.slane %v317, %v321
  %vm324 = vcmask 15360
  %v326 = vsel %vm324, %v315, 0
  %vm328 = vcmask 1040384
  %v330 = vsel %vm328, %v316, 0
  %332 = vmatprep.subr.bf16.mxu0 0
  %333 = vmatpush1.bf16.msra.mxu0 %v330
  %334 = vmatprep.subr.bf16.mxu0 0
  %335 = vmatpush1.bf16.msra.mxu0 0
  %336 = vmatprep.subr.bf16.mxu0 0
  %337 = vmatpush1.bf16.msra.mxu0 0
  %338 = vmatprep.subr.bf16.mxu0 0
  %339 = vmatpush1.bf16.msra.mxu0 0
  %340 = vmatprep.subr.bf16.mxu0 0
  %341 = vmatpush1.bf16.msra.mxu0 0
  %342 = vmatprep.subr.bf16.mxu0 0
  %343 = vmatpush1.bf16.msra.mxu0 0
  %344 = vmatprep.subr.bf16.mxu0 0
  %345 = vmatpush1.bf16.msra.mxu0 0
  %346 = vmatprep.subr.bf16.mxu0 0
  %347 = vmatpush1.bf16.msra.mxu0 0
  %348 = vmatprep.subr.bf16.mxu0 0
  %349 = vmatpush1.bf16.msra.mxu0 0
  %350 = vmatprep.subr.bf16.mxu0 0
  %351 = vmatpush1.bf16.msra.mxu0 0
  %352 = vmatprep.subr.bf16.mxu0 0
  %353 = vmatpush1.bf16.msra.mxu0 0
  %354 = vmatprep.subr.bf16.mxu0 0
  %355 = vmatpush1.bf16.msra.mxu0 0
  %356 = vmatprep.subr.bf16.mxu0 0
  %357 = vmatpush1.bf16.msra.mxu0 0
  %358 = vmatprep.subr.bf16.mxu0 0
  %359 = vmatpush1.bf16.msra.mxu0 0
  %360 = vmatprep.subr.bf16.mxu0 0
  %361 = vmatpush1.bf16.msra.mxu0 0
  %362 = vmatprep.subr.bf16.mxu0 0
  %363 = vmatpush1.bf16.msra.mxu0 0
  %364 = vmatprep.mubr.bf16.mxu0 0
  %365 = vmatmul.mubr.bf16.gmra.mrb[0].mxu0 %v326
  %v366 = vpop.f32.mrb[0].mxu0
  %v367 = vadd.f32 %v322, %v366
  %v368 = vpop.f32.mrb[0].mxu0
  %v369 = vpop.f32.mrb[0].mxu0
  %v370 = vadd.f32 %v322, %v369
  %v371 = vpop.f32.mrb[0].mxu0
  %372 = vdwg.mxu0
  %v373 = vmax.f32 %v367, 0.0
  %v374 = vmax.f32 %v370, 0.0
  %vm375 = vcmp.ne.f32.partialorder %v367, %v367
  %vm376 = vcmp.ne.f32.partialorder %v370, %v370
  %v377 = vadd.f32 %v367, 0.0
  %v378 = vadd.f32 %v370, 0.0
  %v379 = vand.u32 2147483647, %v367
  %v380 = vand.u32 2147483647, %v370
  %v381 = vsub.f32 0.0, %v379
  %v382 = vsub.f32 0.0, %v380
  %v383 = vmul.f32 %v381, 1.442695
  %v384 = vpow.pop %v383
  %v385 = vmul.f32 %v382, 1.442695
  %v386 = vpow.pop %v385
  %v387 = vadd.f32 %v384, 1.0
  %v388 = vlog2.pop %v387
  %v389 = vmul.f32 %v388, 0.6931472
  %v390 = vmul.f32 -0.5, %v384
  %v391 = vadd.f32 %v390, 1.0
  %v392 = vmul.f32 %v391, %v384
  %v393 = vand.u32 2147483647, %v384
  %vm394 = vcmp.lt.f32.partialorder %v393, 0.0004427343
  %v395 = vsel %vm394, %v392, %v389
  %v396 = vadd.f32 %v386, 1.0
  %v397 = vlog2.pop %v396
  %v398 = vmul.f32 %v397, 0.6931472
  %v399 = vmul.f32 -0.5, %v386
  %v400 = vadd.f32 %v399, 1.0
  %v401 = vmul.f32 %v400, %v386
  %v402 = vand.u32 2147483647, %v386
  %vm403 = vcmp.lt.f32.partialorder %v402, 0.0004427343
  %v404 = vsel %vm403, %v401, %v398
  %v405 = vadd.f32 %v373, %v395
  %v406 = vadd.f32 %v374, %v404
  %v407 = vsel %vm375, %v377, %v405
  %v408 = vsel %vm376, %v378, %v406
  %409 = vst.msk [vmem:[#allocation2] sm:$0xff] %vm270, %v407
  %410 = vst.msk [vmem:[#allocation2 + $0x8] sm:$0xff] %vm270, %v408
  %v411 = vmul.f32 %v407, %v235
  %v412 = vmul.f32 %v408, %v236
  %413 = vst.msk [vmem:[#allocation3] sm:$0xff] %vm270, %v411
  %414 = vst.msk [vmem:[#allocation3 + $0x8] sm:$0xff] %vm270, %v412
  %417 = vrot.lane.b32.xlu0 %v309, 126
  %v418 = vpop.permute.xlu0 %417
  %419 = vrot.lane.b32.xlu0 %v312, 126
  %v420 = vpop.permute.xlu0 %419
  %vm423 = vcmask 130048
  %424 = vst.msk [vmem:[#allocation4] sm:$0xff] %vm423, %v418
  %425 = vst.msk [vmem:[#allocation4 + $0x8] sm:$0xff] %vm423, %v420
  %v426 = vld [vmem:[%s8] sm:$0xff]
  %427 = vst.msk [vmem:[#allocation6] sm:$0xff] %vm270, 0.0
  %v428 = vld [vmem:[#allocation2] sm:$0xff]
  %v429 = vld [vmem:[#allocation3] sm:$0xff]
  %v430 = vld [vmem:[#allocation4] sm:$0xff]
  %431 = vxpose.xlu0.b32.start [1/16] %v430, 128
  %432 = vxpose.xlu0.b32.cont [2/16] 0.0, 128
  %433 = vxpose.xlu0.b32.cont [3/16] 0.0, 128
  %434 = vxpose.xlu0.b32.cont [4/16] 0.0, 128
  %435 = vxpose.xlu0.b32.cont [5/16] 0.0, 128
  %436 = vxpose.xlu0.b32.cont [6/16] 0.0, 128
  %437 = vxpose.xlu0.b32.cont [7/16] 0.0, 128
  %438 = vxpose.xlu0.b32.cont [8/16] 0.0, 128
  %439 = vxpose.xlu0.b32.cont [9/16] 0.0, 128
  %440 = vxpose.xlu0.b32.cont [10/16] 0.0, 128
  %441 = vxpose.xlu0.b32.cont [11/16] 0.0, 128
  %442 = vxpose.xlu0.b32.cont [12/16] 0.0, 128
  %443 = vxpose.xlu0.b32.cont [13/16] 0.0, 128
  %444 = vxpose.xlu0.b32.cont [14/16] 0.0, 128
  %445 = vxpose.xlu0.b32.cont [15/16] 0.0, 128
  %446 = vxpose.xlu0.b32.end [16/16] 0.0, 128
  %v447 = vpop.trf.xlu0
  %v448 = vpop.trf.xlu0
  %v449 = vpop.trf.xlu0
  %v450 = vpop.trf.xlu0
  %v451 = vpop.trf.xlu0
  %v452 = vpop.trf.xlu0
  %v453 = vpop.trf.xlu0
  %v454 = vpop.trf.xlu0
  %v455 = vpop.trf.xlu0
  %v456 = vpop.trf.xlu0
  %v457 = vpop.trf.xlu0
  %v458 = vpop.trf.xlu0
  %v459 = vpop.trf.xlu0
  %v460 = vpop.trf.xlu0
  %v461 = vpop.trf.xlu0
  %v462 = vpop.trf.xlu0
  %v463 = vlaneseq
  %v464 = vshrl.u32 %v463, 7
  %v465 = vsub.s32 0, %v464
  %v466 = vrot.slane %v428, %v465
  %v467 = vmul.f32 %v466, %v426
  %v468 = vlaneseq
  %v469 = vshrl.u32 %v468, 7
  %v470 = vsub.s32 1, %v469
  %v471 = vrot.slane %v428, %v470
  %v472 = vmul.f32 %v471, %v426
  %v473 = vlaneseq
  %v474 = vshrl.u32 %v473, 7
  %v475 = vsub.s32 2, %v474
  %v476 = vrot.slane %v428, %v475
  %v477 = vmul.f32 %v476, %v426
  %v478 = vlaneseq
  %v479 = vshrl.u32 %v478, 7
  %v480 = vsub.s32 3, %v479
  %v481 = vrot.slane %v428, %v480
  %v482 = vmul.f32 %v481, %v426
  %v483 = vlaneseq
  %v484 = vshrl.u32 %v483, 7
  %v485 = vsub.s32 4, %v484
  %v486 = vrot.slane %v428, %v485
  %v487 = vmul.f32 %v486, %v426
  %v488 = vlaneseq
  %v489 = vshrl.u32 %v488, 7
  %v490 = vsub.s32 5, %v489
  %v491 = vrot.slane %v428, %v490
  %v492 = vmul.f32 %v491, %v426
  %v493 = vlaneseq
  %v494 = vshrl.u32 %v493, 7
  %v495 = vsub.s32 6, %v494
  %v496 = vrot.slane %v428, %v495
  %v497 = vmul.f32 %v496, %v426
  %v498 = vlaneseq
  %v499 = vshrl.u32 %v498, 7
  %v500 = vsub.s32 7, %v499
  %v501 = vrot.slane %v428, %v500
  %v502 = vmul.f32 %v501, %v426
  %v503 = vmul.f32 %v467, 1.442695
  %v504 = vpow.pop %v503
  %v505 = vmul.f32 %v472, 1.442695
  %v506 = vpow.pop %v505
  %v507 = vmul.f32 %v477, 1.442695
  %v508 = vpow.pop %v507
  %v509 = vmul.f32 %v482, 1.442695
  %v510 = vpow.pop %v509
  %v511 = vmul.f32 %v487, 1.442695
  %v512 = vpow.pop %v511
  %v513 = vmul.f32 %v492, 1.442695
  %v514 = vpow.pop %v513
  %v515 = vmul.f32 %v497, 1.442695
  %v516 = vpow.pop %v515
  %v517 = vmul.f32 %v502, 1.442695
  %v518 = vpow.pop %v517
  %v519 = vlaneseq
  %v520 = vshrl.u32 %v519, 7
  %v521 = vsub.s32 0, %v520
  %v522 = vrot.slane %v429, %v521
  %524 = vset.pattern.permute.xlu0 0
  %525 = vperm.xlu0 %524, %v447
  %v526 = vpop.permute.xlu0 %525
  %v528 = vmul.f32 %v522, %v526
  %v529 = vlaneseq
  %v530 = vshrl.u32 %v529, 7
  %v531 = vsub.s32 1, %v530
  %v532 = vrot.slane %v429, %v531
  %533 = vset.pattern.permute.xlu0 1
  %534 = vperm.xlu0 %533, %v447
  %v535 = vpop.permute.xlu0 %534
  %v537 = vmul.f32 %v532, %v535
  %v538 = vlaneseq
  %v539 = vshrl.u32 %v538, 7
  %v540 = vsub.s32 2, %v539
  %v541 = vrot.slane %v429, %v540
  %542 = vset.pattern.permute.xlu0 2
  %543 = vperm.xlu0 %542, %v447
  %v544 = vpop.permute.xlu0 %543
  %v546 = vmul.f32 %v541, %v544
  %v547 = vlaneseq
  %v548 = vshrl.u32 %v547, 7
  %v549 = vsub.s32 3, %v548
  %v550 = vrot.slane %v429, %v549
  %551 = vset.pattern.permute.xlu0 3
  %552 = vperm.xlu0 %551, %v447
  %v553 = vpop.permute.xlu0 %552
  %v555 = vmul.f32 %v550, %v553
  %v556 = vlaneseq
  %v557 = vshrl.u32 %v556, 7
  %v558 = vsub.s32 4, %v557
  %v559 = vrot.slane %v429, %v558
  %560 = vset.pattern.permute.xlu0 4
  %561 = vperm.xlu0 %560, %v447
  %v562 = vpop.permute.xlu0 %561
  %v564 = vmul.f32 %v559, %v562
  %v565 = vlaneseq
  %v566 = vshrl.u32 %v565, 7
  %v567 = vsub.s32 5, %v566
  %v568 = vrot.slane %v429, %v567
  %569 = vset.pattern.permute.xlu0 5
  %570 = vperm.xlu0 %569, %v447
  %v571 = vpop.permute.xlu0 %570
  %v573 = vmul.f32 %v568, %v571
  %v574 = vlaneseq
  %v575 = vshrl.u32 %v574, 7
  %v576 = vsub.s32 6, %v575
  %v577 = vrot.slane %v429, %v576
  %578 = vset.pattern.permute.xlu0 6
  %579 = vperm.xlu0 %578, %v447
  %v580 = vpop.permute.xlu0 %579
  %v582 = vmul.f32 %v577, %v580
  %v583 = vlaneseq
  %v584 = vshrl.u32 %v583, 7
  %v585 = vsub.s32 7, %v584
  %v586 = vrot.slane %v429, %v585
  %587 = vset.pattern.permute.xlu0 7
  %588 = vperm.xlu0 %587, %v447
  %v589 = vpop.permute.xlu0 %588
  %v591 = vmul.f32 %v586, %v589
  %v592 = vld [vmem:[#allocation6] sm:$0xff]
  %v593 = vmul.f32 %v504, %v592
  %v594 = vadd.f32 %v593, %v528
  %596 = vset.pattern.permute.xlu0 0
  %597 = vperm.xlu0 %596, %v448
  %v598 = vpop.permute.xlu0 %597
  %v600 = vmul.f32 %v594, %v598
  %v601 = vsel %vm270, %v600, 0.0
  %v602 = vrot.slane %v601, 4
  %v603 = vadd.f32 %v601, %v602
  %v604 = vrot.slane %v603, 2
  %v605 = vadd.f32 %v603, %v604
  %v606 = vrot.slane %v605, 1
  %v607 = vadd.f32 %v605, %v606
  %v608 = vmul.f32 %v506, %v594
  %v609 = vadd.f32 %v608, %v537
  %610 = vset.pattern.permute.xlu0 1
  %611 = vperm.xlu0 %610, %v448
  %v612 = vpop.permute.xlu0 %611
  %v614 = vmul.f32 %v609, %v612
  %v615 = vsel %vm270, %v614, 0.0
  %v616 = vrot.slane %v615, 4
  %v617 = vadd.f32 %v615, %v616
  %v618 = vrot.slane %v617, 2
  %v619 = vadd.f32 %v617, %v618
  %v620 = vrot.slane %v619, 1
  %v621 = vadd.f32 %v619, %v620
  %v622 = vmul.f32 %v508, %v609
  %v623 = vadd.f32 %v622, %v546
  %624 = vset.pattern.permute.xlu0 2
  %625 = vperm.xlu0 %624, %v448
  %v626 = vpop.permute.xlu0 %625
  %v628 = vmul.f32 %v623, %v626
  %v629 = vsel %vm270, %v628, 0.0
  %v630 = vrot.slane %v629, 4
  %v631 = vadd.f32 %v629, %v630
  %v632 = vrot.slane %v631, 2
  %v633 = vadd.f32 %v631, %v632
  %v634 = vrot.slane %v633, 1
  %v635 = vadd.f32 %v633, %v634
  %v636 = vmul.f32 %v510, %v623
  %v637 = vadd.f32 %v636, %v555
  %638 = vset.pattern.permute.xlu0 3
  %639 = vperm.xlu0 %638, %v448
  %v640 = vpop.permute.xlu0 %639
  %v642 = vmul.f32 %v637, %v640
  %v643 = vsel %vm270, %v642, 0.0
  %v644 = vrot.slane %v643, 4
  %v645 = vadd.f32 %v643, %v644
  %v646 = vrot.slane %v645, 2
  %v647 = vadd.f32 %v645, %v646
  %v648 = vrot.slane %v647, 1
  %v649 = vadd.f32 %v647, %v648
  %v650 = vmul.f32 %v512, %v637
  %v651 = vadd.f32 %v650, %v564
  %652 = vset.pattern.permute.xlu0 4
  %653 = vperm.xlu0 %652, %v448
  %v654 = vpop.permute.xlu0 %653
  %v656 = vmul.f32 %v651, %v654
  %v657 = vsel %vm270, %v656, 0.0
  %v658 = vrot.slane %v657, 4
  %v659 = vadd.f32 %v657, %v658
  %v660 = vrot.slane %v659, 2
  %v661 = vadd.f32 %v659, %v660
  %v662 = vrot.slane %v661, 1
  %v663 = vadd.f32 %v661, %v662
  %v664 = vmul.f32 %v514, %v651
  %v665 = vadd.f32 %v664, %v573
  %666 = vset.pattern.permute.xlu0 5
  %667 = vperm.xlu0 %666, %v448
  %v668 = vpop.permute.xlu0 %667
  %v670 = vmul.f32 %v665, %v668
  %v671 = vsel %vm270, %v670, 0.0
  %v672 = vrot.slane %v671, 4
  %v673 = vadd.f32 %v671, %v672
  %v674 = vrot.slane %v673, 2
  %v675 = vadd.f32 %v673, %v674
  %v676 = vrot.slane %v675, 1
  %v677 = vadd.f32 %v675, %v676
  %v678 = vmul.f32 %v516, %v665
  %v679 = vadd.f32 %v678, %v582
  %680 = vset.pattern.permute.xlu0 6
  %681 = vperm.xlu0 %680, %v448
  %v682 = vpop.permute.xlu0 %681
  %v684 = vmul.f32 %v679, %v682
  %v685 = vsel %vm270, %v684, 0.0
  %v686 = vrot.slane %v685, 4
  %v687 = vadd.f32 %v685, %v686
  %v688 = vrot.slane %v687, 2
  %v689 = vadd.f32 %v687, %v688
  %v690 = vrot.slane %v689, 1
  %v691 = vadd.f32 %v689, %v690
  %v692 = vmul.f32 %v518, %v679
  %v693 = vadd.f32 %v692, %v591
  %694 = vset.pattern.permute.xlu0 7
  %695 = vperm.xlu0 %694, %v448
  %v696 = vpop.permute.xlu0 %695
  %v698 = vmul.f32 %v693, %v696
  %v699 = vsel %vm270, %v698, 0.0
  %v700 = vrot.slane %v699, 4
  %v701 = vadd.f32 %v699, %v700
  %v702 = vrot.slane %v701, 2
  %v703 = vadd.f32 %v701, %v702
  %v704 = vrot.slane %v703, 1
  %v705 = vadd.f32 %v703, %v704
  %706 = vst.msk [vmem:[#allocation6] sm:$0xff] %vm270, %v693
  %v707 = vsel %vm328, %v607, %v621
  %vm708 = vcmask 1041408
  %v709 = vsel %vm708, %v707, %v635
  %v710 = vsel %vm134, %v709, %v649
  %vm711 = vcmask 1043456
  %v712 = vsel %vm711, %v710, %v663
  %v713 = vsel %vm184, %v712, %v677
  %v714 = vsel %vm170, %v713, %v691
  %v715 = vsel %vm156, %v714, %v705
  %716 = vst.msk [vmem:[#allocation5] sm:$0xff] %vm270, %v715
  %717 = vst.msk [vmem:[#allocation6] sm:$0xff] %vm270, 0.0
  %s718 = scalar_lea.vmem [#allocation2], 8
  %v719 = vld [vmem:[%s718] sm:$0xff]
  %s720 = scalar_lea.vmem [#allocation3], 8
  %v721 = vld [vmem:[%s720] sm:$0xff]
  %s722 = scalar_lea.vmem [#allocation4], 8
  %v723 = vld [vmem:[%s722] sm:$0xff]
  %724 = vxpose.xlu0.b32.start [1/16] %v723, 128
  %725 = vxpose.xlu0.b32.cont [2/16] 0.0, 128
  %726 = vxpose.xlu0.b32.cont [3/16] 0.0, 128
  %727 = vxpose.xlu0.b32.cont [4/16] 0.0, 128
  %728 = vxpose.xlu0.b32.cont [5/16] 0.0, 128
  %729 = vxpose.xlu0.b32.cont [6/16] 0.0, 128
  %730 = vxpose.xlu0.b32.cont [7/16] 0.0, 128
  %731 = vxpose.xlu0.b32.cont [8/16] 0.0, 128
  %732 = vxpose.xlu0.b32.cont [9/16] 0.0, 128
  %733 = vxpose.xlu0.b32.cont [10/16] 0.0, 128
  %734 = vxpose.xlu0.b32.cont [11/16] 0.0, 128
  %735 = vxpose.xlu0.b32.cont [12/16] 0.0, 128
  %736 = vxpose.xlu0.b32.cont [13/16] 0.0, 128
  %737 = vxpose.xlu0.b32.cont [14/16] 0.0, 128
  %738 = vxpose.xlu0.b32.cont [15/16] 0.0, 128
  %739 = vxpose.xlu0.b32.end [16/16] 0.0, 128
  %v740 = vpop.trf.xlu0
  %v741 = vpop.trf.xlu0
  %v742 = vpop.trf.xlu0
  %v743 = vpop.trf.xlu0
  %v744 = vpop.trf.xlu0
  %v745 = vpop.trf.xlu0
  %v746 = vpop.trf.xlu0
  %v747 = vpop.trf.xlu0
  %v748 = vpop.trf.xlu0
  %v749 = vpop.trf.xlu0
  %v750 = vpop.trf.xlu0
  %v751 = vpop.trf.xlu0
  %v752 = vpop.trf.xlu0
  %v753 = vpop.trf.xlu0
  %v754 = vpop.trf.xlu0
  %v755 = vpop.trf.xlu0
  %v756 = vlaneseq
  %v757 = vshrl.u32 %v756, 7
  %v758 = vsub.s32 0, %v757
  %v759 = vrot.slane %v719, %v758
  %v760 = vmul.f32 %v759, %v426
  %v761 = vlaneseq
  %v762 = vshrl.u32 %v761, 7
  %v763 = vsub.s32 1, %v762
  %v764 = vrot.slane %v719, %v763
  %v765 = vmul.f32 %v764, %v426
  %v766 = vlaneseq
  %v767 = vshrl.u32 %v766, 7
  %v768 = vsub.s32 2, %v767
  %v769 = vrot.slane %v719, %v768
  %v770 = vmul.f32 %v769, %v426
  %v771 = vlaneseq
  %v772 = vshrl.u32 %v771, 7
  %v773 = vsub.s32 3, %v772
  %v774 = vrot.slane %v719, %v773
  %v775 = vmul.f32 %v774, %v426
  %v776 = vlaneseq
  %v777 = vshrl.u32 %v776, 7
  %v778 = vsub.s32 4, %v777
  %v779 = vrot.slane %v719, %v778
  %v780 = vmul.f32 %v779, %v426
  %v781 = vlaneseq
  %v782 = vshrl.u32 %v781, 7
  %v783 = vsub.s32 5, %v782
  %v784 = vrot.slane %v719, %v783
  %v785 = vmul.f32 %v784, %v426
  %v786 = vlaneseq
  %v787 = vshrl.u32 %v786, 7
  %v788 = vsub.s32 6, %v787
  %v789 = vrot.slane %v719, %v788
  %v790 = vmul.f32 %v789, %v426
  %v791 = vlaneseq
  %v792 = vshrl.u32 %v791, 7
  %v793 = vsub.s32 7, %v792
  %v794 = vrot.slane %v719, %v793
  %v795 = vmul.f32 %v794, %v426
  %v796 = vmul.f32 %v760, 1.442695
  %v797 = vpow.pop %v796
  %v798 = vmul.f32 %v765, 1.442695
  %v799 = vpow.pop %v798
  %v800 = vmul.f32 %v770, 1.442695
  %v801 = vpow.pop %v800
  %v802 = vmul.f32 %v775, 1.442695
  %v803 = vpow.pop %v802
  %v804 = vmul.f32 %v780, 1.442695
  %v805 = vpow.pop %v804
  %v806 = vmul.f32 %v785, 1.442695
  %v807 = vpow.pop %v806
  %v808 = vmul.f32 %v790, 1.442695
  %v809 = vpow.pop %v808
  %v810 = vmul.f32 %v795, 1.442695
  %v811 = vpow.pop %v810
  %v812 = vlaneseq
  %v813 = vshrl.u32 %v812, 7
  %v814 = vsub.s32 0, %v813
  %v815 = vrot.slane %v721, %v814
  %817 = vset.pattern.permute.xlu0 0
  %818 = vperm.xlu0 %817, %v740
  %v819 = vpop.permute.xlu0 %818
  %v821 = vmul.f32 %v815, %v819
  %v822 = vlaneseq
  %v823 = vshrl.u32 %v822, 7
  %v824 = vsub.s32 1, %v823
  %v825 = vrot.slane %v721, %v824
  %826 = vset.pattern.permute.xlu0 1
  %827 = vperm.xlu0 %826, %v740
  %v828 = vpop.permute.xlu0 %827
  %v830 = vmul.f32 %v825, %v828
  %v831 = vlaneseq
  %v832 = vshrl.u32 %v831, 7
  %v833 = vsub.s32 2, %v832
  %v834 = vrot.slane %v721, %v833
  %835 = vset.pattern.permute.xlu0 2
  %836 = vperm.xlu0 %835, %v740
  %v837 = vpop.permute.xlu0 %836
  %v839 = vmul.f32 %v834, %v837
  %v840 = vlaneseq
  %v841 = vshrl.u32 %v840, 7
  %v842 = vsub.s32 3, %v841
  %v843 = vrot.slane %v721, %v842
  %844 = vset.pattern.permute.xlu0 3
  %845 = vperm.xlu0 %844, %v740
  %v846 = vpop.permute.xlu0 %845
  %v848 = vmul.f32 %v843, %v846
  %v849 = vlaneseq
  %v850 = vshrl.u32 %v849, 7
  %v851 = vsub.s32 4, %v850
  %v852 = vrot.slane %v721, %v851
  %853 = vset.pattern.permute.xlu0 4
  %854 = vperm.xlu0 %853, %v740
  %v855 = vpop.permute.xlu0 %854
  %v857 = vmul.f32 %v852, %v855
  %v858 = vlaneseq
  %v859 = vshrl.u32 %v858, 7
  %v860 = vsub.s32 5, %v859
  %v861 = vrot.slane %v721, %v860
  %862 = vset.pattern.permute.xlu0 5
  %863 = vperm.xlu0 %862, %v740
  %v864 = vpop.permute.xlu0 %863
  %v866 = vmul.f32 %v861, %v864
  %v867 = vlaneseq
  %v868 = vshrl.u32 %v867, 7
  %v869 = vsub.s32 6, %v868
  %v870 = vrot.slane %v721, %v869
  %871 = vset.pattern.permute.xlu0 6
  %872 = vperm.xlu0 %871, %v740
  %v873 = vpop.permute.xlu0 %872
  %v875 = vmul.f32 %v870, %v873
  %v876 = vlaneseq
  %v877 = vshrl.u32 %v876, 7
  %v878 = vsub.s32 7, %v877
  %v879 = vrot.slane %v721, %v878
  %880 = vset.pattern.permute.xlu0 7
  %881 = vperm.xlu0 %880, %v740
  %v882 = vpop.permute.xlu0 %881
  %v884 = vmul.f32 %v879, %v882
  %v885 = vld [vmem:[#allocation6] sm:$0xff]
  %v886 = vmul.f32 %v797, %v885
  %v887 = vadd.f32 %v886, %v821
  %889 = vset.pattern.permute.xlu0 0
  %890 = vperm.xlu0 %889, %v741
  %v891 = vpop.permute.xlu0 %890
  %v893 = vmul.f32 %v887, %v891
  %v894 = vsel %vm270, %v893, 0.0
  %v895 = vrot.slane %v894, 4
  %v896 = vadd.f32 %v894, %v895
  %v897 = vrot.slane %v896, 2
  %v898 = vadd.f32 %v896, %v897
  %v899 = vrot.slane %v898, 1
  %v900 = vadd.f32 %v898, %v899
  %v901 = vmul.f32 %v799, %v887
  %v902 = vadd.f32 %v901, %v830
  %903 = vset.pattern.permute.xlu0 1
  %904 = vperm.xlu0 %903, %v741
  %v905 = vpop.permute.xlu0 %904
  %v907 = vmul.f32 %v902, %v905
  %v908 = vsel %vm270, %v907, 0.0
  %v909 = vrot.slane %v908, 4
  %v910 = vadd.f32 %v908, %v909
  %v911 = vrot.slane %v910, 2
  %v912 = vadd.f32 %v910, %v911
  %v913 = vrot.slane %v912, 1
  %v914 = vadd.f32 %v912, %v913
  %v915 = vmul.f32 %v801, %v902
  %v916 = vadd.f32 %v915, %v839
  %917 = vset.pattern.permute.xlu0 2
  %918 = vperm.xlu0 %917, %v741
  %v919 = vpop.permute.xlu0 %918
  %v921 = vmul.f32 %v916, %v919
  %v922 = vsel %vm270, %v921, 0.0
  %v923 = vrot.slane %v922, 4
  %v924 = vadd.f32 %v922, %v923
  %v925 = vrot.slane %v924, 2
  %v926 = vadd.f32 %v924, %v925
  %v927 = vrot.slane %v926, 1
  %v928 = vadd.f32 %v926, %v927
  %v929 = vmul.f32 %v803, %v916
  %v930 = vadd.f32 %v929, %v848
  %931 = vset.pattern.permute.xlu0 3
  %932 = vperm.xlu0 %931, %v741
  %v933 = vpop.permute.xlu0 %932
  %v935 = vmul.f32 %v930, %v933
  %v936 = vsel %vm270, %v935, 0.0
  %v937 = vrot.slane %v936, 4
  %v938 = vadd.f32 %v936, %v937
  %v939 = vrot.slane %v938, 2
  %v940 = vadd.f32 %v938, %v939
  %v941 = vrot.slane %v940, 1
  %v942 = vadd.f32 %v940, %v941
  %v943 = vmul.f32 %v805, %v930
  %v944 = vadd.f32 %v943, %v857
  %945 = vset.pattern.permute.xlu0 4
  %946 = vperm.xlu0 %945, %v741
  %v947 = vpop.permute.xlu0 %946
  %v949 = vmul.f32 %v944, %v947
  %v950 = vsel %vm270, %v949, 0.0
  %v951 = vrot.slane %v950, 4
  %v952 = vadd.f32 %v950, %v951
  %v953 = vrot.slane %v952, 2
  %v954 = vadd.f32 %v952, %v953
  %v955 = vrot.slane %v954, 1
  %v956 = vadd.f32 %v954, %v955
  %v957 = vmul.f32 %v807, %v944
  %v958 = vadd.f32 %v957, %v866
  %959 = vset.pattern.permute.xlu0 5
  %960 = vperm.xlu0 %959, %v741
  %v961 = vpop.permute.xlu0 %960
  %v963 = vmul.f32 %v958, %v961
  %v964 = vsel %vm270, %v963, 0.0
  %v965 = vrot.slane %v964, 4
  %v966 = vadd.f32 %v964, %v965
  %v967 = vrot.slane %v966, 2
  %v968 = vadd.f32 %v966, %v967
  %v969 = vrot.slane %v968, 1
  %v970 = vadd.f32 %v968, %v969
  %v971 = vmul.f32 %v809, %v958
  %v972 = vadd.f32 %v971, %v875
  %973 = vset.pattern.permute.xlu0 6
  %974 = vperm.xlu0 %973, %v741
  %v975 = vpop.permute.xlu0 %974
  %v977 = vmul.f32 %v972, %v975
  %v978 = vsel %vm270, %v977, 0.0
  %v979 = vrot.slane %v978, 4
  %v980 = vadd.f32 %v978, %v979
  %v981 = vrot.slane %v980, 2
  %v982 = vadd.f32 %v980, %v981
  %v983 = vrot.slane %v982, 1
  %v984 = vadd.f32 %v982, %v983
  %v985 = vmul.f32 %v811, %v972
  %v986 = vadd.f32 %v985, %v884
  %987 = vset.pattern.permute.xlu0 7
  %988 = vperm.xlu0 %987, %v741
  %v989 = vpop.permute.xlu0 %988
  %v991 = vmul.f32 %v986, %v989
  %v992 = vsel %vm270, %v991, 0.0
  %v993 = vrot.slane %v992, 4
  %v994 = vadd.f32 %v992, %v993
  %v995 = vrot.slane %v994, 2
  %v996 = vadd.f32 %v994, %v995
  %v997 = vrot.slane %v996, 1
  %v998 = vadd.f32 %v996, %v997
  %999 = vst.msk [vmem:[#allocation6] sm:$0xff] %vm270, %v986
  %v1000 = vsel %vm328, %v900, %v914
  %v1001 = vsel %vm708, %v1000, %v928
  %v1002 = vsel %vm134, %v1001, %v942
  %v1003 = vsel %vm711, %v1002, %v956
  %v1004 = vsel %vm184, %v1003, %v970
  %v1005 = vsel %vm170, %v1004, %v984
  %v1006 = vsel %vm156, %v1005, %v998
  %s1007 = scalar_lea.vmem [#allocation5], 8
  %1008 = vst.msk [vmem:[%s1007] sm:$0xff] %vm270, %v1006
  %v1009 = vld [vmem:[#allocation5] sm:$0xff]
  %v1010 = vld [vmem:[#allocation5 + $0x8] sm:$0xff]
  %v1011 = vld [vmem:[%s9] sm:$0x1]
  %v1013 = vlaneseq
  %v1014 = vshrl.u32 %v1013, 7
  %v1015 = vsub.s32 0, %v1014
  %v1016 = vrot.slane %v1011, %v1015
  %v1018 = vmul.f32 %v235, %v1016
  %v1019 = vmul.f32 %v236, %v1016
  %v1020 = vadd.f32 %v1009, %v1018
  %v1021 = vadd.f32 %v1010, %v1019
  %v1022 = vxor.u32 %v123, 2147483648
  %v1023 = vxor.u32 %v126, 2147483648
  %v1024 = vmul.f32 %v1022, 1.442695
  %v1025 = vpow.pop %v1024
  %v1026 = vmul.f32 %v1023, 1.442695
  %v1027 = vpow.pop %v1026
  %v1028 = vadd.f32 %v1025, 1.0
  %v1029 = vadd.f32 %v1027, 1.0
  %v1030 = vrcp.pop %v1028
  %v1031 = vmul.f32 1.0, %v1030
  %v1032 = vrcp.pop %v1029
  %v1033 = vmul.f32 1.0, %v1032
  %v1034 = vmul.f32 %v123, %v1031
  %v1035 = vmul.f32 %v126, %v1033
  %1038 = vrot.lane.b32.xlu0 %v1034, 64
  %v1039 = vpop.permute.xlu0 %1038
  %1040 = vrot.lane.b32.xlu0 %v1035, 64
  %v1041 = vpop.permute.xlu0 %1040
  %v1044 = vmul.f32 %v1020, %v1039
  %v1045 = vmul.f32 %v1021, %v1041
  %v1046 = vpack.c.bf16 %v1045, %v1044
  %v1047 = vld [vmem:[%s10] sm:$0xf]
  %v1048 = vld [vmem:[%s10 + $0x4] sm:$0xf]
  %v1049 = vld [vmem:[%s10 + $0x8] sm:$0xf]
  %v1050 = vld [vmem:[%s10 + $0xc] sm:$0xf]
  %v1051 = vld [vmem:[%s10 + $0x10] sm:$0xf]
  %v1052 = vld [vmem:[%s10 + $0x14] sm:$0xf]
  %v1053 = vld [vmem:[%s10 + $0x18] sm:$0xf]
  %v1054 = vld [vmem:[%s10 + $0x1c] sm:$0xf]
  %v1063 = vunpack.c.l.b16 %v1047
  %v1064 = vunpack.c.l.b16 %v1048
  %v1065 = vunpack.c.l.b16 %v1049
  %v1066 = vunpack.c.l.b16 %v1050
  %v1067 = vunpack.c.l.b16 %v1051
  %v1068 = vunpack.c.l.b16 %v1052
  %v1069 = vunpack.c.l.b16 %v1053
  %v1070 = vunpack.c.l.b16 %v1054
  %v1071 = vpack.c.b16 %v1064, %v1063
  %v1072 = vpack.c.b16 %v1066, %v1065
  %v1073 = vpack.c.b16 %v1068, %v1067
  %v1074 = vpack.c.b16 %v1070, %v1069
  %v1080 = vsel %vm270, %v1046, 0
  %1082 = vmatprep.subr.bf16.mxu0 0
  %1083 = vmatpush1.bf16.msra.mxu0 %v1071
  %1084 = vmatprep.subr.bf16.mxu0 0
  %1085 = vmatpush1.bf16.msra.mxu0 %v1072
  %1086 = vmatprep.subr.bf16.mxu0 0
  %1087 = vmatpush1.bf16.msra.mxu0 %v1073
  %1088 = vmatprep.subr.bf16.mxu0 0
  %1089 = vmatpush1.bf16.msra.mxu0 %v1074
  %1090 = vmatprep.subr.bf16.mxu0 0
  %1091 = vmatpush1.bf16.msra.mxu0 0
  %1092 = vmatprep.subr.bf16.mxu0 0
  %1093 = vmatpush1.bf16.msra.mxu0 0
  %1094 = vmatprep.subr.bf16.mxu0 0
  %1095 = vmatpush1.bf16.msra.mxu0 0
  %1096 = vmatprep.subr.bf16.mxu0 0
  %1097 = vmatpush1.bf16.msra.mxu0 0
  %1098 = vmatprep.subr.bf16.mxu0 0
  %1099 = vmatpush1.bf16.msra.mxu0 0
  %1100 = vmatprep.subr.bf16.mxu0 0
  %1101 = vmatpush1.bf16.msra.mxu0 0
  %1102 = vmatprep.subr.bf16.mxu0 0
  %1103 = vmatpush1.bf16.msra.mxu0 0
  %1104 = vmatprep.subr.bf16.mxu0 0
  %1105 = vmatpush1.bf16.msra.mxu0 0
  %1106 = vmatprep.subr.bf16.mxu0 0
  %1107 = vmatpush1.bf16.msra.mxu0 0
  %1108 = vmatprep.subr.bf16.mxu0 0
  %1109 = vmatpush1.bf16.msra.mxu0 0
  %1110 = vmatprep.subr.bf16.mxu0 0
  %1111 = vmatpush1.bf16.msra.mxu0 0
  %1112 = vmatprep.subr.bf16.mxu0 0
  %1113 = vmatpush1.bf16.msra.mxu0 0
  %1114 = vmatprep.mubr.bf16.mxu0 0
  %1115 = vmatmul.mubr.bf16.gmra.mrb[0].mxu0 %v1080
  %v1116 = vpop.f32.mrb[0].mxu0
  %v1117 = vadd.f32 0.0, %v1116
  %v1118 = vpop.f32.mrb[0].mxu0
  %v1119 = vpop.f32.mrb[0].mxu0
  %v1120 = vadd.f32 0.0, %v1119
  %v1121 = vpop.f32.mrb[0].mxu0
  %1122 = vdwg.mxu0
  %v1123 = vadd.f32 %v39, %v1117
  %v1124 = vadd.f32 %v40, %v1120
  %1125 = vst.msk [vmem:[%s11] sm:$0xff] %vm43, %v1123
  %1126 = vst.msk [vmem:[%s11 + $0x8] sm:$0xff] %vm43, %v1124
  // Predicated region
  $region46: #{mamba_forward.3} parent=0 // pred_check
    _
  $region47: #{mamba_forward.3} parent=0 // pred_check_branch
    %1128 = sbr.rel (0) target = $region49
  $region48: #{mamba_forward.3} parent=0 // pred_region
    _
  $region49: #{mamba_forward.3} parent=0 // pred_fallthru
    _
  // Predicated region
  $region50: #{mamba_forward.3} parent=0 // pred_check
    _
  $region51: #{mamba_forward.3} parent=0 // pred_check_branch
    %1130 = sbr.rel (0) target = $region53
  $region52: #{mamba_forward.3} parent=0 // pred_region
    _
  $region53: #{mamba_forward.3} parent=0 // pred_fallthru
    _

// kernel: mamba_forward.5
$region0: #{mamba_forward.5}
  #allocation0 [shape = 'u32[]', space=smem, size = 0x4, offset = 0x4, fixed_abs, tag = 'smem constant byte address 0x4 - core index']
  #allocation1 [shape = 'u32[144,128]{1,0:T(1,128)}', space=vmem, size = 0x12000, scoped, tag = 'internal scratch']
  %s0 = inlined_call_operand.vmem [shape: f32[16,32], index: 0, kind: input, shape index: {}]
  %s1 = inlined_call_operand.vmem [shape: f32[1,32], index: 1, kind: input, shape index: {}]
  %s2 = inlined_call_operand.vmem [shape: bf16[32,32], index: 2, kind: input, shape index: {}]
  %s3 = inlined_call_operand.vmem [shape: f32[16,32], index: 3, kind: output, shape index: {}]
  %s4 = sld [smem:[#allocation0]]
  $region22: #{mamba_forward.5} parent=0
    _
  %s6 = ssub.s32 1, %s4
  %s7 = scalar_select 0, %s6, %s4
  // Predicated region
  $region2: #{mamba_forward.5} parent=0 // pred_check
    _
  $region3: #{mamba_forward.5} parent=0 // pred_check_branch
    %9 = sbr.rel (0) target = $region5
  $region4: #{mamba_forward.5} parent=0 // pred_region
    _
  $region5: #{mamba_forward.5} parent=0 // pred_fallthru
    _
  // Predicated region
  $region6: #{mamba_forward.5} parent=0 // pred_check
    _
  $region7: #{mamba_forward.5} parent=0 // pred_check_branch
    %11 = sbr.rel (0) target = $region9
  $region8: #{mamba_forward.5} parent=0 // pred_region
    _
  $region9: #{mamba_forward.5} parent=0 // pred_fallthru
    _
  // Predicated region
  $region10: #{mamba_forward.5} parent=0 // pred_check
    _
  $region11: #{mamba_forward.5} parent=0 // pred_check_branch
    %13 = sbr.rel (0) target = $region13
  $region12: #{mamba_forward.5} parent=0 // pred_region
    _
  $region13: #{mamba_forward.5} parent=0 // pred_fallthru
    _
  %v15 = vld [vmem:[%s0] sm:$0xff]
  %v16 = vld [vmem:[%s0 + $0x8] sm:$0xff]
  %v17 = vmul.f32 %v15, %v15
  %v18 = vmul.f32 %v16, %v16
  %vm19 = vcmask 261120
  %v20 = vsel %vm19, %v17, 0.0
  %21 = vadd.xlane.f32.xlu0 %v20
  %v22 = vpop.xlane.xlu0 %21
  %v23 = vsel %vm19, %v18, 0.0
  %24 = vadd.xlane.f32.xlu0 %v23
  %v25 = vpop.xlane.xlu0 %24
  %v26 = vrcp.pop 32.0
  %v27 = vmul.f32 %v22, %v26
  %v28 = vmul.f32 %v25, %v26
  %v29 = vadd.f32 %v27, 1e-05
  %v30 = vadd.f32 %v28, 1e-05
  %v31 = vrsqrt.pop %v29
  %v32 = vrsqrt.pop %v30
  %v33 = vmul.f32 %v15, %v31
  %v34 = vmul.f32 %v16, %v32
  %v35 = vld [vmem:[%s1] sm:$0x1]
  %v37 = vlaneseq
  %v38 = vshrl.u32 %v37, 7
  %v39 = vsub.s32 0, %v38
  %v40 = vrot.slane %v35, %v39
  %v42 = vmul.f32 %v33, %v40
  %v43 = vmul.f32 %v34, %v40
  %v44 = vpack.c.bf16 %v43, %v42
  %v45 = vld [vmem:[%s2] sm:$0xf]
  %v46 = vld [vmem:[%s2 + $0x4] sm:$0xf]
  %v47 = vld [vmem:[%s2 + $0x8] sm:$0xf]
  %v48 = vld [vmem:[%s2 + $0xc] sm:$0xf]
  %v53 = vunpack.c.l.b16 %v45
  %v54 = vunpack.c.l.b16 %v46
  %v55 = vunpack.c.l.b16 %v47
  %v56 = vunpack.c.l.b16 %v48
  %v57 = vpack.c.b16 %v54, %v53
  %v58 = vpack.c.b16 %v56, %v55
  %v62 = vsel %vm19, %v44, 0
  %64 = vmatprep.subr.bf16.mxu0 0
  %65 = vmatpush1.bf16.msra.mxu0 %v57
  %66 = vmatprep.subr.bf16.mxu0 0
  %67 = vmatpush1.bf16.msra.mxu0 %v58
  %68 = vmatprep.subr.bf16.mxu0 0
  %69 = vmatpush1.bf16.msra.mxu0 0
  %70 = vmatprep.subr.bf16.mxu0 0
  %71 = vmatpush1.bf16.msra.mxu0 0
  %72 = vmatprep.subr.bf16.mxu0 0
  %73 = vmatpush1.bf16.msra.mxu0 0
  %74 = vmatprep.subr.bf16.mxu0 0
  %75 = vmatpush1.bf16.msra.mxu0 0
  %76 = vmatprep.subr.bf16.mxu0 0
  %77 = vmatpush1.bf16.msra.mxu0 0
  %78 = vmatprep.subr.bf16.mxu0 0
  %79 = vmatpush1.bf16.msra.mxu0 0
  %80 = vmatprep.subr.bf16.mxu0 0
  %81 = vmatpush1.bf16.msra.mxu0 0
  %82 = vmatprep.subr.bf16.mxu0 0
  %83 = vmatpush1.bf16.msra.mxu0 0
  %84 = vmatprep.subr.bf16.mxu0 0
  %85 = vmatpush1.bf16.msra.mxu0 0
  %86 = vmatprep.subr.bf16.mxu0 0
  %87 = vmatpush1.bf16.msra.mxu0 0
  %88 = vmatprep.subr.bf16.mxu0 0
  %89 = vmatpush1.bf16.msra.mxu0 0
  %90 = vmatprep.subr.bf16.mxu0 0
  %91 = vmatpush1.bf16.msra.mxu0 0
  %92 = vmatprep.subr.bf16.mxu0 0
  %93 = vmatpush1.bf16.msra.mxu0 0
  %94 = vmatprep.subr.bf16.mxu0 0
  %95 = vmatpush1.bf16.msra.mxu0 0
  %96 = vmatprep.mubr.bf16.mxu0 0
  %97 = vmatmul.mubr.bf16.gmra.mrb[0].mxu0 %v62
  %v98 = vpop.f32.mrb[0].mxu0
  %v99 = vadd.f32 0.0, %v98
  %v100 = vpop.f32.mrb[0].mxu0
  %v101 = vpop.f32.mrb[0].mxu0
  %v102 = vadd.f32 0.0, %v101
  %v103 = vpop.f32.mrb[0].mxu0
  %104 = vdwg.mxu0
  %105 = vst.msk [vmem:[%s3] sm:$0xff] %vm19, %v99
  %106 = vst.msk [vmem:[%s3 + $0x8] sm:$0xff] %vm19, %v102
  // Predicated region
  $region14: #{mamba_forward.5} parent=0 // pred_check
    _
  $region15: #{mamba_forward.5} parent=0 // pred_check_branch
    %108 = sbr.rel (0) target = $region17
  $region16: #{mamba_forward.5} parent=0 // pred_region
    _
  $region17: #{mamba_forward.5} parent=0 // pred_fallthru
    _
  // Predicated region
  $region18: #{mamba_forward.5} parent=0 // pred_check
    _
  $region19: #{mamba_forward.5} parent=0 // pred_check_branch
    %110 = sbr.rel (0) target = $region21
  $region20: #{mamba_forward.5} parent=0 // pred_region
    _
  $region21: #{mamba_forward.5} parent=0 // pred_fallthru
    _

// kernel: mamba_forward.3
$region0: #{mamba_forward.3}
  #allocation0 [shape = 'u32[]', space=smem, size = 0x4, offset = 0x4, fixed_abs, tag = 'smem constant byte address 0x4 - core index']
  #allocation1 [shape = 'u32[144,128]{1,0:T(1,128)}', space=vmem, size = 0x12000, scoped, tag = 'internal scratch']
  #allocation2 [shape = 'f32[16,64]{1,0:T(8,128)}', space=vmem, size = 0x2000, scoped, tag = 'scratch operand']
  #allocation3 [shape = 'f32[16,64]{1,0:T(8,128)}', space=vmem, size = 0x2000, scoped, tag = 'scratch operand']
  #allocation4 [shape = 'f32[16,128]{1,0:T(8,128)}', space=vmem, size = 0x2000, scoped, tag = 'scratch operand']
  #allocation5 [shape = 'f32[16,64]{1,0:T(8,128)}', space=vmem, size = 0x2000, scoped, tag = 'scratch operand']
  #allocation6 [shape = 'f32[8,64]{1,0:T(8,128)}', space=vmem, size = 0x1000, scoped, tag = 'scratch operand']
  %s0 = inlined_call_operand.vmem [shape: f32[16,32], index: 0, kind: input, shape index: {}]
  %s1 = inlined_call_operand.vmem [shape: f32[1,32], index: 1, kind: input, shape index: {}]
  %s2 = inlined_call_operand.vmem [shape: bf16[32,128], index: 2, kind: input, shape index: {}]
  %s3 = inlined_call_operand.vmem [shape: f32[4,64], index: 3, kind: input, shape index: {}]
  %s4 = inlined_call_operand.vmem [shape: f32[1,64], index: 4, kind: input, shape index: {}]
  %s5 = inlined_call_operand.vmem [shape: bf16[64,18], index: 5, kind: input, shape index: {}]
  %s6 = inlined_call_operand.vmem [shape: bf16[2,64], index: 6, kind: input, shape index: {}]
  %s7 = inlined_call_operand.vmem [shape: f32[1,64], index: 7, kind: input, shape index: {}]
  %s8 = inlined_call_operand.vmem [shape: f32[8,64], index: 8, kind: input, shape index: {}]
  %s9 = inlined_call_operand.vmem [shape: f32[1,64], index: 9, kind: input, shape index: {}]
  %s10 = inlined_call_operand.vmem [shape: bf16[64,32], index: 10, kind: input, shape index: {}]
  %s11 = inlined_call_operand.vmem [shape: f32[16,32], index: 11, kind: output, shape index: {}]
  %s12 = sld [smem:[#allocation0]]
  $region54: #{mamba_forward.3} parent=0
    _
  %s14 = ssub.s32 1, %s12
  %s15 = scalar_select 0, %s14, %s12
  // Predicated region
  $region2: #{mamba_forward.3} parent=0 // pred_check
    _
  $region3: #{mamba_forward.3} parent=0 // pred_check_branch
    %17 = sbr.rel (0) target = $region5
  $region4: #{mamba_forward.3} parent=0 // pred_region
    _
  $region5: #{mamba_forward.3} parent=0 // pred_fallthru
    _
  // Predicated region
  $region6: #{mamba_forward.3} parent=0 // pred_check
    _
  $region7: #{mamba_forward.3} parent=0 // pred_check_branch
    %19 = sbr.rel (0) target = $region9
  $region8: #{mamba_forward.3} parent=0 // pred_region
    _
  $region9: #{mamba_forward.3} parent=0 // pred_fallthru
    _
  // Predicated region
  $region10: #{mamba_forward.3} parent=0 // pred_check
    _
  $region11: #{mamba_forward.3} parent=0 // pred_check_branch
    %21 = sbr.rel (0) target = $region13
  $region12: #{mamba_forward.3} parent=0 // pred_region
    _
  $region13: #{mamba_forward.3} parent=0 // pred_fallthru
    _
  // Predicated region
  $region14: #{mamba_forward.3} parent=0 // pred_check
    _
  $region15: #{mamba_forward.3} parent=0 // pred_check_branch
    %23 = sbr.rel (0) target = $region17
  $region16: #{mamba_forward.3} parent=0 // pred_region
    _
  $region17: #{mamba_forward.3} parent=0 // pred_fallthru
    _
  // Predicated region
  $region18: #{mamba_forward.3} parent=0 // pred_check
    _
  $region19: #{mamba_forward.3} parent=0 // pred_check_branch
    %25 = sbr.rel (0) target = $region21
  $region20: #{mamba_forward.3} parent=0 // pred_region
    _
  $region21: #{mamba_forward.3} parent=0 // pred_fallthru
    _
  // Predicated region
  $region22: #{mamba_forward.3} parent=0 // pred_check
    _
  $region23: #{mamba_forward.3} parent=0 // pred_check_branch
    %27 = sbr.rel (0) target = $region25
  $region24: #{mamba_forward.3} parent=0 // pred_region
    _
  $region25: #{mamba_forward.3} parent=0 // pred_fallthru
    _
  // Predicated region
  $region26: #{mamba_forward.3} parent=0 // pred_check
    _
  $region27: #{mamba_forward.3} parent=0 // pred_check_branch
    %29 = sbr.rel (0) target = $region29
  $region28: #{mamba_forward.3} parent=0 // pred_region
    _
  $region29: #{mamba_forward.3} parent=0 // pred_fallthru
    _
  // Predicated region
  $region30: #{mamba_forward.3} parent=0 // pred_check
    _
  $region31: #{mamba_forward.3} parent=0 // pred_check_branch
    %31 = sbr.rel (0) target = $region33
  $region32: #{mamba_forward.3} parent=0 // pred_region
    _
  $region33: #{mamba_forward.3} parent=0 // pred_fallthru
    _
  // Predicated region
  $region34: #{mamba_forward.3} parent=0 // pred_check
    _
  $region35: #{mamba_forward.3} parent=0 // pred_check_branch
    %33 = sbr.rel (0) target = $region37
  $region36: #{mamba_forward.3} parent=0 // pred_region
    _
  $region37: #{mamba_forward.3} parent=0 // pred_fallthru
    _
  // Predicated region
  $region38: #{mamba_forward.3} parent=0 // pred_check
    _
  $region39: #{mamba_forward.3} parent=0 // pred_check_branch
    %35 = sbr.rel (0) target = $region41
  $region40: #{mamba_forward.3} parent=0 // pred_region
    _
  $region41: #{mamba_forward.3} parent=0 // pred_fallthru
    _
  // Predicated region
  $region42: #{mamba_forward.3} parent=0 // pred_check
    _
  $region43: #{mamba_forward.3} parent=0 // pred_check_branch
    %37 = sbr.rel (0) target = $region45
  $region44: #{mamba_forward.3} parent=0 // pred_region
    _
  $region45: #{mamba_forward.3} parent=0 // pred_fallthru
    _
  %v39 = vld [vmem:[%s0] sm:$0xff]
  %v40 = vld [vmem:[%s0 + $0x8] sm:$0xff]
  %v41 = vmul.f32 %v39, %v39
  %v42 = vmul.f32 %v40, %v40
  %vm43 = vcmask 261120
  %v44 = vsel %vm43, %v41, 0.0
  %45 = vadd.xlane.f32.xlu0 %v44
  %v46 = vpop.xlane.xlu0 %45
  %v47 = vsel %vm43, %v42, 0.0
  %48 = vadd.xlane.f32.xlu0 %v47
  %v49 = vpop.xlane.xlu0 %48
  %v50 = vrcp.pop 32.0
  %v51 = vmul.f32 %v46, %v50
  %v52 = vmul.f32 %v49, %v50
  %v53 = vadd.f32 %v51, 1e-05
  %v54 = vadd.f32 %v52, 1e-05
  %v55 = vrsqrt.pop %v53
  %v56 = vrsqrt.pop %v54
  %v57 = vmul.f32 %v39, %v55
  %v58 = vmul.f32 %v40, %v56
  %v59 = vld [vmem:[%s1] sm:$0x1]
  %v61 = vlaneseq
  %v62 = vshrl.u32 %v61, 7
  %v63 = vsub.s32 0, %v62
  %v64 = vrot.slane %v59, %v63
  %v66 = vmul.f32 %v57, %v64
  %v67 = vmul.f32 %v58, %v64
  %v68 = vpack.c.bf16 %v67, %v66
  %v69 = vld [vmem:[%s2] sm:$0xf]
  %v70 = vld [vmem:[%s2 + $0x4] sm:$0xf]
  %v71 = vld [vmem:[%s2 + $0x8] sm:$0xf]
  %v72 = vld [vmem:[%s2 + $0xc] sm:$0xf]
  %v77 = vunpack.c.l.b16 %v69
  %v78 = vunpack.c.l.b16 %v70
  %v79 = vunpack.c.l.b16 %v71
  %v80 = vunpack.c.l.b16 %v72
  %v81 = vpack.c.b16 %v78, %v77
  %v82 = vpack.c.b16 %v80, %v79
  %v86 = vsel %vm43, %v68, 0
  %88 = vmatprep.subr.bf16.mxu0 0
  %89 = vmatpush1.bf16.msra.mxu0 %v81
  %90 = vmatprep.subr.bf16.mxu0 0
  %91 = vmatpush1.bf16.msra.mxu0 %v82
  %92 = vmatprep.subr.bf16.mxu0 0
  %93 = vmatpush1.bf16.msra.mxu0 0
  %94 = vmatprep.subr.bf16.mxu0 0
  %95 = vmatpush1.bf16.msra.mxu0 0
  %96 = vmatprep.subr.bf16.mxu0 0
  %97 = vmatpush1.bf16.msra.mxu0 0
  %98 = vmatprep.subr.bf16.mxu0 0
  %99 = vmatpush1.bf16.msra.mxu0 0
  %100 = vmatprep.subr.bf16.mxu0 0
  %101 = vmatpush1.bf16.msra.mxu0 0
  %102 = vmatprep.subr.bf16.mxu0 0
  %103 = vmatpush1.bf16.msra.mxu0 0
  %104 = vmatprep.subr.bf16.mxu0 0
  %105 = vmatpush1.bf16.msra.mxu0 0
  %106 = vmatprep.subr.bf16.mxu0 0
  %107 = vmatpush1.bf16.msra.mxu0 0
  %108 = vmatprep.subr.bf16.mxu0 0
  %109 = vmatpush1.bf16.msra.mxu0 0
  %110 = vmatprep.subr.bf16.mxu0 0
  %111 = vmatpush1.bf16.msra.mxu0 0
  %112 = vmatprep.subr.bf16.mxu0 0
  %113 = vmatpush1.bf16.msra.mxu0 0
  %114 = vmatprep.subr.bf16.mxu0 0
  %115 = vmatpush1.bf16.msra.mxu0 0
  %116 = vmatprep.subr.bf16.mxu0 0
  %117 = vmatpush1.bf16.msra.mxu0 0
  %118 = vmatprep.subr.bf16.mxu0 0
  %119 = vmatpush1.bf16.msra.mxu0 0
  %120 = vmatprep.mubr.bf16.mxu0 0
  %121 = vmatmul.mubr.bf16.gmra.mrb[0].mxu0 %v86
  %v122 = vpop.f32.mrb[0].mxu0
  %v123 = vadd.f32 0.0, %v122
  %v124 = vpop.f32.mrb[0].mxu0
  %v125 = vpop.f32.mrb[0].mxu0
  %v126 = vadd.f32 0.0, %v125
  %v127 = vpop.f32.mrb[0].mxu0
  %128 = vdwg.mxu0
  %v129 = vld [vmem:[%s3] sm:$0xf]
  %v130 = vld [vmem:[%s4] sm:$0x1]
  %v132 = vrot.slane %v123, 5
  %vm134 = vcmask 1042432
  %v135 = vsel %vm134, 0.0, %v132
  %v136 = vlaneseq
  %v137 = vshrl.u32 %v136, 7
  %v138 = vsub.s32 0, %v137
  %v139 = vrot.slane %v129, %v138
  %v140 = vmul.f32 %v135, %v139
  %v142 = vlaneseq
  %v143 = vshrl.u32 %v142, 7
  %v144 = vsub.s32 0, %v143
  %v145 = vrot.slane %v130, %v144
  %v147 = vadd.f32 %v145, %v140
  %v148 = vlaneseq
  %v149 = vshrl.u32 %v148, 7
  %v150 = vsub.s32 1, %v149
  %v151 = vrot.slane %v129, %v150
  %v152 = vmul.f32 %v135, %v151
  %v153 = vmul.f32 %v132, %v151
  %vm156 = vcmask 1046528
  %v157 = vrot.slane %v152, 1
  %v158 = vrot.slane %v153, 1
  %v159 = vsel %vm156, %v157, %v158
  %v161 = vadd.f32 %v147, %v159
  %v162 = vlaneseq
  %v163 = vshrl.u32 %v162, 7
  %v164 = vsub.s32 2, %v163
  %v165 = vrot.slane %v129, %v164
  %v166 = vmul.f32 %v135, %v165
  %v167 = vmul.f32 %v132, %v165
  %vm170 = vcmask 1045504
  %v171 = vrot.slane %v166, 2
  %v172 = vrot.slane %v167, 2
  %v173 = vsel %vm170, %v171, %v172
  %v175 = vadd.f32 %v161, %v173
  %v176 = vlaneseq
  %v177 = vshrl.u32 %v176, 7
  %v178 = vsub.s32 3, %v177
  %v179 = vrot.slane %v129, %v178
  %v180 = vmul.f32 %v135, %v179
  %v181 = vmul.f32 %v132, %v179
  %vm184 = vcmask 1044480
  %v185 = vrot.slane %v180, 3
  %v186 = vrot.slane %v181, 3
  %v187 = vsel %vm184, %v185, %v186
  %v189 = vadd.f32 %v175, %v187
  %v191 = vrot.slane %v126, 5
  %v193 = vsel %vm134, 0.0, %v191
  %v194 = vmul.f32 %v193, %v139
  %v195 = vadd.f32 %v145, %v194
  %v196 = vmul.f32 %v193, %v151
  %v197 = vmul.f32 %v191, %v151
  %v200 = vrot.slane %v196, 1
  %v201 = vrot.slane %v197, 1
  %v202 = vsel %vm156, %v200, %v201
  %v204 = vadd.f32 %v195, %v202
  %v205 = vmul.f32 %v193, %v165
  %v206 = vmul.f32 %v191, %v165
  %v209 = vrot.slane %v205, 2
  %v210 = vrot.slane %v206, 2
  %v211 = vsel %vm170, %v209, %v210
  %v213 = vadd.f32 %v204, %v211
  %v214 = vmul.f32 %v193, %v179
  %v215 = vmul.f32 %v191, %v179
  %v218 = vrot.slane %v214, 3
  %v219 = vrot.slane %v215, 3
  %v220 = vsel %vm184, %v218, %v219
  %v222 = vadd.f32 %v213, %v220
  %v223 = vxor.u32 %v189, 2147483648
  %v224 = vxor.u32 %v222, 2147483648
  %v225 = vmul.f32 %v223, 1.442695
  %v226 = vpow.pop %v225
  %v227 = vmul.f32 %v224, 1.442695
  %v228 = vpow.pop %v227
  %v229 = vadd.f32 %v226, 1.0
  %v230 = vadd.f32 %v228, 1.0
  %v231 = vrcp.pop %v229
  %v232 = vmul.f32 1.0, %v231
  %v233 = vrcp.pop %v230
  %v234 = vmul.f32 1.0, %v233
  %v235 = vmul.f32 %v189, %v232
  %v236 = vmul.f32 %v222, %v234
  %v237 = vpack.c.bf16 %v236, %v235
  %v238 = vld [vmem:[%s5] sm:$0xf]
  %v239 = vld [vmem:[%s5 + $0x4] sm:$0xf]
  %v240 = vld [vmem:[%s5 + $0x8] sm:$0xf]
  %v241 = vld [vmem:[%s5 + $0xc] sm:$0xf]
  %v242 = vld [vmem:[%s5 + $0x10] sm:$0xf]
  %v243 = vld [vmem:[%s5 + $0x14] sm:$0xf]
  %v244 = vld [vmem:[%s5 + $0x18] sm:$0xf]
  %v245 = vld [vmem:[%s5 + $0x1c] sm:$0xf]
  %v254 = vunpack.c.l.b16 %v238
  %v255 = vunpack.c.l.b16 %v239
  %v256 = vunpack.c.l.b16 %v240
  %v257 = vunpack.c.l.b16 %v241
  %v258 = vunpack.c.l.b16 %v242
  %v259 = vunpack.c.l.b16 %v243
  %v260 = vunpack.c.l.b16 %v244
  %v261 = vunpack.c.l.b16 %v245
  %v262 = vpack.c.b16 %v255, %v254
  %v263 = vpack.c.b16 %v257, %v256
  %v264 = vpack.c.b16 %v259, %v258
  %v265 = vpack.c.b16 %v261, %v260
  %vm270 = vcmask 523264
  %v272 = vsel %vm270, %v237, 0
  %274 = vmatprep.subr.bf16.mxu0 0
  %275 = vmatpush1.bf16.msra.mxu0 %v262
  %276 = vmatprep.subr.bf16.mxu0 0
  %277 = vmatpush1.bf16.msra.mxu0 %v263
  %278 = vmatprep.subr.bf16.mxu0 0
  %279 = vmatpush1.bf16.msra.mxu0 %v264
  %280 = vmatprep.subr.bf16.mxu0 0
  %281 = vmatpush1.bf16.msra.mxu0 %v265
  %282 = vmatprep.subr.bf16.mxu0 0
  %283 = vmatpush1.bf16.msra.mxu0 0
  %284 = vmatprep.subr.bf16.mxu0 0
  %285 = vmatpush1.bf16.msra.mxu0 0
  %286 = vmatprep.subr.bf16.mxu0 0
  %287 = vmatpush1.bf16.msra.mxu0 0
  %288 = vmatprep.subr.bf16.mxu0 0
  %289 = vmatpush1.bf16.msra.mxu0 0
  %290 = vmatprep.subr.bf16.mxu0 0
  %291 = vmatpush1.bf16.msra.mxu0 0
  %292 = vmatprep.subr.bf16.mxu0 0
  %293 = vmatpush1.bf16.msra.mxu0 0
  %294 = vmatprep.subr.bf16.mxu0 0
  %295 = vmatpush1.bf16.msra.mxu0 0
  %296 = vmatprep.subr.bf16.mxu0 0
  %297 = vmatpush1.bf16.msra.mxu0 0
  %298 = vmatprep.subr.bf16.mxu0 0
  %299 = vmatpush1.bf16.msra.mxu0 0
  %300 = vmatprep.subr.bf16.mxu0 0
  %301 = vmatpush1.bf16.msra.mxu0 0
  %302 = vmatprep.subr.bf16.mxu0 0
  %303 = vmatpush1.bf16.msra.mxu0 0
  %304 = vmatprep.subr.bf16.mxu0 0
  %305 = vmatpush1.bf16.msra.mxu0 0
  %306 = vmatprep.mubr.bf16.mxu0 0
  %307 = vmatmul.mubr.bf16.gmra.mrb[0].mxu0 %v272
  %v308 = vpop.f32.mrb[0].mxu0
  %v309 = vadd.f32 0.0, %v308
  %v310 = vpop.f32.mrb[0].mxu0
  %v311 = vpop.f32.mrb[0].mxu0
  %v312 = vadd.f32 0.0, %v311
  %v313 = vpop.f32.mrb[0].mxu0
  %314 = vdwg.mxu0
  %v315 = vpack.c.bf16 %v312, %v309
  %v316 = vld [vmem:[%s6] sm:$0x1]
  %v317 = vld [vmem:[%s7] sm:$0x1]
  %v319 = vlaneseq
  %v320 = vshrl.u32 %v319, 7
  %v321 = vsub.s32 0, %v320
  %v322 = vrot.slane %v317, %v321
  %vm324 = vcmask 15360
  %v326 = vsel %vm324, %v315, 0
  %vm328 = vcmask 1040384
  %v330 = vsel %vm328, %v316, 0
  %332 = vmatprep.subr.bf16.mxu0 0
  %333 = vmatpush1.bf16.msra.mxu0 %v330
  %334 = vmatprep.subr.bf16.mxu0 0
  %335 = vmatpush1.bf16.msra.mxu0 0
  %336 = vmatprep.subr.bf16.mxu0 0
  %337 = vmatpush1.bf16.msra.mxu0 0
  %338 = vmatprep.subr.bf16.mxu0 0
  %339 = vmatpush1.bf16.msra.mxu0 0
  %340 = vmatprep.subr.bf16.mxu0 0
  %341 = vmatpush1.bf16.msra.mxu0 0
  %342 = vmatprep.subr.bf16.mxu0 0
  %343 = vmatpush1.bf16.msra.mxu0 0
  %344 = vmatprep.subr.bf16.mxu0 0
  %345 = vmatpush1.bf16.msra.mxu0 0
  %346 = vmatprep.subr.bf16.mxu0 0
  %347 = vmatpush1.bf16.msra.mxu0 0
  %348 = vmatprep.subr.bf16.mxu0 0
  %349 = vmatpush1.bf16.msra.mxu0 0
  %350 = vmatprep.subr.bf16.mxu0 0
  %351 = vmatpush1.bf16.msra.mxu0 0
  %352 = vmatprep.subr.bf16.mxu0 0
  %353 = vmatpush1.bf16.msra.mxu0 0
  %354 = vmatprep.subr.bf16.mxu0 0
  %355 = vmatpush1.bf16.msra.mxu0 0
  %356 = vmatprep.subr.bf16.mxu0 0
  %357 = vmatpush1.bf16.msra.mxu0 0
  %358 = vmatprep.subr.bf16.mxu0 0
  %359 = vmatpush1.bf16.msra.mxu0 0
  %360 = vmatprep.subr.bf16.mxu0 0
  %361 = vmatpush1.bf16.msra.mxu0 0
  %362 = vmatprep.subr.bf16.mxu0 0
  %363 = vmatpush1.bf16.msra.mxu0 0
  %364 = vmatprep.mubr.bf16.mxu0 0
  %365 = vmatmul.mubr.bf16.gmra.mrb[0].mxu0 %v326
  %v366 = vpop.f32.mrb[0].mxu0
  %v367 = vadd.f32 %v322, %v366
  %v368 = vpop.f32.mrb[0].mxu0
  %v369 = vpop.f32.mrb[0].mxu0
  %v370 = vadd.f32 %v322, %v369
  %v371 = vpop.f32.mrb[0].mxu0
  %372 = vdwg.mxu0
  %v373 = vmax.f32 %v367, 0.0
  %v374 = vmax.f32 %v370, 0.0
  %vm375 = vcmp.ne.f32.partialorder %v367, %v367
  %vm376 = vcmp.ne.f32.partialorder %v370, %v370
  %v377 = vadd.f32 %v367, 0.0
  %v378 = vadd.f32 %v370, 0.0
  %v379 = vand.u32 2147483647, %v367
  %v380 = vand.u32 2147483647, %v370
  %v381 = vsub.f32 0.0, %v379
  %v382 = vsub.f32 0.0, %v380
  %v383 = vmul.f32 %v381, 1.442695
  %v384 = vpow.pop %v383
  %v385 = vmul.f32 %v382, 1.442695
  %v386 = vpow.pop %v385
  %v387 = vadd.f32 %v384, 1.0
  %v388 = vlog2.pop %v387
  %v389 = vmul.f32 %v388, 0.6931472
  %v390 = vmul.f32 -0.5, %v384
  %v391 = vadd.f32 %v390, 1.0
  %v392 = vmul.f32 %v391, %v384
  %v393 = vand.u32 2147483647, %v384
  %vm394 = vcmp.lt.f32.partialorder %v393, 0.0004427343
  %v395 = vsel %vm394, %v392, %v389
  %v396 = vadd.f32 %v386, 1.0
  %v397 = vlog2.pop %v396
  %v398 = vmul.f32 %v397, 0.6931472
  %v399 = vmul.f32 -0.5, %v386
  %v400 = vadd.f32 %v399, 1.0
  %v401 = vmul.f32 %v400, %v386
  %v402 = vand.u32 2147483647, %v386
  %vm403 = vcmp.lt.f32.partialorder %v402, 0.0004427343
  %v404 = vsel %vm403, %v401, %v398
  %v405 = vadd.f32 %v373, %v395
  %v406 = vadd.f32 %v374, %v404
  %v407 = vsel %vm375, %v377, %v405
  %v408 = vsel %vm376, %v378, %v406
  %409 = vst.msk [vmem:[#allocation2] sm:$0xff] %vm270, %v407
  %410 = vst.msk [vmem:[#allocation2 + $0x8] sm:$0xff] %vm270, %v408
  %v411 = vmul.f32 %v407, %v235
  %v412 = vmul.f32 %v408, %v236
  %413 = vst.msk [vmem:[#allocation3] sm:$0xff] %vm270, %v411
  %414 = vst.msk [vmem:[#allocation3 + $0x8] sm:$0xff] %vm270, %v412
  %417 = vrot.lane.b32.xlu0 %v309, 126
  %v418 = vpop.permute.xlu0 %417
  %419 = vrot.lane.b32.xlu0 %v312, 126
  %v420 = vpop.permute.xlu0 %419
  %vm423 = vcmask 130048
  %424 = vst.msk [vmem:[#allocation4] sm:$0xff] %vm423, %v418
  %425 = vst.msk [vmem:[#allocation4 + $0x8] sm:$0xff] %vm423, %v420
  %v426 = vld [vmem:[%s8] sm:$0xff]
  %427 = vst.msk [vmem:[#allocation6] sm:$0xff] %vm270, 0.0
  %v428 = vld [vmem:[#allocation2] sm:$0xff]
  %v429 = vld [vmem:[#allocation3] sm:$0xff]
  %v430 = vld [vmem:[#allocation4] sm:$0xff]
  %431 = vxpose.xlu0.b32.start [1/16] %v430, 128
  %432 = vxpose.xlu0.b32.cont [2/16] 0.0, 128
  %433 = vxpose.xlu0.b32.cont [3/16] 0.0, 128
  %434 = vxpose.xlu0.b32.cont [4/16] 0.0, 128
  %435 = vxpose.xlu0.b32.cont [5/16] 0.0, 128
  %436 = vxpose.xlu0.b32.cont [6/16] 0.0, 128
  %437 = vxpose.xlu0.b32.cont [7/16] 0.0, 128
  %438 = vxpose.xlu0.b32.cont [8/16] 0.0, 128
  %439 = vxpose.xlu0.b32.cont [9/16] 0.0, 128
  %440 = vxpose.xlu0.b32.cont [10/16] 0.0, 128
  %441 = vxpose.xlu0.b32.cont [11/16] 0.0, 128
  %442 = vxpose.xlu0.b32.cont [12/16] 0.0, 128
  %443 = vxpose.xlu0.b32.cont [13/16] 0.0, 128
  %444 = vxpose.xlu0.b32.cont [14/16] 0.0, 128
  %445 = vxpose.xlu0.b32.cont [15/16] 0.0, 128
  %446 = vxpose.xlu0.b32.end [16/16] 0.0, 128
  %v447 = vpop.trf.xlu0
  %v448 = vpop.trf.xlu0
  %v449 = vpop.trf.xlu0
  %v450 = vpop.trf.xlu0
  %v451 = vpop.trf.xlu0
  %v452 = vpop.trf.xlu0
  %v453 = vpop.trf.xlu0
  %v454 = vpop.trf.xlu0
  %v455 = vpop.trf.xlu0
  %v456 = vpop.trf.xlu0
  %v457 = vpop.trf.xlu0
  %v458 = vpop.trf.xlu0
  %v459 = vpop.trf.xlu0
  %v460 = vpop.trf.xlu0
  %v461 = vpop.trf.xlu0
  %v462 = vpop.trf.xlu0
  %v463 = vlaneseq
  %v464 = vshrl.u32 %v463, 7
  %v465 = vsub.s32 0, %v464
  %v466 = vrot.slane %v428, %v465
  %v467 = vmul.f32 %v466, %v426
  %v468 = vlaneseq
  %v469 = vshrl.u32 %v468, 7
  %v470 = vsub.s32 1, %v469
  %v471 = vrot.slane %v428, %v470
  %v472 = vmul.f32 %v471, %v426
  %v473 = vlaneseq
  %v474 = vshrl.u32 %v473, 7
  %v475 = vsub.s32 2, %v474
  %v476 = vrot.slane %v428, %v475
  %v477 = vmul.f32 %v476, %v426
  %v478 = vlaneseq
  %v479 = vshrl.u32 %v478, 7
  %v480 = vsub.s32 3, %v479
  %v481 = vrot.slane %v428, %v480
  %v482 = vmul.f32 %v481, %v426
  %v483 = vlaneseq
  %v484 = vshrl.u32 %v483, 7
  %v485 = vsub.s32 4, %v484
  %v486 = vrot.slane %v428, %v485
  %v487 = vmul.f32 %v486, %v426
  %v488 = vlaneseq
  %v489 = vshrl.u32 %v488, 7
  %v490 = vsub.s32 5, %v489
  %v491 = vrot.slane %v428, %v490
  %v492 = vmul.f32 %v491, %v426
  %v493 = vlaneseq
  %v494 = vshrl.u32 %v493, 7
  %v495 = vsub.s32 6, %v494
  %v496 = vrot.slane %v428, %v495
  %v497 = vmul.f32 %v496, %v426
  %v498 = vlaneseq
  %v499 = vshrl.u32 %v498, 7
  %v500 = vsub.s32 7, %v499
  %v501 = vrot.slane %v428, %v500
  %v502 = vmul.f32 %v501, %v426
  %v503 = vmul.f32 %v467, 1.442695
  %v504 = vpow.pop %v503
  %v505 = vmul.f32 %v472, 1.442695
  %v506 = vpow.pop %v505
  %v507 = vmul.f32 %v477, 1.442695
  %v508 = vpow.pop %v507
  %v509 = vmul.f32 %v482, 1.442695
  %v510 = vpow.pop %v509
  %v511 = vmul.f32 %v487, 1.442695
  %v512 = vpow.pop %v511
  %v513 = vmul.f32 %v492, 1.442695
  %v514 = vpow.pop %v513
  %v515 = vmul.f32 %v497, 1.442695
  %v516 = vpow.pop %v515
  %v517 = vmul.f32 %v502, 1.442695
  %v518 = vpow.pop %v517
  %v519 = vlaneseq
  %v520 = vshrl.u32 %v519, 7
  %v521 = vsub.s32 0, %v520
  %v522 = vrot.slane %v429, %v521
  %524 = vset.pattern.permute.xlu0 0
  %525 = vperm.xlu0 %524, %v447
  %v526 = vpop.permute.xlu0 %525
  %v528 = vmul.f32 %v522, %v526
  %v529 = vlaneseq
  %v530 = vshrl.u32 %v529, 7
  %v531 = vsub.s32 1, %v530
  %v532 = vrot.slane %v429, %v531
  %533 = vset.pattern.permute.xlu0 1
  %534 = vperm.xlu0 %533, %v447
  %v535 = vpop.permute.xlu0 %534
  %v537 = vmul.f32 %v532, %v535
  %v538 = vlaneseq
  %v539 = vshrl.u32 %v538, 7
  %v540 = vsub.s32 2, %v539
  %v541 = vrot.slane %v429, %v540
  %542 = vset.pattern.permute.xlu0 2
  %543 = vperm.xlu0 %542, %v447
  %v544 = vpop.permute.xlu0 %543
  %v546 = vmul.f32 %v541, %v544
  %v547 = vlaneseq
  %v548 = vshrl.u32 %v547, 7
  %v549 = vsub.s32 3, %v548
  %v550 = vrot.slane %v429, %v549
  %551 = vset.pattern.permute.xlu0 3
  %552 = vperm.xlu0 %551, %v447
  %v553 = vpop.permute.xlu0 %552
  %v555 = vmul.f32 %v550, %v553
  %v556 = vlaneseq
  %v557 = vshrl.u32 %v556, 7
  %v558 = vsub.s32 4, %v557
  %v559 = vrot.slane %v429, %v558
  %560 = vset.pattern.permute.xlu0 4
  %561 = vperm.xlu0 %560, %v447
  %v562 = vpop.permute.xlu0 %561
  %v564 = vmul.f32 %v559, %v562
  %v565 = vlaneseq
  %v566 = vshrl.u32 %v565, 7
  %v567 = vsub.s32 5, %v566
  %v568 = vrot.slane %v429, %v567
  %569 = vset.pattern.permute.xlu0 5
  %570 = vperm.xlu0 %569, %v447
  %v571 = vpop.permute.xlu0 %570
  %v573 = vmul.f32 %v568, %v571
  %v574 = vlaneseq
  %v575 = vshrl.u32 %v574, 7
  %v576 = vsub.s32 6, %v575
  %v577 = vrot.slane %v429, %v576
  %578 = vset.pattern.permute.xlu0 6
  %579 = vperm.xlu0 %578, %v447
  %v580 = vpop.permute.xlu0 %579
  %v582 = vmul.f32 %v577, %v580
  %v583 = vlaneseq
  %v584 = vshrl.u32 %v583, 7
  %v585 = vsub.s32 7, %v584
  %v586 = vrot.slane %v429, %v585
  %587 = vset.pattern.permute.xlu0 7
  %588 = vperm.xlu0 %587, %v447
  %v589 = vpop.permute.xlu0 %588
  %v591 = vmul.f32 %v586, %v589
  %v592 = vld [vmem:[#allocation6] sm:$0xff]
  %v593 = vmul.f32 %v504, %v592
  %v594 = vadd.f32 %v593, %v528
  %596 = vset.pattern.permute.xlu0 0
  %597 = vperm.xlu0 %596, %v448
  %v598 = vpop.permute.xlu0 %597
  %v600 = vmul.f32 %v594, %v598
  %v601 = vsel %vm270, %v600, 0.0
  %v602 = vrot.slane %v601, 4
  %v603 = vadd.f32 %v601, %v602
  %v604 = vrot.slane %v603, 2
  %v605 = vadd.f32 %v603, %v604
  %v606 = vrot.slane %v605, 1
  %v607 = vadd.f32 %v605, %v606
  %v608 = vmul.f32 %v506, %v594
  %v609 = vadd.f32 %v608, %v537
  %610 = vset.pattern.permute.xlu0 1
  %611 = vperm.xlu0 %610, %v448
  %v612 = vpop.permute.xlu0 %611
  %v614 = vmul.f32 %v609, %v612
  %v615 = vsel %vm270, %v614, 0.0
  %v616 = vrot.slane %v615, 4
  %v617 = vadd.f32 %v615, %v616
  %v618 = vrot.slane %v617, 2
  %v619 = vadd.f32 %v617, %v618
  %v620 = vrot.slane %v619, 1
  %v621 = vadd.f32 %v619, %v620
  %v622 = vmul.f32 %v508, %v609
  %v623 = vadd.f32 %v622, %v546
  %624 = vset.pattern.permute.xlu0 2
  %625 = vperm.xlu0 %624, %v448
  %v626 = vpop.permute.xlu0 %625
  %v628 = vmul.f32 %v623, %v626
  %v629 = vsel %vm270, %v628, 0.0
  %v630 = vrot.slane %v629, 4
  %v631 = vadd.f32 %v629, %v630
  %v632 = vrot.slane %v631, 2
  %v633 = vadd.f32 %v631, %v632
  %v634 = vrot.slane %v633, 1
  %v635 = vadd.f32 %v633, %v634
  %v636 = vmul.f32 %v510, %v623
  %v637 = vadd.f32 %v636, %v555
  %638 = vset.pattern.permute.xlu0 3
  %639 = vperm.xlu0 %638, %v448
  %v640 = vpop.permute.xlu0 %639
  %v642 = vmul.f32 %v637, %v640
  %v643 = vsel %vm270, %v642, 0.0
  %v644 = vrot.slane %v643, 4
  %v645 = vadd.f32 %v643, %v644
  %v646 = vrot.slane %v645, 2
  %v647 = vadd.f32 %v645, %v646
  %v648 = vrot.slane %v647, 1
  %v649 = vadd.f32 %v647, %v648
  %v650 = vmul.f32 %v512, %v637
  %v651 = vadd.f32 %v650, %v564
  %652 = vset.pattern.permute.xlu0 4
  %653 = vperm.xlu0 %652, %v448
  %v654 = vpop.permute.xlu0 %653
  %v656 = vmul.f32 %v651, %v654
  %v657 = vsel %vm270, %v656, 0.0
  %v658 = vrot.slane %v657, 4
  %v659 = vadd.f32 %v657, %v658
  %v660 = vrot.slane %v659, 2
  %v661 = vadd.f32 %v659, %v660
  %v662 = vrot.slane %v661, 1
  %v663 = vadd.f32 %v661, %v662
  %v664 = vmul.f32 %v514, %v651
  %v665 = vadd.f32 %v664, %v573
  %666 = vset.pattern.permute.xlu0 5
  %667 = vperm.xlu0 %666, %v448
  %v668 = vpop.permute.xlu0 %667
  %v670 = vmul.f32 %v665, %v668
  %v671 = vsel %vm270, %v670, 0.0
  %v672 = vrot.slane %v671, 4
  %v673 = vadd.f32 %v671, %v672
  %v674 = vrot.slane %v673, 2
  %v675 = vadd.f32 %v673, %v674
  %v676 = vrot.slane %v675, 1
  %v677 = vadd.f32 %v675, %v676
  %v678 = vmul.f32 %v516, %v665
  %v679 = vadd.f32 %v678, %v582
  %680 = vset.pattern.permute.xlu0 6
  %681 = vperm.xlu0 %680, %v448
  %v682 = vpop.permute.xlu0 %681
  %v684 = vmul.f32 %v679, %v682
  %v685 = vsel %vm270, %v684, 0.0
  %v686 = vrot.slane %v685, 4
  %v687 = vadd.f32 %v685, %v686
  %v688 = vrot.slane %v687, 2
  %v689 = vadd.f32 %v687, %v688
  %v690 = vrot.slane %v689, 1
  %v691 = vadd.f32 %v689, %v690
  %v692 = vmul.f32 %v518, %v679
  %v693 = vadd.f32 %v692, %v591
  %694 = vset.pattern.permute.xlu0 7
  %695 = vperm.xlu0 %694, %v448
  %v696 = vpop.permute.xlu0 %695
  %v698 = vmul.f32 %v693, %v696
  %v699 = vsel %vm270, %v698, 0.0
  %v700 = vrot.slane %v699, 4
  %v701 = vadd.f32 %v699, %v700
  %v702 = vrot.slane %v701, 2
  %v703 = vadd.f32 %v701, %v702
  %v704 = vrot.slane %v703, 1
  %v705 = vadd.f32 %v703, %v704
  %706 = vst.msk [vmem:[#allocation6] sm:$0xff] %vm270, %v693
  %v707 = vsel %vm328, %v607, %v621
  %vm708 = vcmask 1041408
  %v709 = vsel %vm708, %v707, %v635
  %v710 = vsel %vm134, %v709, %v649
  %vm711 = vcmask 1043456
  %v712 = vsel %vm711, %v710, %v663
  %v713 = vsel %vm184, %v712, %v677
  %v714 = vsel %vm170, %v713, %v691
  %v715 = vsel %vm156, %v714, %v705
  %716 = vst.msk [vmem:[#allocation5] sm:$0xff] %vm270, %v715
  %717 = vst.msk [vmem:[#allocation6] sm:$0xff] %vm270, 0.0
  %s718 = scalar_lea.vmem [#allocation2], 8
  %v719 = vld [vmem:[%s718] sm:$0xff]
  %s720 = scalar_lea.vmem [#allocation3], 8
  %v721 = vld [vmem:[%s720] sm:$0xff]
  %s722 = scalar_lea.vmem [#allocation4], 8
  %v723 = vld [vmem:[%s722] sm:$0xff]
  %724 = vxpose.xlu0.b32.start [1/16] %v723, 128
  %725 = vxpose.xlu0.b32.cont [2/16] 0.0, 128
  %726 = vxpose.xlu0.b32.cont [3/16] 0.0, 128
  %727 = vxpose.xlu0.b32.cont [4/16] 0.0, 128
  %728 = vxpose.xlu0.b32.cont [5/16] 0.0, 128
  %729 = vxpose.xlu0.b32.cont [6/16] 0.0, 128
  %730 = vxpose.xlu0.b32.cont [7/16] 0.0, 128
  %731 = vxpose.xlu0.b32.cont [8/16] 0.0, 128
  %732 = vxpose.xlu0.b32.cont [9/16] 0.0, 128
  %733 = vxpose.xlu0.b32.cont [10/16] 0.0, 128
  %734 = vxpose.xlu0.b32.cont [11/16] 0.0, 128
  %735 = vxpose.xlu0.b32.cont [12/16] 0.0, 128
  %736 = vxpose.xlu0.b32.cont [13/16] 0.0, 128
  %737 = vxpose.xlu0.b32.cont [14/16] 0.0, 128
  %738 = vxpose.xlu0.b32.cont [15/16] 0.0, 128
  %739 = vxpose.xlu0.b32.end [16/16] 0.0, 128
  %v740 = vpop.trf.xlu0
  %v741 = vpop.trf.xlu0
  %v742 = vpop.trf.xlu0
  %v743 = vpop.trf.xlu0
  %v744 = vpop.trf.xlu0
  %v745 = vpop.trf.xlu0
  %v746 = vpop.trf.xlu0
  %v747 = vpop.trf.xlu0
  %v748 = vpop.trf.xlu0
  %v749 = vpop.trf.xlu0
  %v750 = vpop.trf.xlu0
  %v751 = vpop.trf.xlu0
  %v752 = vpop.trf.xlu0
  %v753 = vpop.trf.xlu0
  %v754 = vpop.trf.xlu0
  %v755 = vpop.trf.xlu0
  %v756 = vlaneseq
  %v757 = vshrl.u32 %v756, 7
  %v758 = vsub.s32 0, %v757
  %v759 = vrot.slane %v719, %v758
  %v760 = vmul.f32 %v759, %v426
  %v761 = vlaneseq
  %v762 = vshrl.u32 %v761, 7
  %v763 = vsub.s32 1, %v762
  %v764 = vrot.slane %v719, %v763
  %v765 = vmul.f32 %v764, %v426
  %v766 = vlaneseq
  %v767 = vshrl.u32 %v766, 7
  %v768 = vsub.s32 2, %v767
  %v769 = vrot.slane %v719, %v768
  %v770 = vmul.f32 %v769, %v426
  %v771 = vlaneseq
  %v772 = vshrl.u32 %v771, 7
  %v773 = vsub.s32 3, %v772
  %v774 = vrot.slane %v719, %v773
  %v775 = vmul.f32 %v774, %v426
  %v776 = vlaneseq
  %v777 = vshrl.u32 %v776, 7
  %v778 = vsub.s32 4, %v777
  %v779 = vrot.slane %v719, %v778
  %v780 = vmul.f32 %v779, %v426
  %v781 = vlaneseq
  %v782 = vshrl.u32 %v781, 7
  %v783 = vsub.s32 5, %v782
  %v784 = vrot.slane %v719, %v783
  %v785 = vmul.f32 %v784, %v426
  %v786 = vlaneseq
  %v787 = vshrl.u32 %v786, 7
  %v788 = vsub.s32 6, %v787
  %v789 = vrot.slane %v719, %v788
  %v790 = vmul.f32 %v789, %v426
  %v791 = vlaneseq
  %v792 = vshrl.u32 %v791, 7
  %v793 = vsub.s32 7, %v792
  %v794 = vrot.slane %v719, %v793
  %v795 = vmul.f32 %v794, %v426
  %v796 = vmul.f32 %v760, 1.442695
  %v797 = vpow.pop %v796
  %v798 = vmul.f32 %v765, 1.442695
  %v799 = vpow.pop %v798
  %v800 = vmul.f32 %v770, 1.442695
  %v801 = vpow.pop %v800
  %v802 = vmul.f32 %v775, 1.442695
  %v803 = vpow.pop %v802
  %v804 = vmul.f32 %v780, 1.442695
  %v805 = vpow.pop %v804
  %v806 = vmul.f32 %v785, 1.442695
  %v807 = vpow.pop %v806
  %v808 = vmul.f32 %v790, 1.442695
  %v809 = vpow.pop %v808
  %v810 = vmul.f32 %v795, 1.442695
  %v811 = vpow.pop %v810
  %v812 = vlaneseq
  %v813 = vshrl.u32 %v812, 7
  %v814 = vsub.s32 0, %v813
  %v815 = vrot.slane %v721, %v814
  %817 = vset.pattern.permute.xlu0 0
  %818 = vperm.xlu0 %817, %v740
  %v819 = vpop.permute.xlu0 %818
  %v821 = vmul.f32 %v815, %v819
  %v822 = vlaneseq
  %v823 = vshrl.u32 %v822, 7
  %v824 = vsub.s32 1, %v823
  %v825 = vrot.slane %v721, %v824
  %826 = vset.pattern.permute.xlu0 1
  %827 = vperm.xlu0 %826, %v740
  %v828 = vpop.permute.xlu0 %827
  %v830 = vmul.f32 %v825, %v828
  %v831 = vlaneseq
  %v832 = vshrl.u32 %v831, 7
  %v833 = vsub.s32 2, %v832
  %v834 = vrot.slane %v721, %v833
  %835 = vset.pattern.permute.xlu0 2
  %836 = vperm.xlu0 %835, %v740
  %v837 = vpop.permute.xlu0 %836
  %v839 = vmul.f32 %v834, %v837
  %v840 = vlaneseq
  %v841 = vshrl.u32 %v840, 7
  %v842 = vsub.s32 3, %v841
  %v843 = vrot.slane %v721, %v842
  %844 = vset.pattern.permute.xlu0 3
  %845 = vperm.xlu0 %844, %v740
  %v846 = vpop.permute.xlu0 %845
  %v848 = vmul.f32 %v843, %v846
  %v849 = vlaneseq
  %v850 = vshrl.u32 %v849, 7
  %v851 = vsub.s32 4, %v850
  %v852 = vrot.slane %v721, %v851
  %853 = vset.pattern.permute.xlu0 4
  %854 = vperm.xlu0 %853, %v740
  %v855 = vpop.permute.xlu0 %854
  %v857 = vmul.f32 %v852, %v855
  %v858 = vlaneseq
  %v859 = vshrl.u32 %v858, 7
  %v860 = vsub.s32 5, %v859
  %v861 = vrot.slane %v721, %v860
  %862 = vset.pattern.permute.xlu0 5
  %863 = vperm.xlu0 %862, %v740
  %v864 = vpop.permute.xlu0 %863
  %v866 = vmul.f32 %v861, %v864
  %v867 = vlaneseq
  %v868 = vshrl.u32 %v867, 7
  %v869 = vsub.s32 6, %v868
  %v870 = vrot.slane %v721, %v869
  %871 = vset.pattern.permute.xlu0 6
  %872 = vperm.xlu0 %871, %v740
  %v873 = vpop.permute.xlu0 %872
  %v875 = vmul.f32 %v870, %v873
  %v876 = vlaneseq
  %v877 = vshrl.u32 %v876, 7
  %v878 = vsub.s32 7, %v877
  %v879 = vrot.slane %v721, %v878
  %880 = vset.pattern.permute.xlu0 7
  %881 = vperm.xlu0 %880, %v740
  %v882 = vpop.permute.xlu0 %881
  %v884 = vmul.f32 %v879, %v882
  %v885 = vld [vmem:[#allocation6] sm:$0xff]
  %v886 = vmul.f32 %v797, %v885
  %v887 = vadd.f32 %v886, %v821
  %889 = vset.pattern.permute.xlu0 0
  %890 = vperm.xlu0 %889, %v741
  %v891 = vpop.permute.xlu0 %890
  %v893 = vmul.f32 %v887, %v891
  %v894 = vsel %vm270, %v893, 0.0
  %v895 = vrot.slane %v894, 4
  %v896 = vadd.f32 %v894, %v895
  %v897 = vrot.slane %v896, 2
  %v898 = vadd.f32 %v896, %v897
  %v899 = vrot.slane %v898, 1
  %v900 = vadd.f32 %v898, %v899
  %v901 = vmul.f32 %v799, %v887
  %v902 = vadd.f32 %v901, %v830
  %903 = vset.pattern.permute.xlu0 1
  %904 = vperm.xlu0 %903, %v741
  %v905 = vpop.permute.xlu0 %904
  %v907 = vmul.f32 %v902, %v905
  %v908 = vsel %vm270, %v907, 0.0
  %v909 = vrot.slane %v908, 4
  %v910 = vadd.f32 %v908, %v909
  %v911 = vrot.slane %v910, 2
  %v912 = vadd.f32 %v910, %v911
  %v913 = vrot.slane %v912, 1
  %v914 = vadd.f32 %v912, %v913
  %v915 = vmul.f32 %v801, %v902
  %v916 = vadd.f32 %v915, %v839
  %917 = vset.pattern.permute.xlu0 2
  %918 = vperm.xlu0 %917, %v741
  %v919 = vpop.permute.xlu0 %918
  %v921 = vmul.f32 %v916, %v919
  %v922 = vsel %vm270, %v921, 0.0
  %v923 = vrot.slane %v922, 4
  %v924 = vadd.f32 %v922, %v923
  %v925 = vrot.slane %v924, 2
  %v926 = vadd.f32 %v924, %v925
  %v927 = vrot.slane %v926, 1
  %v928 = vadd.f32 %v926, %v927
  %v929 = vmul.f32 %v803, %v916
  %v930 = vadd.f32 %v929, %v848
  %931 = vset.pattern.permute.xlu0 3
  %932 = vperm.xlu0 %931, %v741
  %v933 = vpop.permute.xlu0 %932
  %v935 = vmul.f32 %v930, %v933
  %v936 = vsel %vm270, %v935, 0.0
  %v937 = vrot.slane %v936, 4
  %v938 = vadd.f32 %v936, %v937
  %v939 = vrot.slane %v938, 2
  %v940 = vadd.f32 %v938, %v939
  %v941 = vrot.slane %v940, 1
  %v942 = vadd.f32 %v940, %v941
  %v943 = vmul.f32 %v805, %v930
  %v944 = vadd.f32 %v943, %v857
  %945 = vset.pattern.permute.xlu0 4
  %946 = vperm.xlu0 %945, %v741
  %v947 = vpop.permute.xlu0 %946
  %v949 = vmul.f32 %v944, %v947
  %v950 = vsel %vm270, %v949, 0.0
  %v951 = vrot.slane %v950, 4
  %v952 = vadd.f32 %v950, %v951
  %v953 = vrot.slane %v952, 2
  %v954 = vadd.f32 %v952, %v953
  %v955 = vrot.slane %v954, 1
  %v956 = vadd.f32 %v954, %v955
  %v957 = vmul.f32 %v807, %v944
  %v958 = vadd.f32 %v957, %v866
  %959 = vset.pattern.permute.xlu0 5
  %960 = vperm.xlu0 %959, %v741
  %v961 = vpop.permute.xlu0 %960
  %v963 = vmul.f32 %v958, %v961
  %v964 = vsel %vm270, %v963, 0.0
  %v965 = vrot.slane %v964, 4
  %v966 = vadd.f32 %v964, %v965
  %v967 = vrot.slane %v966, 2
  %v968 = vadd.f32 %v966, %v967
  %v969 = vrot.slane %v968, 1
  %v970 = vadd.f32 %v968, %v969
  %v971 = vmul.f32 %v809, %v958
  %v972 = vadd.f32 %v971, %v875
  %973 = vset.pattern.permute.xlu0 6
  %974 = vperm.xlu0 %973, %v741
  %v975 = vpop.permute.xlu0 %974
  %v977 = vmul.f32 %v972, %v975
  %v978 = vsel %vm270, %v977, 0.0
  %v979 = vrot.slane %v978, 4
  %v980 = vadd.f32 %v978, %v979
  %v981 = vrot.slane %v980, 2
  %v982 = vadd.f32 %v980, %v981
  %v983 = vrot.slane %v982, 1
  %v984 = vadd.f32 %v982, %v983
  %v985 = vmul.f32 %v811, %v972
  %v986 = vadd.f32 %v985, %v884
  %987 = vset.pattern.permute.xlu0 7
  %988 = vperm.xlu0 %987, %v741
  %v989 = vpop.permute.xlu0 %988
  %v991 = vmul.f32 %v986, %v989
  %v992 = vsel %vm270, %v991, 0.0
  %v993 = vrot.slane %v992, 4
  %v994 = vadd.f32 %v992, %v993
  %v995 = vrot.slane %v994, 2
  %v996 = vadd.f32 %v994, %v995
  %v997 = vrot.slane %v996, 1
  %v998 = vadd.f32 %v996, %v997
  %999 = vst.msk [vmem:[#allocation6] sm:$0xff] %vm270, %v986
  %v1000 = vsel %vm328, %v900, %v914
  %v1001 = vsel %vm708, %v1000, %v928
  %v1002 = vsel %vm134, %v1001, %v942
  %v1003 = vsel %vm711, %v1002, %v956
  %v1004 = vsel %vm184, %v1003, %v970
  %v1005 = vsel %vm170, %v1004, %v984
  %v1006 = vsel %vm156, %v1005, %v998
  %s1007 = scalar_lea.vmem [#allocation5], 8
  %1008 = vst.msk [vmem:[%s1007] sm:$0xff] %vm270, %v1006
  %v1009 = vld [vmem:[#allocation5] sm:$0xff]
  %v1010 = vld [vmem:[#allocation5 + $0x8] sm:$0xff]
  %v1011 = vld [vmem:[%s9] sm:$0x1]
  %v1013 = vlaneseq
  %v1014 = vshrl.u32 %v1013, 7
  %v1015 = vsub.s32 0, %v1014
  %v1016 = vrot.slane %v1011, %v1015
  %v1018 = vmul.f32 %v235, %v1016
  %v1019 = vmul.f32 %v236, %v1016
  %v1020 = vadd.f32 %v1009, %v1018
  %v1021 = vadd.f32 %v1010, %v1019
  %v1022 = vxor.u32 %v123, 2147483648
  %v1023 = vxor.u32 %v126, 2147483648
  %v1024 = vmul.f32 %v1022, 1.442695
  %v1025 = vpow.pop %v1024
  %v1026 = vmul.f32 %v1023, 1.442695
  %v1027 = vpow.pop %v1026
  %v1028 = vadd.f32 %v1025, 1.0
  %v1029 = vadd.f32 %v1027, 1.0
  %v1030 = vrcp.pop %v1028
  %v1031 = vmul.f32 1.0, %v1030
  %v1032 = vrcp.pop %v1029
  %v1033 = vmul.f32 1.0, %v1032
  %v1034 = vmul.f32 %v123, %v1031
  %v1035 = vmul.f32 %v126, %v1033
  %1038 = vrot.lane.b32.xlu0 %v1034, 64
  %v1039 = vpop.permute.xlu0 %1038
  %1040 = vrot.lane.b32.xlu0 %v1035, 64
  %v1041 = vpop.permute.xlu0 %1040
  %v1044 = vmul.f32 %v1020, %v1039
  %v1045 = vmul.f32 %v1021, %v1041
  %v1046 = vpack.c.bf16 %v1045, %v1044
  %v1047 = vld [vmem:[%s10] sm:$0xf]
  %v1048 = vld [vmem:[%s10 + $0x4] sm:$0xf]
  %v1049 = vld [vmem:[%s10 + $0x8] sm:$0xf]
  %v1050 = vld [vmem:[%s10 + $0xc] sm:$0xf]
  %v1051 = vld [vmem:[%s10 + $0x10] sm:$0xf]
  %v1052 = vld [vmem:[%s10 + $0x14] sm:$0xf]
  %v1053 = vld [vmem:[%s10 + $0x18] sm:$0xf]
  %v1054 = vld [vmem:[%s10 + $0x1c] sm:$0xf]
  %v1063 = vunpack.c.l.b16 %v1047
  %v1064 = vunpack.c.l.b16 %v1048
  %v1065 = vunpack.c.l.b16 %v1049
  %v1066 = vunpack.c.l.b16 %v1050
  %v1067 = vunpack.c.l.b16 %v1051
  %v1068 = vunpack.c.l.b16 %v1052
  %v1069 = vunpack.c.l.b16 %v1053
  %v1070 = vunpack.c.l.b16 %v1054
  %v1071 = vpack.c.b16 %v1064, %v1063
  %v1072 = vpack.c.b16 %v1066, %v1065
  %v1073 = vpack.c.b16 %v1068, %v1067
  %v1074 = vpack.c.b16 %v1070, %v1069
  %v1080 = vsel %vm270, %v1046, 0
  %1082 = vmatprep.subr.bf16.mxu0 0
  %1083 = vmatpush1.bf16.msra.mxu0 %v1071
  %1084 = vmatprep.subr.bf16.mxu0 0
  %1085 = vmatpush1.bf16.msra.mxu0 %v1072
  %1086 = vmatprep.subr.bf16.mxu0 0
  %1087 = vmatpush1.bf16.msra.mxu0 %v1073
  %1088 = vmatprep.subr.bf16.mxu0 0
  %1089 = vmatpush1.bf16.msra.mxu0 %v1074
  %1090 = vmatprep.subr.bf16.mxu0 0
  %1091 = vmatpush1.bf16.msra.mxu0 0
  %1092 = vmatprep.subr.bf16.mxu0 0
  %1093 = vmatpush1.bf16.msra.mxu0 0
  %1094 = vmatprep.subr.bf16.mxu0 0
  %1095 = vmatpush1.bf16.msra.mxu0 0
  %1096 = vmatprep.subr.bf16.mxu0 0
  %1097 = vmatpush1.bf16.msra.mxu0 0
  %1098 = vmatprep.subr.bf16.mxu0 0
  %1099 = vmatpush1.bf16.msra.mxu0 0
  %1100 = vmatprep.subr.bf16.mxu0 0
  %1101 = vmatpush1.bf16.msra.mxu0 0
  %1102 = vmatprep.subr.bf16.mxu0 0
  %1103 = vmatpush1.bf16.msra.mxu0 0
  %1104 = vmatprep.subr.bf16.mxu0 0
  %1105 = vmatpush1.bf16.msra.mxu0 0
  %1106 = vmatprep.subr.bf16.mxu0 0
  %1107 = vmatpush1.bf16.msra.mxu0 0
  %1108 = vmatprep.subr.bf16.mxu0 0
  %1109 = vmatpush1.bf16.msra.mxu0 0
  %1110 = vmatprep.subr.bf16.mxu0 0
  %1111 = vmatpush1.bf16.msra.mxu0 0
  %1112 = vmatprep.subr.bf16.mxu0 0
  %1113 = vmatpush1.bf16.msra.mxu0 0
  %1114 = vmatprep.mubr.bf16.mxu0 0
  %1115 = vmatmul.mubr.bf16.gmra.mrb[0].mxu0 %v1080
  %v1116 = vpop.f32.mrb[0].mxu0
  %v1117 = vadd.f32 0.0, %v1116
  %v1118 = vpop.f32.mrb[0].mxu0
  %v1119 = vpop.f32.mrb[0].mxu0
  %v1120 = vadd.f32 0.0, %v1119
  %v1121 = vpop.f32.mrb[0].mxu0
  %1122 = vdwg.mxu0
  %v1123 = vadd.f32 %v39, %v1117
  %v1124 = vadd.f32 %v40, %v1120
  %1125 = vst.msk [vmem:[%s11] sm:$0xff] %vm43, %v1123
  %1126 = vst.msk [vmem:[%s11 + $0x8] sm:$0xff] %vm43, %v1124
  // Predicated region
  $region46: #{mamba_forward.3} parent=0 // pred_check
    _
  $region47: #{mamba_forward.3} parent=0 // pred_check_branch
    %1128 = sbr.rel (0) target = $region49
  $region48: #{mamba_forward.3} parent=0 // pred_region
    _
  $region49: #{mamba_forward.3} parent=0 // pred_fallthru
    _
  // Predicated region
  $region50: #{mamba_forward.3} parent=0 // pred_check
    _
  $region51: #{mamba_forward.3} parent=0 // pred_check_branch
    %1130 = sbr.rel (0) target = $region53
  $region52: #{mamba_forward.3} parent=0 // pred_region
    _
  $region53: #{mamba_forward.3} parent=0 // pred_fallthru
    _

</llo_original>
